<compile_context>
chip_gen: v7x
topology: tpu7x:2x2x1
jax: 0.10.0
libtpu: 0.0.40
codegen_flags: <defaults>
</compile_context>

<pallas_src>
import functools

import jax
import jax.numpy as jnp
from jax.experimental import pallas as pl
from jax.experimental.pallas import tpu as pltpu

GRID_SIZE = 5
SPLINE_ORDER = 3
N_BASIS = GRID_SIZE + SPLINE_ORDER            # 8 spline coefficients per input feature
N_GRID = GRID_SIZE + 2 * SPLINE_ORDER + 1     # 12 knot points
N_INV_ROWS = 2 * SPLINE_ORDER * (N_GRID - 2)  # packed reciprocal table rows (padded)
LN_EPS = 1e-5
GRID_RANGE = (-1.0, 1.0)


def _round_up(x, m):
    return (x + m - 1) // m * m


# --------------------------------------------------------------------------- #
# in-kernel math helpers
# --------------------------------------------------------------------------- #
def _erf(x):
    # Abramowitz & Stegun 7.1.26 polynomial, |abs err| < 1.5e-7.
    p = 0.3275911
    a1, a2, a3, a4, a5 = (0.254829592, -0.284496736, 1.421413741,
                          -1.453152027, 1.061405429)
    ax = jnp.abs(x)
    t = 1.0 / (1.0 + p * ax)
    poly = ((((a5 * t + a4) * t + a3) * t + a2) * t + a1) * t
    y = 1.0 - poly * jnp.exp(-(ax * ax))
    return jnp.where(x >= 0.0, y, -y)


def _gelu_exact(x):
    # Matches nn.GELU() (erf form) to ~1e-7.
    return 0.5 * x * (1.0 + _erf(x * 0.7071067811865476))


# --------------------------------------------------------------------------- #
# kernel body
# --------------------------------------------------------------------------- #
def _kan_layer(h, knots_ref, invs_ref, w_ref, a):
    """One KAN layer on a (TB, Din) f32 tile; returns (TB, Dout) f32."""
    knots = knots_ref[...]          # (N_GRID, Din) f32
    invs = invs_ref[...]            # (N_INV_ROWS, Din) f32 (host-precomputed reciprocals)

    def krow(j):                    # (1, Din) knot value row
        return knots[j:j + 1, :]

    def irow(k, side, j):           # (1, Din) reciprocal row for (level k, side, index j)
        r = ((k - 1) * 2 + side) * (N_GRID - 2) + j
        return invs[r:r + 1, :]

    # ---- order-0 indicator bases: list of (TB, Din) planes (basis index stays a
    #      Python list, so every recursion "slice" is free) ----
    b = [jnp.logical_and(h >= krow(j), h < krow(j + 1)).astype(jnp.float32)
         for j in range(N_GRID - 1)]

    # ---- Cox-de Boor recursion (no divides: reciprocals precomputed host-side) ----
    for k in range(1, SPLINE_ORDER + 1):
        nk = N_GRID - 1 - k
        b = [(h - krow(j)) * irow(k, 0, j) * b[j]
             + (krow(j + k + 1) - h) * irow(k, 1, j) * b[j + 1]
             for j in range(nk)]
    # b: N_BASIS planes of (TB, Din)

    # ---- fused base(GELU) + spline contraction: one MXU matmul, K = (N_BASIS+1)*Din ----
    comb = jnp.concatenate(b + [_gelu_exact(h)], axis=-1)        # (TB, 9*Din) f32
    y = jnp.dot(comb, w_ref[...], preferred_element_type=jnp.float32)  # (TB, Dout)

    # ---- LayerNorm over last dim (weight=1, bias=0, biased variance) ----
    mean = jnp.mean(y, axis=-1, keepdims=True)
    var = jnp.mean(jnp.square(y - mean), axis=-1, keepdims=True)
    yn = (y - mean) * jax.lax.rsqrt(var + LN_EPS)

    # ---- PReLU (single shared scalar, read from SMEM) ----
    return jnp.where(yn >= 0.0, yn, a * yn)


def _make_kernel(n_layers):
    def kernel(*refs):
        x_ref = refs[0]
        prelu_ref = refs[1 + 3 * n_layers]    # SMEM (n_layers,)
        o_ref = refs[2 + 3 * n_layers]
        h = x_ref[...]
        for l in range(n_layers):
            knots_ref = refs[1 + 3 * l]
            invs_ref = refs[2 + 3 * l]
            w_ref = refs[3 + 3 * l]
            h = _kan_layer(h, knots_ref, invs_ref, w_ref, prelu_ref[l])
        o_ref[...] = h
    return kernel


# --------------------------------------------------------------------------- #
# host-side weight preparation (hoisted out of the per-call path)
# --------------------------------------------------------------------------- #
def kan_prepare(params):
    """Pack weights / knots / reciprocals once into kernel layout.

    Returns (layers, prelu_vec) where each layer is
      knots:  (N_GRID, Din)                  f32
      invs:   (N_INV_ROWS, Din)              f32  (padded reciprocal table)
      w:      ((N_BASIS+1)*Din, Dout)        f32  (spline planes then GELU plane)
    """
    layers, prelu = [], []
    for base_w, spline_w, grid, prelu_a in params:
        dout, din = base_w.shape
        knots = jnp.transpose(grid).astype(jnp.float32)                 # (N_GRID, din)

        inv_rows = jnp.zeros((N_INV_ROWS, din), jnp.float32)
        for k in range(1, SPLINE_ORDER + 1):
            nk = N_GRID - 1 - k
            left = grid[:, :nk]                          # grid[:, j]
            right = grid[:, k:k + nk]                    # grid[:, j+k]
            hi = grid[:, k + 1:k + 1 + nk]               # grid[:, j+k+1]
            lo1 = grid[:, 1:1 + nk]                      # grid[:, j+1]
            delta = jnp.where(right == left, jnp.ones_like(right), right - left)
            inv_dl = (1.0 / delta).T                     # (nk, din)
            inv_dr = (1.0 / (hi - lo1)).T                # (nk, din) (matches ref: no guard)
            base0 = ((k - 1) * 2 + 0) * (N_GRID - 2)
            base1 = ((k - 1) * 2 + 1) * (N_GRID - 2)
            inv_rows = inv_rows.at[base0:base0 + nk].set(inv_dl)
            inv_rows = inv_rows.at[base1:base1 + nk].set(inv_dr)

        # w[j*din + i, o] = spline_w[o, i, j]  (j < N_BASIS);  w[N_BASIS*din + i, o] = base_w[o, i]
        w_spline = jnp.transpose(spline_w, (2, 1, 0)).reshape(N_BASIS * din, dout)
        w = jnp.concatenate([w_spline, jnp.transpose(base_w)], axis=0).astype(jnp.float32)

        layers.append((knots, inv_rows, w))
        prelu.append(jnp.asarray(prelu_a, jnp.float32))
    return layers, jnp.stack(prelu)


# --------------------------------------------------------------------------- #
# forward wrapper
# --------------------------------------------------------------------------- #
def kan_forward(x, prepared, *, max_batch_tile=512):
    """Fused multi-layer KAN forward. x: (B, Din0) f32."""
    layers, prelu_vec = prepared
    n_layers = len(layers)
    B, din0 = x.shape
    dims = [(int(w.shape[0]) // (N_BASIS + 1), int(w.shape[1])) for _, _, w in layers]
    assert dims[0][0] == din0, (dims, din0)
    dout_last = dims[-1][1]

    # ---- batch tile sizing: VMEM-aware, >= 2 grid steps when batch allows (v7x) ----
    bp = _round_up(max(B, 8), 8)
    weight_bytes = sum(int(k.size + iv.size + w.size) * 4 for k, iv, w in layers)
    per_row_bytes = max((22 * din + 4 * dout) * 4 for din, dout in dims)  # rough live set / row
    budget = 40 * 1024 * 1024                                             # fits every generation
    tb_cap = max(8, ((budget - 2 * weight_bytes) // per_row_bytes) // 8 * 8)
    tb = min(max_batch_tile, bp, tb_cap)
    if bp >= 16:                                  # leave >= 2 grid steps for megacore sharding
        tb = min(tb, _round_up((bp + 1) // 2, 8))
    tb = max(8, tb)
    bp = _round_up(bp, tb)
    xp = x if bp == B else jnp.pad(x, ((0, bp - B), (0, 0)))

    # ---- specs / args ----
    in_specs = [pl.BlockSpec((tb, din0), lambda i: (i, 0))]
    args = [xp]
    for (knots, inv_rows, w), (din, dout) in zip(layers, dims):
        in_specs.append(pl.BlockSpec((N_GRID, din), lambda i: (0, 0)))
        in_specs.append(pl.BlockSpec((N_INV_ROWS, din), lambda i: (0, 0)))
        in_specs.append(pl.BlockSpec(((N_BASIS + 1) * din, dout), lambda i: (0, 0)))
        args += [knots, inv_rows, w]
    in_specs.append(pl.BlockSpec(memory_space=pltpu.MemorySpace.SMEM))
    args.append(prelu_vec)

    # ---- VMEM limit from actual resident sizes (invariant inputs are double-buffered) ----
    io_bytes = 2 * tb * (din0 + dout_last) * 4
    need = 2 * weight_bytes + io_bytes + tb * per_row_bytes + (4 << 20)
    try:
        cap = int(pltpu.get_tpu_info().vmem_capacity_bytes) * 4 // 5
    except Exception:  # noqa: BLE001 - fall back to a per-TC-safe cap (v7x = 64 MiB physical)
        cap = 56 * 1024 * 1024
    vmem_limit = int(min(max(need, 32 << 20), cap))

    flops = sum(2 * bp * (N_BASIS + 1) * din * dout + 200 * bp * din for din, dout in dims)
    transcendentals = sum(bp * din for din, _ in dims)
    bytes_accessed = xp.size * 4 + bp * dout_last * 4 + weight_bytes

    out = pl.pallas_call(
        _make_kernel(n_layers),
        out_shape=jax.ShapeDtypeStruct((bp, dout_last), jnp.float32),
        grid=(bp // tb,),
        in_specs=in_specs,
        out_specs=pl.BlockSpec((tb, dout_last), lambda i: (i, 0)),
        compiler_params=pltpu.CompilerParams(
            dimension_semantics=("parallel",),
            vmem_limit_bytes=vmem_limit),
        cost_estimate=pl.CostEstimate(
            flops=int(flops),
            transcendentals=int(transcendentals),
            bytes_accessed=int(bytes_accessed)),
    )(*args)
    return out[:B]


# --------------------------------------------------------------------------- #
# params / reference
# --------------------------------------------------------------------------- #
def init_params(key, layers_hidden):
    """Deterministic init mirroring the module's shapes (kaiming-uniform-like)."""
    params = []
    for din, dout in zip(layers_hidden[:-1], layers_hidden[1:]):
        key, k1, k2 = jax.random.split(key, 3)
        b_bound = float(jnp.sqrt(3.0 / din))
        base_w = jax.random.uniform(k1, (dout, din), jnp.float32, -b_bound, b_bound)
        s_bound = float(jnp.sqrt(3.0 / (din * N_BASIS)))
        spline_w = jax.random.uniform(k2, (dout, din, N_BASIS), jnp.float32,
                                      -s_bound, s_bound)
        h = (GRID_RANGE[1] - GRID_RANGE[0]) / GRID_SIZE
        grid_1d = jnp.linspace(GRID_RANGE[0] - h * SPLINE_ORDER,
                               GRID_RANGE[1] + h * SPLINE_ORDER,
                               N_GRID, dtype=jnp.float32)
        grid = jnp.broadcast_to(grid_1d, (din, N_GRID))
        prelu_a = jnp.float32(0.25)                       # nn.PReLU() default
        params.append((base_w, spline_w, grid, prelu_a))
    return params


def kan_forward_ref(x, params):
    """Pure-JAX f32 reference mirroring the PyTorch forward literally."""
    for base_w, spline_w, grid, prelu_a in params:
        base_out = jax.nn.gelu(x, approximate=False) @ base_w.T
        xu = x[:, :, None]
        bases = jnp.logical_and(xu >= grid[None, :, :-1],
                                xu < grid[None, :, 1:]).astype(x.dtype)
        for k in range(1, SPLINE_ORDER + 1):
            left = grid[:, :-(k + 1)]
            right = grid[:, k:-1]
            delta = jnp.where(right == left, jnp.ones_like(right), right - left)
            bases = ((xu - left[None]) / delta[None] * bases[:, :, :-1]
                     + (grid[None, :, k + 1:] - xu)
                     / (grid[None, :, k + 1:] - grid[None, :, 1:-k]) * bases[:, :, 1:])
        spline_out = (bases.reshape(x.shape[0], -1)
                      @ spline_w.reshape(spline_w.shape[0], -1).T)
        y = base_out + spline_out
        mean = jnp.mean(y, axis=-1, keepdims=True)
        var = jnp.mean(jnp.square(y - mean), axis=-1, keepdims=True)
        yn = (y - mean) * jax.lax.rsqrt(var + LN_EPS)
        x = jnp.where(yn >= 0.0, yn, prelu_a * yn)
    return x


if __name__ == "__main__":
    key = jax.random.PRNGKey(0)
    layers_hidden = [32, 64, 32]
    batch = 8

    kx, kp = jax.random.split(key)
    x = jax.random.normal(kx, (batch, layers_hidden[0]), jnp.float32)
    params = init_params(kp, layers_hidden)

    prepared = kan_prepare(params)                 # weight prep hoisted off the hot path
    fwd = jax.jit(functools.partial(kan_forward, prepared=prepared))

    out = jax.block_until_ready(fwd(x))
    ref = jax.block_until_ready(kan_forward_ref(x, params))

    assert out.shape == (batch, layers_hidden[-1]), out.shape
    if not bool(jnp.allclose(out, ref, rtol=1e-3, atol=1e-3)):
        err = float(jnp.max(jnp.abs(out - ref)))
        raise AssertionError(f"Pallas KAN output does not match reference (max err {err})")
    print("KERNEL_OK")
</pallas_src>

<mosaic_0001>
module attributes {stable_mosaic.version = 11 : i64} {
  func.func @kernel(%arg0: i32, %arg1: memref<8x32xf32, #tpu.memory_space<vmem>>, %arg2: memref<12x32xf32, #tpu.memory_space<vmem>>, %arg3: memref<60x32xf32, #tpu.memory_space<vmem>>, %arg4: memref<288x64xf32, #tpu.memory_space<vmem>>, %arg5: memref<12x64xf32, #tpu.memory_space<vmem>>, %arg6: memref<60x64xf32, #tpu.memory_space<vmem>>, %arg7: memref<576x32xf32, #tpu.memory_space<vmem>>, %arg8: memref<2xf32, #tpu.memory_space<smem>>, %arg9: memref<8x32xf32, #tpu.memory_space<vmem>>) attributes {dimension_semantics = [#tpu.dimension_semantics<parallel>], iteration_bounds = array<i64: 1>, scalar_prefetch = 0 : i64, scratch_operands = 0 : i64, tpu.core_type = #tpu.core_type<tc>, window_params = [{transform_indices = @transform_0, window_bounds = array<i64: 8, 32>}, {pipeline_mode = #tpu.pipeline_mode<synchronous>, transform_indices = @transform_1, window_bounds = array<i64: 12, 32>}, {pipeline_mode = #tpu.pipeline_mode<synchronous>, transform_indices = @transform_2, window_bounds = array<i64: 60, 32>}, {pipeline_mode = #tpu.pipeline_mode<synchronous>, transform_indices = @transform_3, window_bounds = array<i64: 288, 64>}, {pipeline_mode = #tpu.pipeline_mode<synchronous>, transform_indices = @transform_4, window_bounds = array<i64: 12, 64>}, {pipeline_mode = #tpu.pipeline_mode<synchronous>, transform_indices = @transform_5, window_bounds = array<i64: 60, 64>}, {pipeline_mode = #tpu.pipeline_mode<synchronous>, transform_indices = @transform_6, window_bounds = array<i64: 576, 32>}, {transform_indices = @transform_7, window_bounds = array<i64: 2>}, {transform_indices = @transform_8, window_bounds = array<i64: 8, 32>}]} {
    %c0 = arith.constant 0 : index
    %c0_0 = arith.constant 0 : index
    %0 = vector.load %arg1[%c0, %c0_0] : memref<8x32xf32, #tpu.memory_space<vmem>>, vector<8x32xf32>
    %c0_1 = arith.constant 0 : index
    %1 = memref.load %arg8[%c0_1] : memref<2xf32, #tpu.memory_space<smem>>
    %c0_2 = arith.constant 0 : index
    %c0_3 = arith.constant 0 : index
    %2 = vector.load %arg2[%c0_2, %c0_3] : memref<12x32xf32, #tpu.memory_space<vmem>>, vector<12x32xf32>
    %c0_4 = arith.constant 0 : index
    %c0_5 = arith.constant 0 : index
    %3 = vector.load %arg3[%c0_4, %c0_5] : memref<60x32xf32, #tpu.memory_space<vmem>>, vector<60x32xf32>
    %4 = vector.extract_strided_slice %2 {offsets = [0, 0], sizes = [1, 32], strides = [1, 1]} : vector<12x32xf32> to vector<1x32xf32>
    %5 = vector.broadcast %4 : vector<1x32xf32> to vector<8x32xf32>
    %6 = arith.cmpf oge, %0, %5 : vector<8x32xf32>
    %7 = vector.extract_strided_slice %2 {offsets = [1, 0], sizes = [1, 32], strides = [1, 1]} : vector<12x32xf32> to vector<1x32xf32>
    %8 = vector.broadcast %7 : vector<1x32xf32> to vector<8x32xf32>
    %9 = arith.cmpf olt, %0, %8 : vector<8x32xf32>
    %10 = arith.andi %6, %9 : vector<8x32xi1>
    %11 = arith.extui %10 : vector<8x32xi1> to vector<8x32xi32>
    %12 = arith.sitofp %11 : vector<8x32xi32> to vector<8x32xf32>
    %13 = vector.extract_strided_slice %2 {offsets = [1, 0], sizes = [1, 32], strides = [1, 1]} : vector<12x32xf32> to vector<1x32xf32>
    %14 = vector.broadcast %13 : vector<1x32xf32> to vector<8x32xf32>
    %15 = arith.cmpf oge, %0, %14 : vector<8x32xf32>
    %16 = vector.extract_strided_slice %2 {offsets = [2, 0], sizes = [1, 32], strides = [1, 1]} : vector<12x32xf32> to vector<1x32xf32>
    %17 = vector.broadcast %16 : vector<1x32xf32> to vector<8x32xf32>
    %18 = arith.cmpf olt, %0, %17 : vector<8x32xf32>
    %19 = arith.andi %15, %18 : vector<8x32xi1>
    %20 = arith.extui %19 : vector<8x32xi1> to vector<8x32xi32>
    %21 = arith.sitofp %20 : vector<8x32xi32> to vector<8x32xf32>
    %22 = vector.extract_strided_slice %2 {offsets = [2, 0], sizes = [1, 32], strides = [1, 1]} : vector<12x32xf32> to vector<1x32xf32>
    %23 = vector.broadcast %22 : vector<1x32xf32> to vector<8x32xf32>
    %24 = arith.cmpf oge, %0, %23 : vector<8x32xf32>
    %25 = vector.extract_strided_slice %2 {offsets = [3, 0], sizes = [1, 32], strides = [1, 1]} : vector<12x32xf32> to vector<1x32xf32>
    %26 = vector.broadcast %25 : vector<1x32xf32> to vector<8x32xf32>
    %27 = arith.cmpf olt, %0, %26 : vector<8x32xf32>
    %28 = arith.andi %24, %27 : vector<8x32xi1>
    %29 = arith.extui %28 : vector<8x32xi1> to vector<8x32xi32>
    %30 = arith.sitofp %29 : vector<8x32xi32> to vector<8x32xf32>
    %31 = vector.extract_strided_slice %2 {offsets = [3, 0], sizes = [1, 32], strides = [1, 1]} : vector<12x32xf32> to vector<1x32xf32>
    %32 = vector.broadcast %31 : vector<1x32xf32> to vector<8x32xf32>
    %33 = arith.cmpf oge, %0, %32 : vector<8x32xf32>
    %34 = vector.extract_strided_slice %2 {offsets = [4, 0], sizes = [1, 32], strides = [1, 1]} : vector<12x32xf32> to vector<1x32xf32>
    %35 = vector.broadcast %34 : vector<1x32xf32> to vector<8x32xf32>
    %36 = arith.cmpf olt, %0, %35 : vector<8x32xf32>
    %37 = arith.andi %33, %36 : vector<8x32xi1>
    %38 = arith.extui %37 : vector<8x32xi1> to vector<8x32xi32>
    %39 = arith.sitofp %38 : vector<8x32xi32> to vector<8x32xf32>
    %40 = vector.extract_strided_slice %2 {offsets = [4, 0], sizes = [1, 32], strides = [1, 1]} : vector<12x32xf32> to vector<1x32xf32>
    %41 = vector.broadcast %40 : vector<1x32xf32> to vector<8x32xf32>
    %42 = arith.cmpf oge, %0, %41 : vector<8x32xf32>
    %43 = vector.extract_strided_slice %2 {offsets = [5, 0], sizes = [1, 32], strides = [1, 1]} : vector<12x32xf32> to vector<1x32xf32>
    %44 = vector.broadcast %43 : vector<1x32xf32> to vector<8x32xf32>
    %45 = arith.cmpf olt, %0, %44 : vector<8x32xf32>
    %46 = arith.andi %42, %45 : vector<8x32xi1>
    %47 = arith.extui %46 : vector<8x32xi1> to vector<8x32xi32>
    %48 = arith.sitofp %47 : vector<8x32xi32> to vector<8x32xf32>
    %49 = vector.extract_strided_slice %2 {offsets = [5, 0], sizes = [1, 32], strides = [1, 1]} : vector<12x32xf32> to vector<1x32xf32>
    %50 = vector.broadcast %49 : vector<1x32xf32> to vector<8x32xf32>
    %51 = arith.cmpf oge, %0, %50 : vector<8x32xf32>
    %52 = vector.extract_strided_slice %2 {offsets = [6, 0], sizes = [1, 32], strides = [1, 1]} : vector<12x32xf32> to vector<1x32xf32>
    %53 = vector.broadcast %52 : vector<1x32xf32> to vector<8x32xf32>
    %54 = arith.cmpf olt, %0, %53 : vector<8x32xf32>
    %55 = arith.andi %51, %54 : vector<8x32xi1>
    %56 = arith.extui %55 : vector<8x32xi1> to vector<8x32xi32>
    %57 = arith.sitofp %56 : vector<8x32xi32> to vector<8x32xf32>
    %58 = vector.extract_strided_slice %2 {offsets = [6, 0], sizes = [1, 32], strides = [1, 1]} : vector<12x32xf32> to vector<1x32xf32>
    %59 = vector.broadcast %58 : vector<1x32xf32> to vector<8x32xf32>
    %60 = arith.cmpf oge, %0, %59 : vector<8x32xf32>
    %61 = vector.extract_strided_slice %2 {offsets = [7, 0], sizes = [1, 32], strides = [1, 1]} : vector<12x32xf32> to vector<1x32xf32>
    %62 = vector.broadcast %61 : vector<1x32xf32> to vector<8x32xf32>
    %63 = arith.cmpf olt, %0, %62 : vector<8x32xf32>
    %64 = arith.andi %60, %63 : vector<8x32xi1>
    %65 = arith.extui %64 : vector<8x32xi1> to vector<8x32xi32>
    %66 = arith.sitofp %65 : vector<8x32xi32> to vector<8x32xf32>
    %67 = vector.extract_strided_slice %2 {offsets = [7, 0], sizes = [1, 32], strides = [1, 1]} : vector<12x32xf32> to vector<1x32xf32>
    %68 = vector.broadcast %67 : vector<1x32xf32> to vector<8x32xf32>
    %69 = arith.cmpf oge, %0, %68 : vector<8x32xf32>
    %70 = vector.extract_strided_slice %2 {offsets = [8, 0], sizes = [1, 32], strides = [1, 1]} : vector<12x32xf32> to vector<1x32xf32>
    %71 = vector.broadcast %70 : vector<1x32xf32> to vector<8x32xf32>
    %72 = arith.cmpf olt, %0, %71 : vector<8x32xf32>
    %73 = arith.andi %69, %72 : vector<8x32xi1>
    %74 = arith.extui %73 : vector<8x32xi1> to vector<8x32xi32>
    %75 = arith.sitofp %74 : vector<8x32xi32> to vector<8x32xf32>
    %76 = vector.extract_strided_slice %2 {offsets = [8, 0], sizes = [1, 32], strides = [1, 1]} : vector<12x32xf32> to vector<1x32xf32>
    %77 = vector.broadcast %76 : vector<1x32xf32> to vector<8x32xf32>
    %78 = arith.cmpf oge, %0, %77 : vector<8x32xf32>
    %79 = vector.extract_strided_slice %2 {offsets = [9, 0], sizes = [1, 32], strides = [1, 1]} : vector<12x32xf32> to vector<1x32xf32>
    %80 = vector.broadcast %79 : vector<1x32xf32> to vector<8x32xf32>
    %81 = arith.cmpf olt, %0, %80 : vector<8x32xf32>
    %82 = arith.andi %78, %81 : vector<8x32xi1>
    %83 = arith.extui %82 : vector<8x32xi1> to vector<8x32xi32>
    %84 = arith.sitofp %83 : vector<8x32xi32> to vector<8x32xf32>
    %85 = vector.extract_strided_slice %2 {offsets = [9, 0], sizes = [1, 32], strides = [1, 1]} : vector<12x32xf32> to vector<1x32xf32>
    %86 = vector.broadcast %85 : vector<1x32xf32> to vector<8x32xf32>
    %87 = arith.cmpf oge, %0, %86 : vector<8x32xf32>
    %88 = vector.extract_strided_slice %2 {offsets = [10, 0], sizes = [1, 32], strides = [1, 1]} : vector<12x32xf32> to vector<1x32xf32>
    %89 = vector.broadcast %88 : vector<1x32xf32> to vector<8x32xf32>
    %90 = arith.cmpf olt, %0, %89 : vector<8x32xf32>
    %91 = arith.andi %87, %90 : vector<8x32xi1>
    %92 = arith.extui %91 : vector<8x32xi1> to vector<8x32xi32>
    %93 = arith.sitofp %92 : vector<8x32xi32> to vector<8x32xf32>
    %94 = vector.extract_strided_slice %2 {offsets = [10, 0], sizes = [1, 32], strides = [1, 1]} : vector<12x32xf32> to vector<1x32xf32>
    %95 = vector.broadcast %94 : vector<1x32xf32> to vector<8x32xf32>
    %96 = arith.cmpf oge, %0, %95 : vector<8x32xf32>
    %97 = vector.extract_strided_slice %2 {offsets = [11, 0], sizes = [1, 32], strides = [1, 1]} : vector<12x32xf32> to vector<1x32xf32>
    %98 = vector.broadcast %97 : vector<1x32xf32> to vector<8x32xf32>
    %99 = arith.cmpf olt, %0, %98 : vector<8x32xf32>
    %100 = arith.andi %96, %99 : vector<8x32xi1>
    %101 = arith.extui %100 : vector<8x32xi1> to vector<8x32xi32>
    %102 = arith.sitofp %101 : vector<8x32xi32> to vector<8x32xf32>
    %103 = vector.extract_strided_slice %2 {offsets = [0, 0], sizes = [1, 32], strides = [1, 1]} : vector<12x32xf32> to vector<1x32xf32>
    %104 = vector.broadcast %103 : vector<1x32xf32> to vector<8x32xf32>
    %105 = arith.subf %0, %104 : vector<8x32xf32>
    %106 = vector.extract_strided_slice %3 {offsets = [0, 0], sizes = [1, 32], strides = [1, 1]} : vector<60x32xf32> to vector<1x32xf32>
    %107 = vector.broadcast %106 : vector<1x32xf32> to vector<8x32xf32>
    %108 = arith.mulf %105, %107 : vector<8x32xf32>
    %109 = arith.mulf %108, %12 : vector<8x32xf32>
    %110 = vector.extract_strided_slice %2 {offsets = [2, 0], sizes = [1, 32], strides = [1, 1]} : vector<12x32xf32> to vector<1x32xf32>
    %111 = vector.broadcast %110 : vector<1x32xf32> to vector<8x32xf32>
    %112 = arith.subf %111, %0 : vector<8x32xf32>
    %113 = vector.extract_strided_slice %3 {offsets = [10, 0], sizes = [1, 32], strides = [1, 1]} : vector<60x32xf32> to vector<1x32xf32>
    %114 = vector.broadcast %113 : vector<1x32xf32> to vector<8x32xf32>
    %115 = arith.mulf %112, %114 : vector<8x32xf32>
    %116 = arith.mulf %115, %21 : vector<8x32xf32>
    %117 = arith.addf %109, %116 : vector<8x32xf32>
    %118 = vector.extract_strided_slice %2 {offsets = [1, 0], sizes = [1, 32], strides = [1, 1]} : vector<12x32xf32> to vector<1x32xf32>
    %119 = vector.broadcast %118 : vector<1x32xf32> to vector<8x32xf32>
    %120 = arith.subf %0, %119 : vector<8x32xf32>
    %121 = vector.extract_strided_slice %3 {offsets = [1, 0], sizes = [1, 32], strides = [1, 1]} : vector<60x32xf32> to vector<1x32xf32>
    %122 = vector.broadcast %121 : vector<1x32xf32> to vector<8x32xf32>
    %123 = arith.mulf %120, %122 : vector<8x32xf32>
    %124 = arith.mulf %123, %21 : vector<8x32xf32>
    %125 = vector.extract_strided_slice %2 {offsets = [3, 0], sizes = [1, 32], strides = [1, 1]} : vector<12x32xf32> to vector<1x32xf32>
    %126 = vector.broadcast %125 : vector<1x32xf32> to vector<8x32xf32>
    %127 = arith.subf %126, %0 : vector<8x32xf32>
    %128 = vector.extract_strided_slice %3 {offsets = [11, 0], sizes = [1, 32], strides = [1, 1]} : vector<60x32xf32> to vector<1x32xf32>
    %129 = vector.broadcast %128 : vector<1x32xf32> to vector<8x32xf32>
    %130 = arith.mulf %127, %129 : vector<8x32xf32>
    %131 = arith.mulf %130, %30 : vector<8x32xf32>
    %132 = arith.addf %124, %131 : vector<8x32xf32>
    %133 = vector.extract_strided_slice %2 {offsets = [2, 0], sizes = [1, 32], strides = [1, 1]} : vector<12x32xf32> to vector<1x32xf32>
    %134 = vector.broadcast %133 : vector<1x32xf32> to vector<8x32xf32>
    %135 = arith.subf %0, %134 : vector<8x32xf32>
    %136 = vector.extract_strided_slice %3 {offsets = [2, 0], sizes = [1, 32], strides = [1, 1]} : vector<60x32xf32> to vector<1x32xf32>
    %137 = vector.broadcast %136 : vector<1x32xf32> to vector<8x32xf32>
    %138 = arith.mulf %135, %137 : vector<8x32xf32>
    %139 = arith.mulf %138, %30 : vector<8x32xf32>
    %140 = vector.extract_strided_slice %2 {offsets = [4, 0], sizes = [1, 32], strides = [1, 1]} : vector<12x32xf32> to vector<1x32xf32>
    %141 = vector.broadcast %140 : vector<1x32xf32> to vector<8x32xf32>
    %142 = arith.subf %141, %0 : vector<8x32xf32>
    %143 = vector.extract_strided_slice %3 {offsets = [12, 0], sizes = [1, 32], strides = [1, 1]} : vector<60x32xf32> to vector<1x32xf32>
    %144 = vector.broadcast %143 : vector<1x32xf32> to vector<8x32xf32>
    %145 = arith.mulf %142, %144 : vector<8x32xf32>
    %146 = arith.mulf %145, %39 : vector<8x32xf32>
    %147 = arith.addf %139, %146 : vector<8x32xf32>
    %148 = vector.extract_strided_slice %2 {offsets = [3, 0], sizes = [1, 32], strides = [1, 1]} : vector<12x32xf32> to vector<1x32xf32>
    %149 = vector.broadcast %148 : vector<1x32xf32> to vector<8x32xf32>
    %150 = arith.subf %0, %149 : vector<8x32xf32>
    %151 = vector.extract_strided_slice %3 {offsets = [3, 0], sizes = [1, 32], strides = [1, 1]} : vector<60x32xf32> to vector<1x32xf32>
    %152 = vector.broadcast %151 : vector<1x32xf32> to vector<8x32xf32>
    %153 = arith.mulf %150, %152 : vector<8x32xf32>
    %154 = arith.mulf %153, %39 : vector<8x32xf32>
    %155 = vector.extract_strided_slice %2 {offsets = [5, 0], sizes = [1, 32], strides = [1, 1]} : vector<12x32xf32> to vector<1x32xf32>
    %156 = vector.broadcast %155 : vector<1x32xf32> to vector<8x32xf32>
    %157 = arith.subf %156, %0 : vector<8x32xf32>
    %158 = vector.extract_strided_slice %3 {offsets = [13, 0], sizes = [1, 32], strides = [1, 1]} : vector<60x32xf32> to vector<1x32xf32>
    %159 = vector.broadcast %158 : vector<1x32xf32> to vector<8x32xf32>
    %160 = arith.mulf %157, %159 : vector<8x32xf32>
    %161 = arith.mulf %160, %48 : vector<8x32xf32>
    %162 = arith.addf %154, %161 : vector<8x32xf32>
    %163 = vector.extract_strided_slice %2 {offsets = [4, 0], sizes = [1, 32], strides = [1, 1]} : vector<12x32xf32> to vector<1x32xf32>
    %164 = vector.broadcast %163 : vector<1x32xf32> to vector<8x32xf32>
    %165 = arith.subf %0, %164 : vector<8x32xf32>
    %166 = vector.extract_strided_slice %3 {offsets = [4, 0], sizes = [1, 32], strides = [1, 1]} : vector<60x32xf32> to vector<1x32xf32>
    %167 = vector.broadcast %166 : vector<1x32xf32> to vector<8x32xf32>
    %168 = arith.mulf %165, %167 : vector<8x32xf32>
    %169 = arith.mulf %168, %48 : vector<8x32xf32>
    %170 = vector.extract_strided_slice %2 {offsets = [6, 0], sizes = [1, 32], strides = [1, 1]} : vector<12x32xf32> to vector<1x32xf32>
    %171 = vector.broadcast %170 : vector<1x32xf32> to vector<8x32xf32>
    %172 = arith.subf %171, %0 : vector<8x32xf32>
    %173 = vector.extract_strided_slice %3 {offsets = [14, 0], sizes = [1, 32], strides = [1, 1]} : vector<60x32xf32> to vector<1x32xf32>
    %174 = vector.broadcast %173 : vector<1x32xf32> to vector<8x32xf32>
    %175 = arith.mulf %172, %174 : vector<8x32xf32>
    %176 = arith.mulf %175, %57 : vector<8x32xf32>
    %177 = arith.addf %169, %176 : vector<8x32xf32>
    %178 = vector.extract_strided_slice %2 {offsets = [5, 0], sizes = [1, 32], strides = [1, 1]} : vector<12x32xf32> to vector<1x32xf32>
    %179 = vector.broadcast %178 : vector<1x32xf32> to vector<8x32xf32>
    %180 = arith.subf %0, %179 : vector<8x32xf32>
    %181 = vector.extract_strided_slice %3 {offsets = [5, 0], sizes = [1, 32], strides = [1, 1]} : vector<60x32xf32> to vector<1x32xf32>
    %182 = vector.broadcast %181 : vector<1x32xf32> to vector<8x32xf32>
    %183 = arith.mulf %180, %182 : vector<8x32xf32>
    %184 = arith.mulf %183, %57 : vector<8x32xf32>
    %185 = vector.extract_strided_slice %2 {offsets = [7, 0], sizes = [1, 32], strides = [1, 1]} : vector<12x32xf32> to vector<1x32xf32>
    %186 = vector.broadcast %185 : vector<1x32xf32> to vector<8x32xf32>
    %187 = arith.subf %186, %0 : vector<8x32xf32>
    %188 = vector.extract_strided_slice %3 {offsets = [15, 0], sizes = [1, 32], strides = [1, 1]} : vector<60x32xf32> to vector<1x32xf32>
    %189 = vector.broadcast %188 : vector<1x32xf32> to vector<8x32xf32>
    %190 = arith.mulf %187, %189 : vector<8x32xf32>
    %191 = arith.mulf %190, %66 : vector<8x32xf32>
    %192 = arith.addf %184, %191 : vector<8x32xf32>
    %193 = vector.extract_strided_slice %2 {offsets = [6, 0], sizes = [1, 32], strides = [1, 1]} : vector<12x32xf32> to vector<1x32xf32>
    %194 = vector.broadcast %193 : vector<1x32xf32> to vector<8x32xf32>
    %195 = arith.subf %0, %194 : vector<8x32xf32>
    %196 = vector.extract_strided_slice %3 {offsets = [6, 0], sizes = [1, 32], strides = [1, 1]} : vector<60x32xf32> to vector<1x32xf32>
    %197 = vector.broadcast %196 : vector<1x32xf32> to vector<8x32xf32>
    %198 = arith.mulf %195, %197 : vector<8x32xf32>
    %199 = arith.mulf %198, %66 : vector<8x32xf32>
    %200 = vector.extract_strided_slice %2 {offsets = [8, 0], sizes = [1, 32], strides = [1, 1]} : vector<12x32xf32> to vector<1x32xf32>
    %201 = vector.broadcast %200 : vector<1x32xf32> to vector<8x32xf32>
    %202 = arith.subf %201, %0 : vector<8x32xf32>
    %203 = vector.extract_strided_slice %3 {offsets = [16, 0], sizes = [1, 32], strides = [1, 1]} : vector<60x32xf32> to vector<1x32xf32>
    %204 = vector.broadcast %203 : vector<1x32xf32> to vector<8x32xf32>
    %205 = arith.mulf %202, %204 : vector<8x32xf32>
    %206 = arith.mulf %205, %75 : vector<8x32xf32>
    %207 = arith.addf %199, %206 : vector<8x32xf32>
    %208 = vector.extract_strided_slice %2 {offsets = [7, 0], sizes = [1, 32], strides = [1, 1]} : vector<12x32xf32> to vector<1x32xf32>
    %209 = vector.broadcast %208 : vector<1x32xf32> to vector<8x32xf32>
    %210 = arith.subf %0, %209 : vector<8x32xf32>
    %211 = vector.extract_strided_slice %3 {offsets = [7, 0], sizes = [1, 32], strides = [1, 1]} : vector<60x32xf32> to vector<1x32xf32>
    %212 = vector.broadcast %211 : vector<1x32xf32> to vector<8x32xf32>
    %213 = arith.mulf %210, %212 : vector<8x32xf32>
    %214 = arith.mulf %213, %75 : vector<8x32xf32>
    %215 = vector.extract_strided_slice %2 {offsets = [9, 0], sizes = [1, 32], strides = [1, 1]} : vector<12x32xf32> to vector<1x32xf32>
    %216 = vector.broadcast %215 : vector<1x32xf32> to vector<8x32xf32>
    %217 = arith.subf %216, %0 : vector<8x32xf32>
    %218 = vector.extract_strided_slice %3 {offsets = [17, 0], sizes = [1, 32], strides = [1, 1]} : vector<60x32xf32> to vector<1x32xf32>
    %219 = vector.broadcast %218 : vector<1x32xf32> to vector<8x32xf32>
    %220 = arith.mulf %217, %219 : vector<8x32xf32>
    %221 = arith.mulf %220, %84 : vector<8x32xf32>
    %222 = arith.addf %214, %221 : vector<8x32xf32>
    %223 = vector.extract_strided_slice %2 {offsets = [8, 0], sizes = [1, 32], strides = [1, 1]} : vector<12x32xf32> to vector<1x32xf32>
    %224 = vector.broadcast %223 : vector<1x32xf32> to vector<8x32xf32>
    %225 = arith.subf %0, %224 : vector<8x32xf32>
    %226 = vector.extract_strided_slice %3 {offsets = [8, 0], sizes = [1, 32], strides = [1, 1]} : vector<60x32xf32> to vector<1x32xf32>
    %227 = vector.broadcast %226 : vector<1x32xf32> to vector<8x32xf32>
    %228 = arith.mulf %225, %227 : vector<8x32xf32>
    %229 = arith.mulf %228, %84 : vector<8x32xf32>
    %230 = vector.extract_strided_slice %2 {offsets = [10, 0], sizes = [1, 32], strides = [1, 1]} : vector<12x32xf32> to vector<1x32xf32>
    %231 = vector.broadcast %230 : vector<1x32xf32> to vector<8x32xf32>
    %232 = arith.subf %231, %0 : vector<8x32xf32>
    %233 = vector.extract_strided_slice %3 {offsets = [18, 0], sizes = [1, 32], strides = [1, 1]} : vector<60x32xf32> to vector<1x32xf32>
    %234 = vector.broadcast %233 : vector<1x32xf32> to vector<8x32xf32>
    %235 = arith.mulf %232, %234 : vector<8x32xf32>
    %236 = arith.mulf %235, %93 : vector<8x32xf32>
    %237 = arith.addf %229, %236 : vector<8x32xf32>
    %238 = vector.extract_strided_slice %2 {offsets = [9, 0], sizes = [1, 32], strides = [1, 1]} : vector<12x32xf32> to vector<1x32xf32>
    %239 = vector.broadcast %238 : vector<1x32xf32> to vector<8x32xf32>
    %240 = arith.subf %0, %239 : vector<8x32xf32>
    %241 = vector.extract_strided_slice %3 {offsets = [9, 0], sizes = [1, 32], strides = [1, 1]} : vector<60x32xf32> to vector<1x32xf32>
    %242 = vector.broadcast %241 : vector<1x32xf32> to vector<8x32xf32>
    %243 = arith.mulf %240, %242 : vector<8x32xf32>
    %244 = arith.mulf %243, %93 : vector<8x32xf32>
    %245 = vector.extract_strided_slice %2 {offsets = [11, 0], sizes = [1, 32], strides = [1, 1]} : vector<12x32xf32> to vector<1x32xf32>
    %246 = vector.broadcast %245 : vector<1x32xf32> to vector<8x32xf32>
    %247 = arith.subf %246, %0 : vector<8x32xf32>
    %248 = vector.extract_strided_slice %3 {offsets = [19, 0], sizes = [1, 32], strides = [1, 1]} : vector<60x32xf32> to vector<1x32xf32>
    %249 = vector.broadcast %248 : vector<1x32xf32> to vector<8x32xf32>
    %250 = arith.mulf %247, %249 : vector<8x32xf32>
    %251 = arith.mulf %250, %102 : vector<8x32xf32>
    %252 = arith.addf %244, %251 : vector<8x32xf32>
    %253 = vector.extract_strided_slice %2 {offsets = [0, 0], sizes = [1, 32], strides = [1, 1]} : vector<12x32xf32> to vector<1x32xf32>
    %254 = vector.broadcast %253 : vector<1x32xf32> to vector<8x32xf32>
    %255 = arith.subf %0, %254 : vector<8x32xf32>
    %256 = vector.extract_strided_slice %3 {offsets = [20, 0], sizes = [1, 32], strides = [1, 1]} : vector<60x32xf32> to vector<1x32xf32>
    %257 = vector.broadcast %256 : vector<1x32xf32> to vector<8x32xf32>
    %258 = arith.mulf %255, %257 : vector<8x32xf32>
    %259 = arith.mulf %258, %117 : vector<8x32xf32>
    %260 = vector.extract_strided_slice %2 {offsets = [3, 0], sizes = [1, 32], strides = [1, 1]} : vector<12x32xf32> to vector<1x32xf32>
    %261 = vector.broadcast %260 : vector<1x32xf32> to vector<8x32xf32>
    %262 = arith.subf %261, %0 : vector<8x32xf32>
    %263 = vector.extract_strided_slice %3 {offsets = [30, 0], sizes = [1, 32], strides = [1, 1]} : vector<60x32xf32> to vector<1x32xf32>
    %264 = vector.broadcast %263 : vector<1x32xf32> to vector<8x32xf32>
    %265 = arith.mulf %262, %264 : vector<8x32xf32>
    %266 = arith.mulf %265, %132 : vector<8x32xf32>
    %267 = arith.addf %259, %266 : vector<8x32xf32>
    %268 = vector.extract_strided_slice %2 {offsets = [1, 0], sizes = [1, 32], strides = [1, 1]} : vector<12x32xf32> to vector<1x32xf32>
    %269 = vector.broadcast %268 : vector<1x32xf32> to vector<8x32xf32>
    %270 = arith.subf %0, %269 : vector<8x32xf32>
    %271 = vector.extract_strided_slice %3 {offsets = [21, 0], sizes = [1, 32], strides = [1, 1]} : vector<60x32xf32> to vector<1x32xf32>
    %272 = vector.broadcast %271 : vector<1x32xf32> to vector<8x32xf32>
    %273 = arith.mulf %270, %272 : vector<8x32xf32>
    %274 = arith.mulf %273, %132 : vector<8x32xf32>
    %275 = vector.extract_strided_slice %2 {offsets = [4, 0], sizes = [1, 32], strides = [1, 1]} : vector<12x32xf32> to vector<1x32xf32>
    %276 = vector.broadcast %275 : vector<1x32xf32> to vector<8x32xf32>
    %277 = arith.subf %276, %0 : vector<8x32xf32>
    %278 = vector.extract_strided_slice %3 {offsets = [31, 0], sizes = [1, 32], strides = [1, 1]} : vector<60x32xf32> to vector<1x32xf32>
    %279 = vector.broadcast %278 : vector<1x32xf32> to vector<8x32xf32>
    %280 = arith.mulf %277, %279 : vector<8x32xf32>
    %281 = arith.mulf %280, %147 : vector<8x32xf32>
    %282 = arith.addf %274, %281 : vector<8x32xf32>
    %283 = vector.extract_strided_slice %2 {offsets = [2, 0], sizes = [1, 32], strides = [1, 1]} : vector<12x32xf32> to vector<1x32xf32>
    %284 = vector.broadcast %283 : vector<1x32xf32> to vector<8x32xf32>
    %285 = arith.subf %0, %284 : vector<8x32xf32>
    %286 = vector.extract_strided_slice %3 {offsets = [22, 0], sizes = [1, 32], strides = [1, 1]} : vector<60x32xf32> to vector<1x32xf32>
    %287 = vector.broadcast %286 : vector<1x32xf32> to vector<8x32xf32>
    %288 = arith.mulf %285, %287 : vector<8x32xf32>
    %289 = arith.mulf %288, %147 : vector<8x32xf32>
    %290 = vector.extract_strided_slice %2 {offsets = [5, 0], sizes = [1, 32], strides = [1, 1]} : vector<12x32xf32> to vector<1x32xf32>
    %291 = vector.broadcast %290 : vector<1x32xf32> to vector<8x32xf32>
    %292 = arith.subf %291, %0 : vector<8x32xf32>
    %293 = vector.extract_strided_slice %3 {offsets = [32, 0], sizes = [1, 32], strides = [1, 1]} : vector<60x32xf32> to vector<1x32xf32>
    %294 = vector.broadcast %293 : vector<1x32xf32> to vector<8x32xf32>
    %295 = arith.mulf %292, %294 : vector<8x32xf32>
    %296 = arith.mulf %295, %162 : vector<8x32xf32>
    %297 = arith.addf %289, %296 : vector<8x32xf32>
    %298 = vector.extract_strided_slice %2 {offsets = [3, 0], sizes = [1, 32], strides = [1, 1]} : vector<12x32xf32> to vector<1x32xf32>
    %299 = vector.broadcast %298 : vector<1x32xf32> to vector<8x32xf32>
    %300 = arith.subf %0, %299 : vector<8x32xf32>
    %301 = vector.extract_strided_slice %3 {offsets = [23, 0], sizes = [1, 32], strides = [1, 1]} : vector<60x32xf32> to vector<1x32xf32>
    %302 = vector.broadcast %301 : vector<1x32xf32> to vector<8x32xf32>
    %303 = arith.mulf %300, %302 : vector<8x32xf32>
    %304 = arith.mulf %303, %162 : vector<8x32xf32>
    %305 = vector.extract_strided_slice %2 {offsets = [6, 0], sizes = [1, 32], strides = [1, 1]} : vector<12x32xf32> to vector<1x32xf32>
    %306 = vector.broadcast %305 : vector<1x32xf32> to vector<8x32xf32>
    %307 = arith.subf %306, %0 : vector<8x32xf32>
    %308 = vector.extract_strided_slice %3 {offsets = [33, 0], sizes = [1, 32], strides = [1, 1]} : vector<60x32xf32> to vector<1x32xf32>
    %309 = vector.broadcast %308 : vector<1x32xf32> to vector<8x32xf32>
    %310 = arith.mulf %307, %309 : vector<8x32xf32>
    %311 = arith.mulf %310, %177 : vector<8x32xf32>
    %312 = arith.addf %304, %311 : vector<8x32xf32>
    %313 = vector.extract_strided_slice %2 {offsets = [4, 0], sizes = [1, 32], strides = [1, 1]} : vector<12x32xf32> to vector<1x32xf32>
    %314 = vector.broadcast %313 : vector<1x32xf32> to vector<8x32xf32>
    %315 = arith.subf %0, %314 : vector<8x32xf32>
    %316 = vector.extract_strided_slice %3 {offsets = [24, 0], sizes = [1, 32], strides = [1, 1]} : vector<60x32xf32> to vector<1x32xf32>
    %317 = vector.broadcast %316 : vector<1x32xf32> to vector<8x32xf32>
    %318 = arith.mulf %315, %317 : vector<8x32xf32>
    %319 = arith.mulf %318, %177 : vector<8x32xf32>
    %320 = vector.extract_strided_slice %2 {offsets = [7, 0], sizes = [1, 32], strides = [1, 1]} : vector<12x32xf32> to vector<1x32xf32>
    %321 = vector.broadcast %320 : vector<1x32xf32> to vector<8x32xf32>
    %322 = arith.subf %321, %0 : vector<8x32xf32>
    %323 = vector.extract_strided_slice %3 {offsets = [34, 0], sizes = [1, 32], strides = [1, 1]} : vector<60x32xf32> to vector<1x32xf32>
    %324 = vector.broadcast %323 : vector<1x32xf32> to vector<8x32xf32>
    %325 = arith.mulf %322, %324 : vector<8x32xf32>
    %326 = arith.mulf %325, %192 : vector<8x32xf32>
    %327 = arith.addf %319, %326 : vector<8x32xf32>
    %328 = vector.extract_strided_slice %2 {offsets = [5, 0], sizes = [1, 32], strides = [1, 1]} : vector<12x32xf32> to vector<1x32xf32>
    %329 = vector.broadcast %328 : vector<1x32xf32> to vector<8x32xf32>
    %330 = arith.subf %0, %329 : vector<8x32xf32>
    %331 = vector.extract_strided_slice %3 {offsets = [25, 0], sizes = [1, 32], strides = [1, 1]} : vector<60x32xf32> to vector<1x32xf32>
    %332 = vector.broadcast %331 : vector<1x32xf32> to vector<8x32xf32>
    %333 = arith.mulf %330, %332 : vector<8x32xf32>
    %334 = arith.mulf %333, %192 : vector<8x32xf32>
    %335 = vector.extract_strided_slice %2 {offsets = [8, 0], sizes = [1, 32], strides = [1, 1]} : vector<12x32xf32> to vector<1x32xf32>
    %336 = vector.broadcast %335 : vector<1x32xf32> to vector<8x32xf32>
    %337 = arith.subf %336, %0 : vector<8x32xf32>
    %338 = vector.extract_strided_slice %3 {offsets = [35, 0], sizes = [1, 32], strides = [1, 1]} : vector<60x32xf32> to vector<1x32xf32>
    %339 = vector.broadcast %338 : vector<1x32xf32> to vector<8x32xf32>
    %340 = arith.mulf %337, %339 : vector<8x32xf32>
    %341 = arith.mulf %340, %207 : vector<8x32xf32>
    %342 = arith.addf %334, %341 : vector<8x32xf32>
    %343 = vector.extract_strided_slice %2 {offsets = [6, 0], sizes = [1, 32], strides = [1, 1]} : vector<12x32xf32> to vector<1x32xf32>
    %344 = vector.broadcast %343 : vector<1x32xf32> to vector<8x32xf32>
    %345 = arith.subf %0, %344 : vector<8x32xf32>
    %346 = vector.extract_strided_slice %3 {offsets = [26, 0], sizes = [1, 32], strides = [1, 1]} : vector<60x32xf32> to vector<1x32xf32>
    %347 = vector.broadcast %346 : vector<1x32xf32> to vector<8x32xf32>
    %348 = arith.mulf %345, %347 : vector<8x32xf32>
    %349 = arith.mulf %348, %207 : vector<8x32xf32>
    %350 = vector.extract_strided_slice %2 {offsets = [9, 0], sizes = [1, 32], strides = [1, 1]} : vector<12x32xf32> to vector<1x32xf32>
    %351 = vector.broadcast %350 : vector<1x32xf32> to vector<8x32xf32>
    %352 = arith.subf %351, %0 : vector<8x32xf32>
    %353 = vector.extract_strided_slice %3 {offsets = [36, 0], sizes = [1, 32], strides = [1, 1]} : vector<60x32xf32> to vector<1x32xf32>
    %354 = vector.broadcast %353 : vector<1x32xf32> to vector<8x32xf32>
    %355 = arith.mulf %352, %354 : vector<8x32xf32>
    %356 = arith.mulf %355, %222 : vector<8x32xf32>
    %357 = arith.addf %349, %356 : vector<8x32xf32>
    %358 = vector.extract_strided_slice %2 {offsets = [7, 0], sizes = [1, 32], strides = [1, 1]} : vector<12x32xf32> to vector<1x32xf32>
    %359 = vector.broadcast %358 : vector<1x32xf32> to vector<8x32xf32>
    %360 = arith.subf %0, %359 : vector<8x32xf32>
    %361 = vector.extract_strided_slice %3 {offsets = [27, 0], sizes = [1, 32], strides = [1, 1]} : vector<60x32xf32> to vector<1x32xf32>
    %362 = vector.broadcast %361 : vector<1x32xf32> to vector<8x32xf32>
    %363 = arith.mulf %360, %362 : vector<8x32xf32>
    %364 = arith.mulf %363, %222 : vector<8x32xf32>
    %365 = vector.extract_strided_slice %2 {offsets = [10, 0], sizes = [1, 32], strides = [1, 1]} : vector<12x32xf32> to vector<1x32xf32>
    %366 = vector.broadcast %365 : vector<1x32xf32> to vector<8x32xf32>
    %367 = arith.subf %366, %0 : vector<8x32xf32>
    %368 = vector.extract_strided_slice %3 {offsets = [37, 0], sizes = [1, 32], strides = [1, 1]} : vector<60x32xf32> to vector<1x32xf32>
    %369 = vector.broadcast %368 : vector<1x32xf32> to vector<8x32xf32>
    %370 = arith.mulf %367, %369 : vector<8x32xf32>
    %371 = arith.mulf %370, %237 : vector<8x32xf32>
    %372 = arith.addf %364, %371 : vector<8x32xf32>
    %373 = vector.extract_strided_slice %2 {offsets = [8, 0], sizes = [1, 32], strides = [1, 1]} : vector<12x32xf32> to vector<1x32xf32>
    %374 = vector.broadcast %373 : vector<1x32xf32> to vector<8x32xf32>
    %375 = arith.subf %0, %374 : vector<8x32xf32>
    %376 = vector.extract_strided_slice %3 {offsets = [28, 0], sizes = [1, 32], strides = [1, 1]} : vector<60x32xf32> to vector<1x32xf32>
    %377 = vector.broadcast %376 : vector<1x32xf32> to vector<8x32xf32>
    %378 = arith.mulf %375, %377 : vector<8x32xf32>
    %379 = arith.mulf %378, %237 : vector<8x32xf32>
    %380 = vector.extract_strided_slice %2 {offsets = [11, 0], sizes = [1, 32], strides = [1, 1]} : vector<12x32xf32> to vector<1x32xf32>
    %381 = vector.broadcast %380 : vector<1x32xf32> to vector<8x32xf32>
    %382 = arith.subf %381, %0 : vector<8x32xf32>
    %383 = vector.extract_strided_slice %3 {offsets = [38, 0], sizes = [1, 32], strides = [1, 1]} : vector<60x32xf32> to vector<1x32xf32>
    %384 = vector.broadcast %383 : vector<1x32xf32> to vector<8x32xf32>
    %385 = arith.mulf %382, %384 : vector<8x32xf32>
    %386 = arith.mulf %385, %252 : vector<8x32xf32>
    %387 = arith.addf %379, %386 : vector<8x32xf32>
    %388 = vector.extract_strided_slice %2 {offsets = [0, 0], sizes = [1, 32], strides = [1, 1]} : vector<12x32xf32> to vector<1x32xf32>
    %389 = vector.broadcast %388 : vector<1x32xf32> to vector<8x32xf32>
    %390 = arith.subf %0, %389 : vector<8x32xf32>
    %391 = vector.extract_strided_slice %3 {offsets = [40, 0], sizes = [1, 32], strides = [1, 1]} : vector<60x32xf32> to vector<1x32xf32>
    %392 = vector.broadcast %391 : vector<1x32xf32> to vector<8x32xf32>
    %393 = arith.mulf %390, %392 : vector<8x32xf32>
    %394 = arith.mulf %393, %267 : vector<8x32xf32>
    %395 = vector.extract_strided_slice %2 {offsets = [4, 0], sizes = [1, 32], strides = [1, 1]} : vector<12x32xf32> to vector<1x32xf32>
    %396 = vector.broadcast %395 : vector<1x32xf32> to vector<8x32xf32>
    %397 = arith.subf %396, %0 : vector<8x32xf32>
    %398 = vector.extract_strided_slice %3 {offsets = [50, 0], sizes = [1, 32], strides = [1, 1]} : vector<60x32xf32> to vector<1x32xf32>
    %399 = vector.broadcast %398 : vector<1x32xf32> to vector<8x32xf32>
    %400 = arith.mulf %397, %399 : vector<8x32xf32>
    %401 = arith.mulf %400, %282 : vector<8x32xf32>
    %402 = arith.addf %394, %401 : vector<8x32xf32>
    %403 = vector.extract_strided_slice %2 {offsets = [1, 0], sizes = [1, 32], strides = [1, 1]} : vector<12x32xf32> to vector<1x32xf32>
    %404 = vector.broadcast %403 : vector<1x32xf32> to vector<8x32xf32>
    %405 = arith.subf %0, %404 : vector<8x32xf32>
    %406 = vector.extract_strided_slice %3 {offsets = [41, 0], sizes = [1, 32], strides = [1, 1]} : vector<60x32xf32> to vector<1x32xf32>
    %407 = vector.broadcast %406 : vector<1x32xf32> to vector<8x32xf32>
    %408 = arith.mulf %405, %407 : vector<8x32xf32>
    %409 = arith.mulf %408, %282 : vector<8x32xf32>
    %410 = vector.extract_strided_slice %2 {offsets = [5, 0], sizes = [1, 32], strides = [1, 1]} : vector<12x32xf32> to vector<1x32xf32>
    %411 = vector.broadcast %410 : vector<1x32xf32> to vector<8x32xf32>
    %412 = arith.subf %411, %0 : vector<8x32xf32>
    %413 = vector.extract_strided_slice %3 {offsets = [51, 0], sizes = [1, 32], strides = [1, 1]} : vector<60x32xf32> to vector<1x32xf32>
    %414 = vector.broadcast %413 : vector<1x32xf32> to vector<8x32xf32>
    %415 = arith.mulf %412, %414 : vector<8x32xf32>
    %416 = arith.mulf %415, %297 : vector<8x32xf32>
    %417 = arith.addf %409, %416 : vector<8x32xf32>
    %418 = vector.extract_strided_slice %2 {offsets = [2, 0], sizes = [1, 32], strides = [1, 1]} : vector<12x32xf32> to vector<1x32xf32>
    %419 = vector.broadcast %418 : vector<1x32xf32> to vector<8x32xf32>
    %420 = arith.subf %0, %419 : vector<8x32xf32>
    %421 = vector.extract_strided_slice %3 {offsets = [42, 0], sizes = [1, 32], strides = [1, 1]} : vector<60x32xf32> to vector<1x32xf32>
    %422 = vector.broadcast %421 : vector<1x32xf32> to vector<8x32xf32>
    %423 = arith.mulf %420, %422 : vector<8x32xf32>
    %424 = arith.mulf %423, %297 : vector<8x32xf32>
    %425 = vector.extract_strided_slice %2 {offsets = [6, 0], sizes = [1, 32], strides = [1, 1]} : vector<12x32xf32> to vector<1x32xf32>
    %426 = vector.broadcast %425 : vector<1x32xf32> to vector<8x32xf32>
    %427 = arith.subf %426, %0 : vector<8x32xf32>
    %428 = vector.extract_strided_slice %3 {offsets = [52, 0], sizes = [1, 32], strides = [1, 1]} : vector<60x32xf32> to vector<1x32xf32>
    %429 = vector.broadcast %428 : vector<1x32xf32> to vector<8x32xf32>
    %430 = arith.mulf %427, %429 : vector<8x32xf32>
    %431 = arith.mulf %430, %312 : vector<8x32xf32>
    %432 = arith.addf %424, %431 : vector<8x32xf32>
    %433 = vector.extract_strided_slice %2 {offsets = [3, 0], sizes = [1, 32], strides = [1, 1]} : vector<12x32xf32> to vector<1x32xf32>
    %434 = vector.broadcast %433 : vector<1x32xf32> to vector<8x32xf32>
    %435 = arith.subf %0, %434 : vector<8x32xf32>
    %436 = vector.extract_strided_slice %3 {offsets = [43, 0], sizes = [1, 32], strides = [1, 1]} : vector<60x32xf32> to vector<1x32xf32>
    %437 = vector.broadcast %436 : vector<1x32xf32> to vector<8x32xf32>
    %438 = arith.mulf %435, %437 : vector<8x32xf32>
    %439 = arith.mulf %438, %312 : vector<8x32xf32>
    %440 = vector.extract_strided_slice %2 {offsets = [7, 0], sizes = [1, 32], strides = [1, 1]} : vector<12x32xf32> to vector<1x32xf32>
    %441 = vector.broadcast %440 : vector<1x32xf32> to vector<8x32xf32>
    %442 = arith.subf %441, %0 : vector<8x32xf32>
    %443 = vector.extract_strided_slice %3 {offsets = [53, 0], sizes = [1, 32], strides = [1, 1]} : vector<60x32xf32> to vector<1x32xf32>
    %444 = vector.broadcast %443 : vector<1x32xf32> to vector<8x32xf32>
    %445 = arith.mulf %442, %444 : vector<8x32xf32>
    %446 = arith.mulf %445, %327 : vector<8x32xf32>
    %447 = arith.addf %439, %446 : vector<8x32xf32>
    %448 = vector.extract_strided_slice %2 {offsets = [4, 0], sizes = [1, 32], strides = [1, 1]} : vector<12x32xf32> to vector<1x32xf32>
    %449 = vector.broadcast %448 : vector<1x32xf32> to vector<8x32xf32>
    %450 = arith.subf %0, %449 : vector<8x32xf32>
    %451 = vector.extract_strided_slice %3 {offsets = [44, 0], sizes = [1, 32], strides = [1, 1]} : vector<60x32xf32> to vector<1x32xf32>
    %452 = vector.broadcast %451 : vector<1x32xf32> to vector<8x32xf32>
    %453 = arith.mulf %450, %452 : vector<8x32xf32>
    %454 = arith.mulf %453, %327 : vector<8x32xf32>
    %455 = vector.extract_strided_slice %2 {offsets = [8, 0], sizes = [1, 32], strides = [1, 1]} : vector<12x32xf32> to vector<1x32xf32>
    %456 = vector.broadcast %455 : vector<1x32xf32> to vector<8x32xf32>
    %457 = arith.subf %456, %0 : vector<8x32xf32>
    %458 = vector.extract_strided_slice %3 {offsets = [54, 0], sizes = [1, 32], strides = [1, 1]} : vector<60x32xf32> to vector<1x32xf32>
    %459 = vector.broadcast %458 : vector<1x32xf32> to vector<8x32xf32>
    %460 = arith.mulf %457, %459 : vector<8x32xf32>
    %461 = arith.mulf %460, %342 : vector<8x32xf32>
    %462 = arith.addf %454, %461 : vector<8x32xf32>
    %463 = vector.extract_strided_slice %2 {offsets = [5, 0], sizes = [1, 32], strides = [1, 1]} : vector<12x32xf32> to vector<1x32xf32>
    %464 = vector.broadcast %463 : vector<1x32xf32> to vector<8x32xf32>
    %465 = arith.subf %0, %464 : vector<8x32xf32>
    %466 = vector.extract_strided_slice %3 {offsets = [45, 0], sizes = [1, 32], strides = [1, 1]} : vector<60x32xf32> to vector<1x32xf32>
    %467 = vector.broadcast %466 : vector<1x32xf32> to vector<8x32xf32>
    %468 = arith.mulf %465, %467 : vector<8x32xf32>
    %469 = arith.mulf %468, %342 : vector<8x32xf32>
    %470 = vector.extract_strided_slice %2 {offsets = [9, 0], sizes = [1, 32], strides = [1, 1]} : vector<12x32xf32> to vector<1x32xf32>
    %471 = vector.broadcast %470 : vector<1x32xf32> to vector<8x32xf32>
    %472 = arith.subf %471, %0 : vector<8x32xf32>
    %473 = vector.extract_strided_slice %3 {offsets = [55, 0], sizes = [1, 32], strides = [1, 1]} : vector<60x32xf32> to vector<1x32xf32>
    %474 = vector.broadcast %473 : vector<1x32xf32> to vector<8x32xf32>
    %475 = arith.mulf %472, %474 : vector<8x32xf32>
    %476 = arith.mulf %475, %357 : vector<8x32xf32>
    %477 = arith.addf %469, %476 : vector<8x32xf32>
    %478 = vector.extract_strided_slice %2 {offsets = [6, 0], sizes = [1, 32], strides = [1, 1]} : vector<12x32xf32> to vector<1x32xf32>
    %479 = vector.broadcast %478 : vector<1x32xf32> to vector<8x32xf32>
    %480 = arith.subf %0, %479 : vector<8x32xf32>
    %481 = vector.extract_strided_slice %3 {offsets = [46, 0], sizes = [1, 32], strides = [1, 1]} : vector<60x32xf32> to vector<1x32xf32>
    %482 = vector.broadcast %481 : vector<1x32xf32> to vector<8x32xf32>
    %483 = arith.mulf %480, %482 : vector<8x32xf32>
    %484 = arith.mulf %483, %357 : vector<8x32xf32>
    %485 = vector.extract_strided_slice %2 {offsets = [10, 0], sizes = [1, 32], strides = [1, 1]} : vector<12x32xf32> to vector<1x32xf32>
    %486 = vector.broadcast %485 : vector<1x32xf32> to vector<8x32xf32>
    %487 = arith.subf %486, %0 : vector<8x32xf32>
    %488 = vector.extract_strided_slice %3 {offsets = [56, 0], sizes = [1, 32], strides = [1, 1]} : vector<60x32xf32> to vector<1x32xf32>
    %489 = vector.broadcast %488 : vector<1x32xf32> to vector<8x32xf32>
    %490 = arith.mulf %487, %489 : vector<8x32xf32>
    %491 = arith.mulf %490, %372 : vector<8x32xf32>
    %492 = arith.addf %484, %491 : vector<8x32xf32>
    %493 = vector.extract_strided_slice %2 {offsets = [7, 0], sizes = [1, 32], strides = [1, 1]} : vector<12x32xf32> to vector<1x32xf32>
    %494 = vector.broadcast %493 : vector<1x32xf32> to vector<8x32xf32>
    %495 = arith.subf %0, %494 : vector<8x32xf32>
    %496 = vector.extract_strided_slice %3 {offsets = [47, 0], sizes = [1, 32], strides = [1, 1]} : vector<60x32xf32> to vector<1x32xf32>
    %497 = vector.broadcast %496 : vector<1x32xf32> to vector<8x32xf32>
    %498 = arith.mulf %495, %497 : vector<8x32xf32>
    %499 = arith.mulf %498, %372 : vector<8x32xf32>
    %500 = vector.extract_strided_slice %2 {offsets = [11, 0], sizes = [1, 32], strides = [1, 1]} : vector<12x32xf32> to vector<1x32xf32>
    %501 = vector.broadcast %500 : vector<1x32xf32> to vector<8x32xf32>
    %502 = arith.subf %501, %0 : vector<8x32xf32>
    %503 = vector.extract_strided_slice %3 {offsets = [57, 0], sizes = [1, 32], strides = [1, 1]} : vector<60x32xf32> to vector<1x32xf32>
    %504 = vector.broadcast %503 : vector<1x32xf32> to vector<8x32xf32>
    %505 = arith.mulf %502, %504 : vector<8x32xf32>
    %506 = arith.mulf %505, %387 : vector<8x32xf32>
    %507 = arith.addf %499, %506 : vector<8x32xf32>
    %cst = arith.constant 5.000000e-01 : f32
    %508 = vector.broadcast %cst : f32 to vector<8x32xf32>
    %509 = arith.mulf %508, %0 : vector<8x32xf32>
    %cst_6 = arith.constant 0.707106769 : f32
    %510 = vector.broadcast %cst_6 : f32 to vector<8x32xf32>
    %511 = arith.mulf %0, %510 : vector<8x32xf32>
    %512 = math.absf %511 : vector<8x32xf32>
    %cst_7 = arith.constant 0.327591091 : f32
    %513 = vector.broadcast %cst_7 : f32 to vector<8x32xf32>
    %514 = arith.mulf %513, %512 : vector<8x32xf32>
    %cst_8 = arith.constant 1.000000e+00 : f32
    %515 = vector.broadcast %cst_8 : f32 to vector<8x32xf32>
    %516 = arith.addf %515, %514 : vector<8x32xf32>
    %cst_9 = arith.constant 1.000000e+00 : f32
    %517 = vector.broadcast %cst_9 : f32 to vector<8x32xf32>
    %518 = arith.divf %517, %516 : vector<8x32xf32>
    %cst_10 = arith.constant 1.06140542 : f32
    %519 = vector.broadcast %cst_10 : f32 to vector<8x32xf32>
    %520 = arith.mulf %519, %518 : vector<8x32xf32>
    %cst_11 = arith.constant -1.45315206 : f32
    %521 = vector.broadcast %cst_11 : f32 to vector<8x32xf32>
    %522 = arith.addf %520, %521 : vector<8x32xf32>
    %523 = arith.mulf %522, %518 : vector<8x32xf32>
    %cst_12 = arith.constant 1.42141378 : f32
    %524 = vector.broadcast %cst_12 : f32 to vector<8x32xf32>
    %525 = arith.addf %523, %524 : vector<8x32xf32>
    %526 = arith.mulf %525, %518 : vector<8x32xf32>
    %cst_13 = arith.constant -0.284496725 : f32
    %527 = vector.broadcast %cst_13 : f32 to vector<8x32xf32>
    %528 = arith.addf %526, %527 : vector<8x32xf32>
    %529 = arith.mulf %528, %518 : vector<8x32xf32>
    %cst_14 = arith.constant 0.254829586 : f32
    %530 = vector.broadcast %cst_14 : f32 to vector<8x32xf32>
    %531 = arith.addf %529, %530 : vector<8x32xf32>
    %532 = arith.mulf %531, %518 : vector<8x32xf32>
    %533 = arith.mulf %512, %512 : vector<8x32xf32>
    %cst_15 = arith.constant 0.000000e+00 : f32
    %534 = vector.broadcast %cst_15 : f32 to vector<8x32xf32>
    %535 = arith.subf %534, %533 : vector<8x32xf32>
    %536 = math.exp %535 : vector<8x32xf32>
    %537 = arith.mulf %532, %536 : vector<8x32xf32>
    %cst_16 = arith.constant 1.000000e+00 : f32
    %538 = vector.broadcast %cst_16 : f32 to vector<8x32xf32>
    %539 = arith.subf %538, %537 : vector<8x32xf32>
    %cst_17 = arith.constant 0.000000e+00 : f32
    %540 = vector.broadcast %cst_17 : f32 to vector<8x32xf32>
    %541 = arith.cmpf oge, %511, %540 : vector<8x32xf32>
    %cst_18 = arith.constant 0.000000e+00 : f32
    %542 = vector.broadcast %cst_18 : f32 to vector<8x32xf32>
    %543 = arith.subf %542, %539 : vector<8x32xf32>
    %544 = arith.select %541, %539, %543 : vector<8x32xi1>, vector<8x32xf32>
    %cst_19 = arith.constant 1.000000e+00 : f32
    %545 = vector.broadcast %cst_19 : f32 to vector<8x32xf32>
    %546 = arith.addf %545, %544 : vector<8x32xf32>
    %547 = arith.mulf %509, %546 : vector<8x32xf32>
    %548 = tpu.concatenate %402, %417, %432, %447, %462, %477, %492, %507, %547 in 1 : vector<8x32xf32>, vector<8x32xf32>, vector<8x32xf32>, vector<8x32xf32>, vector<8x32xf32>, vector<8x32xf32>, vector<8x32xf32>, vector<8x32xf32>, vector<8x32xf32> -> vector<8x288xf32>
    %c0_20 = arith.constant 0 : index
    %c0_21 = arith.constant 0 : index
    %549 = vector.load %arg4[%c0_20, %c0_21] : memref<288x64xf32, #tpu.memory_space<vmem>>, vector<288x64xf32>
    %cst_22 = arith.constant dense<0.000000e+00> : vector<8x64xf32>
    %550 = tpu.matmul %548, %549, %cst_22 {dimension_numbers = #tpu.dot_dimension_numbers<[1], [0], [0], [1], [0, 0, 1, 1], [], []>} : vector<8x288xf32>, vector<288x64xf32>, vector<8x64xf32> -> vector<8x64xf32>
    %cst_23 = arith.constant dense<0.000000e+00> : vector<8xf32>
    %551 = vector.multi_reduction <add>, %550, %cst_23 [1] : vector<8x64xf32> to vector<8xf32>
    %552 = vector.shape_cast %551 : vector<8xf32> to vector<8x1xf32>
    %cst_24 = arith.constant 6.400000e+01 : f32
    %553 = vector.broadcast %cst_24 : f32 to vector<8x1xf32>
    %554 = arith.divf %552, %553 : vector<8x1xf32>
    %555 = vector.broadcast %554 : vector<8x1xf32> to vector<8x64xf32>
    %556 = arith.subf %550, %555 : vector<8x64xf32>
    %557 = arith.mulf %556, %556 : vector<8x64xf32>
    %cst_25 = arith.constant dense<0.000000e+00> : vector<8xf32>
    %558 = vector.multi_reduction <add>, %557, %cst_25 [1] : vector<8x64xf32> to vector<8xf32>
    %559 = vector.shape_cast %558 : vector<8xf32> to vector<8x1xf32>
    %cst_26 = arith.constant 6.400000e+01 : f32
    %560 = vector.broadcast %cst_26 : f32 to vector<8x1xf32>
    %561 = arith.divf %559, %560 : vector<8x1xf32>
    %562 = vector.broadcast %554 : vector<8x1xf32> to vector<8x64xf32>
    %563 = arith.subf %550, %562 : vector<8x64xf32>
    %cst_27 = arith.constant 9.99999974E-6 : f32
    %564 = vector.broadcast %cst_27 : f32 to vector<8x1xf32>
    %565 = arith.addf %561, %564 : vector<8x1xf32>
    %566 = math.rsqrt %565 : vector<8x1xf32>
    %567 = vector.broadcast %566 : vector<8x1xf32> to vector<8x64xf32>
    %568 = arith.mulf %563, %567 : vector<8x64xf32>
    %cst_28 = arith.constant 0.000000e+00 : f32
    %569 = vector.broadcast %cst_28 : f32 to vector<8x64xf32>
    %570 = arith.cmpf oge, %568, %569 : vector<8x64xf32>
    %571 = vector.broadcast %1 : f32 to vector<8x64xf32>
    %572 = arith.mulf %571, %568 : vector<8x64xf32>
    %573 = arith.select %570, %568, %572 : vector<8x64xi1>, vector<8x64xf32>
    %c1 = arith.constant 1 : index
    %574 = memref.load %arg8[%c1] : memref<2xf32, #tpu.memory_space<smem>>
    %c0_29 = arith.constant 0 : index
    %c0_30 = arith.constant 0 : index
    %575 = vector.load %arg5[%c0_29, %c0_30] : memref<12x64xf32, #tpu.memory_space<vmem>>, vector<12x64xf32>
    %c0_31 = arith.constant 0 : index
    %c0_32 = arith.constant 0 : index
    %576 = vector.load %arg6[%c0_31, %c0_32] : memref<60x64xf32, #tpu.memory_space<vmem>>, vector<60x64xf32>
    %577 = vector.extract_strided_slice %575 {offsets = [0, 0], sizes = [1, 64], strides = [1, 1]} : vector<12x64xf32> to vector<1x64xf32>
    %578 = vector.broadcast %577 : vector<1x64xf32> to vector<8x64xf32>
    %579 = arith.cmpf oge, %573, %578 : vector<8x64xf32>
    %580 = vector.extract_strided_slice %575 {offsets = [1, 0], sizes = [1, 64], strides = [1, 1]} : vector<12x64xf32> to vector<1x64xf32>
    %581 = vector.broadcast %580 : vector<1x64xf32> to vector<8x64xf32>
    %582 = arith.cmpf olt, %573, %581 : vector<8x64xf32>
    %583 = arith.andi %579, %582 : vector<8x64xi1>
    %584 = arith.extui %583 : vector<8x64xi1> to vector<8x64xi32>
    %585 = arith.sitofp %584 : vector<8x64xi32> to vector<8x64xf32>
    %586 = vector.extract_strided_slice %575 {offsets = [1, 0], sizes = [1, 64], strides = [1, 1]} : vector<12x64xf32> to vector<1x64xf32>
    %587 = vector.broadcast %586 : vector<1x64xf32> to vector<8x64xf32>
    %588 = arith.cmpf oge, %573, %587 : vector<8x64xf32>
    %589 = vector.extract_strided_slice %575 {offsets = [2, 0], sizes = [1, 64], strides = [1, 1]} : vector<12x64xf32> to vector<1x64xf32>
    %590 = vector.broadcast %589 : vector<1x64xf32> to vector<8x64xf32>
    %591 = arith.cmpf olt, %573, %590 : vector<8x64xf32>
    %592 = arith.andi %588, %591 : vector<8x64xi1>
    %593 = arith.extui %592 : vector<8x64xi1> to vector<8x64xi32>
    %594 = arith.sitofp %593 : vector<8x64xi32> to vector<8x64xf32>
    %595 = vector.extract_strided_slice %575 {offsets = [2, 0], sizes = [1, 64], strides = [1, 1]} : vector<12x64xf32> to vector<1x64xf32>
    %596 = vector.broadcast %595 : vector<1x64xf32> to vector<8x64xf32>
    %597 = arith.cmpf oge, %573, %596 : vector<8x64xf32>
    %598 = vector.extract_strided_slice %575 {offsets = [3, 0], sizes = [1, 64], strides = [1, 1]} : vector<12x64xf32> to vector<1x64xf32>
    %599 = vector.broadcast %598 : vector<1x64xf32> to vector<8x64xf32>
    %600 = arith.cmpf olt, %573, %599 : vector<8x64xf32>
    %601 = arith.andi %597, %600 : vector<8x64xi1>
    %602 = arith.extui %601 : vector<8x64xi1> to vector<8x64xi32>
    %603 = arith.sitofp %602 : vector<8x64xi32> to vector<8x64xf32>
    %604 = vector.extract_strided_slice %575 {offsets = [3, 0], sizes = [1, 64], strides = [1, 1]} : vector<12x64xf32> to vector<1x64xf32>
    %605 = vector.broadcast %604 : vector<1x64xf32> to vector<8x64xf32>
    %606 = arith.cmpf oge, %573, %605 : vector<8x64xf32>
    %607 = vector.extract_strided_slice %575 {offsets = [4, 0], sizes = [1, 64], strides = [1, 1]} : vector<12x64xf32> to vector<1x64xf32>
    %608 = vector.broadcast %607 : vector<1x64xf32> to vector<8x64xf32>
    %609 = arith.cmpf olt, %573, %608 : vector<8x64xf32>
    %610 = arith.andi %606, %609 : vector<8x64xi1>
    %611 = arith.extui %610 : vector<8x64xi1> to vector<8x64xi32>
    %612 = arith.sitofp %611 : vector<8x64xi32> to vector<8x64xf32>
    %613 = vector.extract_strided_slice %575 {offsets = [4, 0], sizes = [1, 64], strides = [1, 1]} : vector<12x64xf32> to vector<1x64xf32>
    %614 = vector.broadcast %613 : vector<1x64xf32> to vector<8x64xf32>
    %615 = arith.cmpf oge, %573, %614 : vector<8x64xf32>
    %616 = vector.extract_strided_slice %575 {offsets = [5, 0], sizes = [1, 64], strides = [1, 1]} : vector<12x64xf32> to vector<1x64xf32>
    %617 = vector.broadcast %616 : vector<1x64xf32> to vector<8x64xf32>
    %618 = arith.cmpf olt, %573, %617 : vector<8x64xf32>
    %619 = arith.andi %615, %618 : vector<8x64xi1>
    %620 = arith.extui %619 : vector<8x64xi1> to vector<8x64xi32>
    %621 = arith.sitofp %620 : vector<8x64xi32> to vector<8x64xf32>
    %622 = vector.extract_strided_slice %575 {offsets = [5, 0], sizes = [1, 64], strides = [1, 1]} : vector<12x64xf32> to vector<1x64xf32>
    %623 = vector.broadcast %622 : vector<1x64xf32> to vector<8x64xf32>
    %624 = arith.cmpf oge, %573, %623 : vector<8x64xf32>
    %625 = vector.extract_strided_slice %575 {offsets = [6, 0], sizes = [1, 64], strides = [1, 1]} : vector<12x64xf32> to vector<1x64xf32>
    %626 = vector.broadcast %625 : vector<1x64xf32> to vector<8x64xf32>
    %627 = arith.cmpf olt, %573, %626 : vector<8x64xf32>
    %628 = arith.andi %624, %627 : vector<8x64xi1>
    %629 = arith.extui %628 : vector<8x64xi1> to vector<8x64xi32>
    %630 = arith.sitofp %629 : vector<8x64xi32> to vector<8x64xf32>
    %631 = vector.extract_strided_slice %575 {offsets = [6, 0], sizes = [1, 64], strides = [1, 1]} : vector<12x64xf32> to vector<1x64xf32>
    %632 = vector.broadcast %631 : vector<1x64xf32> to vector<8x64xf32>
    %633 = arith.cmpf oge, %573, %632 : vector<8x64xf32>
    %634 = vector.extract_strided_slice %575 {offsets = [7, 0], sizes = [1, 64], strides = [1, 1]} : vector<12x64xf32> to vector<1x64xf32>
    %635 = vector.broadcast %634 : vector<1x64xf32> to vector<8x64xf32>
    %636 = arith.cmpf olt, %573, %635 : vector<8x64xf32>
    %637 = arith.andi %633, %636 : vector<8x64xi1>
    %638 = arith.extui %637 : vector<8x64xi1> to vector<8x64xi32>
    %639 = arith.sitofp %638 : vector<8x64xi32> to vector<8x64xf32>
    %640 = vector.extract_strided_slice %575 {offsets = [7, 0], sizes = [1, 64], strides = [1, 1]} : vector<12x64xf32> to vector<1x64xf32>
    %641 = vector.broadcast %640 : vector<1x64xf32> to vector<8x64xf32>
    %642 = arith.cmpf oge, %573, %641 : vector<8x64xf32>
    %643 = vector.extract_strided_slice %575 {offsets = [8, 0], sizes = [1, 64], strides = [1, 1]} : vector<12x64xf32> to vector<1x64xf32>
    %644 = vector.broadcast %643 : vector<1x64xf32> to vector<8x64xf32>
    %645 = arith.cmpf olt, %573, %644 : vector<8x64xf32>
    %646 = arith.andi %642, %645 : vector<8x64xi1>
    %647 = arith.extui %646 : vector<8x64xi1> to vector<8x64xi32>
    %648 = arith.sitofp %647 : vector<8x64xi32> to vector<8x64xf32>
    %649 = vector.extract_strided_slice %575 {offsets = [8, 0], sizes = [1, 64], strides = [1, 1]} : vector<12x64xf32> to vector<1x64xf32>
    %650 = vector.broadcast %649 : vector<1x64xf32> to vector<8x64xf32>
    %651 = arith.cmpf oge, %573, %650 : vector<8x64xf32>
    %652 = vector.extract_strided_slice %575 {offsets = [9, 0], sizes = [1, 64], strides = [1, 1]} : vector<12x64xf32> to vector<1x64xf32>
    %653 = vector.broadcast %652 : vector<1x64xf32> to vector<8x64xf32>
    %654 = arith.cmpf olt, %573, %653 : vector<8x64xf32>
    %655 = arith.andi %651, %654 : vector<8x64xi1>
    %656 = arith.extui %655 : vector<8x64xi1> to vector<8x64xi32>
    %657 = arith.sitofp %656 : vector<8x64xi32> to vector<8x64xf32>
    %658 = vector.extract_strided_slice %575 {offsets = [9, 0], sizes = [1, 64], strides = [1, 1]} : vector<12x64xf32> to vector<1x64xf32>
    %659 = vector.broadcast %658 : vector<1x64xf32> to vector<8x64xf32>
    %660 = arith.cmpf oge, %573, %659 : vector<8x64xf32>
    %661 = vector.extract_strided_slice %575 {offsets = [10, 0], sizes = [1, 64], strides = [1, 1]} : vector<12x64xf32> to vector<1x64xf32>
    %662 = vector.broadcast %661 : vector<1x64xf32> to vector<8x64xf32>
    %663 = arith.cmpf olt, %573, %662 : vector<8x64xf32>
    %664 = arith.andi %660, %663 : vector<8x64xi1>
    %665 = arith.extui %664 : vector<8x64xi1> to vector<8x64xi32>
    %666 = arith.sitofp %665 : vector<8x64xi32> to vector<8x64xf32>
    %667 = vector.extract_strided_slice %575 {offsets = [10, 0], sizes = [1, 64], strides = [1, 1]} : vector<12x64xf32> to vector<1x64xf32>
    %668 = vector.broadcast %667 : vector<1x64xf32> to vector<8x64xf32>
    %669 = arith.cmpf oge, %573, %668 : vector<8x64xf32>
    %670 = vector.extract_strided_slice %575 {offsets = [11, 0], sizes = [1, 64], strides = [1, 1]} : vector<12x64xf32> to vector<1x64xf32>
    %671 = vector.broadcast %670 : vector<1x64xf32> to vector<8x64xf32>
    %672 = arith.cmpf olt, %573, %671 : vector<8x64xf32>
    %673 = arith.andi %669, %672 : vector<8x64xi1>
    %674 = arith.extui %673 : vector<8x64xi1> to vector<8x64xi32>
    %675 = arith.sitofp %674 : vector<8x64xi32> to vector<8x64xf32>
    %676 = vector.extract_strided_slice %575 {offsets = [0, 0], sizes = [1, 64], strides = [1, 1]} : vector<12x64xf32> to vector<1x64xf32>
    %677 = vector.broadcast %676 : vector<1x64xf32> to vector<8x64xf32>
    %678 = arith.subf %573, %677 : vector<8x64xf32>
    %679 = vector.extract_strided_slice %576 {offsets = [0, 0], sizes = [1, 64], strides = [1, 1]} : vector<60x64xf32> to vector<1x64xf32>
    %680 = vector.broadcast %679 : vector<1x64xf32> to vector<8x64xf32>
    %681 = arith.mulf %678, %680 : vector<8x64xf32>
    %682 = arith.mulf %681, %585 : vector<8x64xf32>
    %683 = vector.extract_strided_slice %575 {offsets = [2, 0], sizes = [1, 64], strides = [1, 1]} : vector<12x64xf32> to vector<1x64xf32>
    %684 = vector.broadcast %683 : vector<1x64xf32> to vector<8x64xf32>
    %685 = arith.subf %684, %573 : vector<8x64xf32>
    %686 = vector.extract_strided_slice %576 {offsets = [10, 0], sizes = [1, 64], strides = [1, 1]} : vector<60x64xf32> to vector<1x64xf32>
    %687 = vector.broadcast %686 : vector<1x64xf32> to vector<8x64xf32>
    %688 = arith.mulf %685, %687 : vector<8x64xf32>
    %689 = arith.mulf %688, %594 : vector<8x64xf32>
    %690 = arith.addf %682, %689 : vector<8x64xf32>
    %691 = vector.extract_strided_slice %575 {offsets = [1, 0], sizes = [1, 64], strides = [1, 1]} : vector<12x64xf32> to vector<1x64xf32>
    %692 = vector.broadcast %691 : vector<1x64xf32> to vector<8x64xf32>
    %693 = arith.subf %573, %692 : vector<8x64xf32>
    %694 = vector.extract_strided_slice %576 {offsets = [1, 0], sizes = [1, 64], strides = [1, 1]} : vector<60x64xf32> to vector<1x64xf32>
    %695 = vector.broadcast %694 : vector<1x64xf32> to vector<8x64xf32>
    %696 = arith.mulf %693, %695 : vector<8x64xf32>
    %697 = arith.mulf %696, %594 : vector<8x64xf32>
    %698 = vector.extract_strided_slice %575 {offsets = [3, 0], sizes = [1, 64], strides = [1, 1]} : vector<12x64xf32> to vector<1x64xf32>
    %699 = vector.broadcast %698 : vector<1x64xf32> to vector<8x64xf32>
    %700 = arith.subf %699, %573 : vector<8x64xf32>
    %701 = vector.extract_strided_slice %576 {offsets = [11, 0], sizes = [1, 64], strides = [1, 1]} : vector<60x64xf32> to vector<1x64xf32>
    %702 = vector.broadcast %701 : vector<1x64xf32> to vector<8x64xf32>
    %703 = arith.mulf %700, %702 : vector<8x64xf32>
    %704 = arith.mulf %703, %603 : vector<8x64xf32>
    %705 = arith.addf %697, %704 : vector<8x64xf32>
    %706 = vector.extract_strided_slice %575 {offsets = [2, 0], sizes = [1, 64], strides = [1, 1]} : vector<12x64xf32> to vector<1x64xf32>
    %707 = vector.broadcast %706 : vector<1x64xf32> to vector<8x64xf32>
    %708 = arith.subf %573, %707 : vector<8x64xf32>
    %709 = vector.extract_strided_slice %576 {offsets = [2, 0], sizes = [1, 64], strides = [1, 1]} : vector<60x64xf32> to vector<1x64xf32>
    %710 = vector.broadcast %709 : vector<1x64xf32> to vector<8x64xf32>
    %711 = arith.mulf %708, %710 : vector<8x64xf32>
    %712 = arith.mulf %711, %603 : vector<8x64xf32>
    %713 = vector.extract_strided_slice %575 {offsets = [4, 0], sizes = [1, 64], strides = [1, 1]} : vector<12x64xf32> to vector<1x64xf32>
    %714 = vector.broadcast %713 : vector<1x64xf32> to vector<8x64xf32>
    %715 = arith.subf %714, %573 : vector<8x64xf32>
    %716 = vector.extract_strided_slice %576 {offsets = [12, 0], sizes = [1, 64], strides = [1, 1]} : vector<60x64xf32> to vector<1x64xf32>
    %717 = vector.broadcast %716 : vector<1x64xf32> to vector<8x64xf32>
    %718 = arith.mulf %715, %717 : vector<8x64xf32>
    %719 = arith.mulf %718, %612 : vector<8x64xf32>
    %720 = arith.addf %712, %719 : vector<8x64xf32>
    %721 = vector.extract_strided_slice %575 {offsets = [3, 0], sizes = [1, 64], strides = [1, 1]} : vector<12x64xf32> to vector<1x64xf32>
    %722 = vector.broadcast %721 : vector<1x64xf32> to vector<8x64xf32>
    %723 = arith.subf %573, %722 : vector<8x64xf32>
    %724 = vector.extract_strided_slice %576 {offsets = [3, 0], sizes = [1, 64], strides = [1, 1]} : vector<60x64xf32> to vector<1x64xf32>
    %725 = vector.broadcast %724 : vector<1x64xf32> to vector<8x64xf32>
    %726 = arith.mulf %723, %725 : vector<8x64xf32>
    %727 = arith.mulf %726, %612 : vector<8x64xf32>
    %728 = vector.extract_strided_slice %575 {offsets = [5, 0], sizes = [1, 64], strides = [1, 1]} : vector<12x64xf32> to vector<1x64xf32>
    %729 = vector.broadcast %728 : vector<1x64xf32> to vector<8x64xf32>
    %730 = arith.subf %729, %573 : vector<8x64xf32>
    %731 = vector.extract_strided_slice %576 {offsets = [13, 0], sizes = [1, 64], strides = [1, 1]} : vector<60x64xf32> to vector<1x64xf32>
    %732 = vector.broadcast %731 : vector<1x64xf32> to vector<8x64xf32>
    %733 = arith.mulf %730, %732 : vector<8x64xf32>
    %734 = arith.mulf %733, %621 : vector<8x64xf32>
    %735 = arith.addf %727, %734 : vector<8x64xf32>
    %736 = vector.extract_strided_slice %575 {offsets = [4, 0], sizes = [1, 64], strides = [1, 1]} : vector<12x64xf32> to vector<1x64xf32>
    %737 = vector.broadcast %736 : vector<1x64xf32> to vector<8x64xf32>
    %738 = arith.subf %573, %737 : vector<8x64xf32>
    %739 = vector.extract_strided_slice %576 {offsets = [4, 0], sizes = [1, 64], strides = [1, 1]} : vector<60x64xf32> to vector<1x64xf32>
    %740 = vector.broadcast %739 : vector<1x64xf32> to vector<8x64xf32>
    %741 = arith.mulf %738, %740 : vector<8x64xf32>
    %742 = arith.mulf %741, %621 : vector<8x64xf32>
    %743 = vector.extract_strided_slice %575 {offsets = [6, 0], sizes = [1, 64], strides = [1, 1]} : vector<12x64xf32> to vector<1x64xf32>
    %744 = vector.broadcast %743 : vector<1x64xf32> to vector<8x64xf32>
    %745 = arith.subf %744, %573 : vector<8x64xf32>
    %746 = vector.extract_strided_slice %576 {offsets = [14, 0], sizes = [1, 64], strides = [1, 1]} : vector<60x64xf32> to vector<1x64xf32>
    %747 = vector.broadcast %746 : vector<1x64xf32> to vector<8x64xf32>
    %748 = arith.mulf %745, %747 : vector<8x64xf32>
    %749 = arith.mulf %748, %630 : vector<8x64xf32>
    %750 = arith.addf %742, %749 : vector<8x64xf32>
    %751 = vector.extract_strided_slice %575 {offsets = [5, 0], sizes = [1, 64], strides = [1, 1]} : vector<12x64xf32> to vector<1x64xf32>
    %752 = vector.broadcast %751 : vector<1x64xf32> to vector<8x64xf32>
    %753 = arith.subf %573, %752 : vector<8x64xf32>
    %754 = vector.extract_strided_slice %576 {offsets = [5, 0], sizes = [1, 64], strides = [1, 1]} : vector<60x64xf32> to vector<1x64xf32>
    %755 = vector.broadcast %754 : vector<1x64xf32> to vector<8x64xf32>
    %756 = arith.mulf %753, %755 : vector<8x64xf32>
    %757 = arith.mulf %756, %630 : vector<8x64xf32>
    %758 = vector.extract_strided_slice %575 {offsets = [7, 0], sizes = [1, 64], strides = [1, 1]} : vector<12x64xf32> to vector<1x64xf32>
    %759 = vector.broadcast %758 : vector<1x64xf32> to vector<8x64xf32>
    %760 = arith.subf %759, %573 : vector<8x64xf32>
    %761 = vector.extract_strided_slice %576 {offsets = [15, 0], sizes = [1, 64], strides = [1, 1]} : vector<60x64xf32> to vector<1x64xf32>
    %762 = vector.broadcast %761 : vector<1x64xf32> to vector<8x64xf32>
    %763 = arith.mulf %760, %762 : vector<8x64xf32>
    %764 = arith.mulf %763, %639 : vector<8x64xf32>
    %765 = arith.addf %757, %764 : vector<8x64xf32>
    %766 = vector.extract_strided_slice %575 {offsets = [6, 0], sizes = [1, 64], strides = [1, 1]} : vector<12x64xf32> to vector<1x64xf32>
    %767 = vector.broadcast %766 : vector<1x64xf32> to vector<8x64xf32>
    %768 = arith.subf %573, %767 : vector<8x64xf32>
    %769 = vector.extract_strided_slice %576 {offsets = [6, 0], sizes = [1, 64], strides = [1, 1]} : vector<60x64xf32> to vector<1x64xf32>
    %770 = vector.broadcast %769 : vector<1x64xf32> to vector<8x64xf32>
    %771 = arith.mulf %768, %770 : vector<8x64xf32>
    %772 = arith.mulf %771, %639 : vector<8x64xf32>
    %773 = vector.extract_strided_slice %575 {offsets = [8, 0], sizes = [1, 64], strides = [1, 1]} : vector<12x64xf32> to vector<1x64xf32>
    %774 = vector.broadcast %773 : vector<1x64xf32> to vector<8x64xf32>
    %775 = arith.subf %774, %573 : vector<8x64xf32>
    %776 = vector.extract_strided_slice %576 {offsets = [16, 0], sizes = [1, 64], strides = [1, 1]} : vector<60x64xf32> to vector<1x64xf32>
    %777 = vector.broadcast %776 : vector<1x64xf32> to vector<8x64xf32>
    %778 = arith.mulf %775, %777 : vector<8x64xf32>
    %779 = arith.mulf %778, %648 : vector<8x64xf32>
    %780 = arith.addf %772, %779 : vector<8x64xf32>
    %781 = vector.extract_strided_slice %575 {offsets = [7, 0], sizes = [1, 64], strides = [1, 1]} : vector<12x64xf32> to vector<1x64xf32>
    %782 = vector.broadcast %781 : vector<1x64xf32> to vector<8x64xf32>
    %783 = arith.subf %573, %782 : vector<8x64xf32>
    %784 = vector.extract_strided_slice %576 {offsets = [7, 0], sizes = [1, 64], strides = [1, 1]} : vector<60x64xf32> to vector<1x64xf32>
    %785 = vector.broadcast %784 : vector<1x64xf32> to vector<8x64xf32>
    %786 = arith.mulf %783, %785 : vector<8x64xf32>
    %787 = arith.mulf %786, %648 : vector<8x64xf32>
    %788 = vector.extract_strided_slice %575 {offsets = [9, 0], sizes = [1, 64], strides = [1, 1]} : vector<12x64xf32> to vector<1x64xf32>
    %789 = vector.broadcast %788 : vector<1x64xf32> to vector<8x64xf32>
    %790 = arith.subf %789, %573 : vector<8x64xf32>
    %791 = vector.extract_strided_slice %576 {offsets = [17, 0], sizes = [1, 64], strides = [1, 1]} : vector<60x64xf32> to vector<1x64xf32>
    %792 = vector.broadcast %791 : vector<1x64xf32> to vector<8x64xf32>
    %793 = arith.mulf %790, %792 : vector<8x64xf32>
    %794 = arith.mulf %793, %657 : vector<8x64xf32>
    %795 = arith.addf %787, %794 : vector<8x64xf32>
    %796 = vector.extract_strided_slice %575 {offsets = [8, 0], sizes = [1, 64], strides = [1, 1]} : vector<12x64xf32> to vector<1x64xf32>
    %797 = vector.broadcast %796 : vector<1x64xf32> to vector<8x64xf32>
    %798 = arith.subf %573, %797 : vector<8x64xf32>
    %799 = vector.extract_strided_slice %576 {offsets = [8, 0], sizes = [1, 64], strides = [1, 1]} : vector<60x64xf32> to vector<1x64xf32>
    %800 = vector.broadcast %799 : vector<1x64xf32> to vector<8x64xf32>
    %801 = arith.mulf %798, %800 : vector<8x64xf32>
    %802 = arith.mulf %801, %657 : vector<8x64xf32>
    %803 = vector.extract_strided_slice %575 {offsets = [10, 0], sizes = [1, 64], strides = [1, 1]} : vector<12x64xf32> to vector<1x64xf32>
    %804 = vector.broadcast %803 : vector<1x64xf32> to vector<8x64xf32>
    %805 = arith.subf %804, %573 : vector<8x64xf32>
    %806 = vector.extract_strided_slice %576 {offsets = [18, 0], sizes = [1, 64], strides = [1, 1]} : vector<60x64xf32> to vector<1x64xf32>
    %807 = vector.broadcast %806 : vector<1x64xf32> to vector<8x64xf32>
    %808 = arith.mulf %805, %807 : vector<8x64xf32>
    %809 = arith.mulf %808, %666 : vector<8x64xf32>
    %810 = arith.addf %802, %809 : vector<8x64xf32>
    %811 = vector.extract_strided_slice %575 {offsets = [9, 0], sizes = [1, 64], strides = [1, 1]} : vector<12x64xf32> to vector<1x64xf32>
    %812 = vector.broadcast %811 : vector<1x64xf32> to vector<8x64xf32>
    %813 = arith.subf %573, %812 : vector<8x64xf32>
    %814 = vector.extract_strided_slice %576 {offsets = [9, 0], sizes = [1, 64], strides = [1, 1]} : vector<60x64xf32> to vector<1x64xf32>
    %815 = vector.broadcast %814 : vector<1x64xf32> to vector<8x64xf32>
    %816 = arith.mulf %813, %815 : vector<8x64xf32>
    %817 = arith.mulf %816, %666 : vector<8x64xf32>
    %818 = vector.extract_strided_slice %575 {offsets = [11, 0], sizes = [1, 64], strides = [1, 1]} : vector<12x64xf32> to vector<1x64xf32>
    %819 = vector.broadcast %818 : vector<1x64xf32> to vector<8x64xf32>
    %820 = arith.subf %819, %573 : vector<8x64xf32>
    %821 = vector.extract_strided_slice %576 {offsets = [19, 0], sizes = [1, 64], strides = [1, 1]} : vector<60x64xf32> to vector<1x64xf32>
    %822 = vector.broadcast %821 : vector<1x64xf32> to vector<8x64xf32>
    %823 = arith.mulf %820, %822 : vector<8x64xf32>
    %824 = arith.mulf %823, %675 : vector<8x64xf32>
    %825 = arith.addf %817, %824 : vector<8x64xf32>
    %826 = vector.extract_strided_slice %575 {offsets = [0, 0], sizes = [1, 64], strides = [1, 1]} : vector<12x64xf32> to vector<1x64xf32>
    %827 = vector.broadcast %826 : vector<1x64xf32> to vector<8x64xf32>
    %828 = arith.subf %573, %827 : vector<8x64xf32>
    %829 = vector.extract_strided_slice %576 {offsets = [20, 0], sizes = [1, 64], strides = [1, 1]} : vector<60x64xf32> to vector<1x64xf32>
    %830 = vector.broadcast %829 : vector<1x64xf32> to vector<8x64xf32>
    %831 = arith.mulf %828, %830 : vector<8x64xf32>
    %832 = arith.mulf %831, %690 : vector<8x64xf32>
    %833 = vector.extract_strided_slice %575 {offsets = [3, 0], sizes = [1, 64], strides = [1, 1]} : vector<12x64xf32> to vector<1x64xf32>
    %834 = vector.broadcast %833 : vector<1x64xf32> to vector<8x64xf32>
    %835 = arith.subf %834, %573 : vector<8x64xf32>
    %836 = vector.extract_strided_slice %576 {offsets = [30, 0], sizes = [1, 64], strides = [1, 1]} : vector<60x64xf32> to vector<1x64xf32>
    %837 = vector.broadcast %836 : vector<1x64xf32> to vector<8x64xf32>
    %838 = arith.mulf %835, %837 : vector<8x64xf32>
    %839 = arith.mulf %838, %705 : vector<8x64xf32>
    %840 = arith.addf %832, %839 : vector<8x64xf32>
    %841 = vector.extract_strided_slice %575 {offsets = [1, 0], sizes = [1, 64], strides = [1, 1]} : vector<12x64xf32> to vector<1x64xf32>
    %842 = vector.broadcast %841 : vector<1x64xf32> to vector<8x64xf32>
    %843 = arith.subf %573, %842 : vector<8x64xf32>
    %844 = vector.extract_strided_slice %576 {offsets = [21, 0], sizes = [1, 64], strides = [1, 1]} : vector<60x64xf32> to vector<1x64xf32>
    %845 = vector.broadcast %844 : vector<1x64xf32> to vector<8x64xf32>
    %846 = arith.mulf %843, %845 : vector<8x64xf32>
    %847 = arith.mulf %846, %705 : vector<8x64xf32>
    %848 = vector.extract_strided_slice %575 {offsets = [4, 0], sizes = [1, 64], strides = [1, 1]} : vector<12x64xf32> to vector<1x64xf32>
    %849 = vector.broadcast %848 : vector<1x64xf32> to vector<8x64xf32>
    %850 = arith.subf %849, %573 : vector<8x64xf32>
    %851 = vector.extract_strided_slice %576 {offsets = [31, 0], sizes = [1, 64], strides = [1, 1]} : vector<60x64xf32> to vector<1x64xf32>
    %852 = vector.broadcast %851 : vector<1x64xf32> to vector<8x64xf32>
    %853 = arith.mulf %850, %852 : vector<8x64xf32>
    %854 = arith.mulf %853, %720 : vector<8x64xf32>
    %855 = arith.addf %847, %854 : vector<8x64xf32>
    %856 = vector.extract_strided_slice %575 {offsets = [2, 0], sizes = [1, 64], strides = [1, 1]} : vector<12x64xf32> to vector<1x64xf32>
    %857 = vector.broadcast %856 : vector<1x64xf32> to vector<8x64xf32>
    %858 = arith.subf %573, %857 : vector<8x64xf32>
    %859 = vector.extract_strided_slice %576 {offsets = [22, 0], sizes = [1, 64], strides = [1, 1]} : vector<60x64xf32> to vector<1x64xf32>
    %860 = vector.broadcast %859 : vector<1x64xf32> to vector<8x64xf32>
    %861 = arith.mulf %858, %860 : vector<8x64xf32>
    %862 = arith.mulf %861, %720 : vector<8x64xf32>
    %863 = vector.extract_strided_slice %575 {offsets = [5, 0], sizes = [1, 64], strides = [1, 1]} : vector<12x64xf32> to vector<1x64xf32>
    %864 = vector.broadcast %863 : vector<1x64xf32> to vector<8x64xf32>
    %865 = arith.subf %864, %573 : vector<8x64xf32>
    %866 = vector.extract_strided_slice %576 {offsets = [32, 0], sizes = [1, 64], strides = [1, 1]} : vector<60x64xf32> to vector<1x64xf32>
    %867 = vector.broadcast %866 : vector<1x64xf32> to vector<8x64xf32>
    %868 = arith.mulf %865, %867 : vector<8x64xf32>
    %869 = arith.mulf %868, %735 : vector<8x64xf32>
    %870 = arith.addf %862, %869 : vector<8x64xf32>
    %871 = vector.extract_strided_slice %575 {offsets = [3, 0], sizes = [1, 64], strides = [1, 1]} : vector<12x64xf32> to vector<1x64xf32>
    %872 = vector.broadcast %871 : vector<1x64xf32> to vector<8x64xf32>
    %873 = arith.subf %573, %872 : vector<8x64xf32>
    %874 = vector.extract_strided_slice %576 {offsets = [23, 0], sizes = [1, 64], strides = [1, 1]} : vector<60x64xf32> to vector<1x64xf32>
    %875 = vector.broadcast %874 : vector<1x64xf32> to vector<8x64xf32>
    %876 = arith.mulf %873, %875 : vector<8x64xf32>
    %877 = arith.mulf %876, %735 : vector<8x64xf32>
    %878 = vector.extract_strided_slice %575 {offsets = [6, 0], sizes = [1, 64], strides = [1, 1]} : vector<12x64xf32> to vector<1x64xf32>
    %879 = vector.broadcast %878 : vector<1x64xf32> to vector<8x64xf32>
    %880 = arith.subf %879, %573 : vector<8x64xf32>
    %881 = vector.extract_strided_slice %576 {offsets = [33, 0], sizes = [1, 64], strides = [1, 1]} : vector<60x64xf32> to vector<1x64xf32>
    %882 = vector.broadcast %881 : vector<1x64xf32> to vector<8x64xf32>
    %883 = arith.mulf %880, %882 : vector<8x64xf32>
    %884 = arith.mulf %883, %750 : vector<8x64xf32>
    %885 = arith.addf %877, %884 : vector<8x64xf32>
    %886 = vector.extract_strided_slice %575 {offsets = [4, 0], sizes = [1, 64], strides = [1, 1]} : vector<12x64xf32> to vector<1x64xf32>
    %887 = vector.broadcast %886 : vector<1x64xf32> to vector<8x64xf32>
    %888 = arith.subf %573, %887 : vector<8x64xf32>
    %889 = vector.extract_strided_slice %576 {offsets = [24, 0], sizes = [1, 64], strides = [1, 1]} : vector<60x64xf32> to vector<1x64xf32>
    %890 = vector.broadcast %889 : vector<1x64xf32> to vector<8x64xf32>
    %891 = arith.mulf %888, %890 : vector<8x64xf32>
    %892 = arith.mulf %891, %750 : vector<8x64xf32>
    %893 = vector.extract_strided_slice %575 {offsets = [7, 0], sizes = [1, 64], strides = [1, 1]} : vector<12x64xf32> to vector<1x64xf32>
    %894 = vector.broadcast %893 : vector<1x64xf32> to vector<8x64xf32>
    %895 = arith.subf %894, %573 : vector<8x64xf32>
    %896 = vector.extract_strided_slice %576 {offsets = [34, 0], sizes = [1, 64], strides = [1, 1]} : vector<60x64xf32> to vector<1x64xf32>
    %897 = vector.broadcast %896 : vector<1x64xf32> to vector<8x64xf32>
    %898 = arith.mulf %895, %897 : vector<8x64xf32>
    %899 = arith.mulf %898, %765 : vector<8x64xf32>
    %900 = arith.addf %892, %899 : vector<8x64xf32>
    %901 = vector.extract_strided_slice %575 {offsets = [5, 0], sizes = [1, 64], strides = [1, 1]} : vector<12x64xf32> to vector<1x64xf32>
    %902 = vector.broadcast %901 : vector<1x64xf32> to vector<8x64xf32>
    %903 = arith.subf %573, %902 : vector<8x64xf32>
    %904 = vector.extract_strided_slice %576 {offsets = [25, 0], sizes = [1, 64], strides = [1, 1]} : vector<60x64xf32> to vector<1x64xf32>
    %905 = vector.broadcast %904 : vector<1x64xf32> to vector<8x64xf32>
    %906 = arith.mulf %903, %905 : vector<8x64xf32>
    %907 = arith.mulf %906, %765 : vector<8x64xf32>
    %908 = vector.extract_strided_slice %575 {offsets = [8, 0], sizes = [1, 64], strides = [1, 1]} : vector<12x64xf32> to vector<1x64xf32>
    %909 = vector.broadcast %908 : vector<1x64xf32> to vector<8x64xf32>
    %910 = arith.subf %909, %573 : vector<8x64xf32>
    %911 = vector.extract_strided_slice %576 {offsets = [35, 0], sizes = [1, 64], strides = [1, 1]} : vector<60x64xf32> to vector<1x64xf32>
    %912 = vector.broadcast %911 : vector<1x64xf32> to vector<8x64xf32>
    %913 = arith.mulf %910, %912 : vector<8x64xf32>
    %914 = arith.mulf %913, %780 : vector<8x64xf32>
    %915 = arith.addf %907, %914 : vector<8x64xf32>
    %916 = vector.extract_strided_slice %575 {offsets = [6, 0], sizes = [1, 64], strides = [1, 1]} : vector<12x64xf32> to vector<1x64xf32>
    %917 = vector.broadcast %916 : vector<1x64xf32> to vector<8x64xf32>
    %918 = arith.subf %573, %917 : vector<8x64xf32>
    %919 = vector.extract_strided_slice %576 {offsets = [26, 0], sizes = [1, 64], strides = [1, 1]} : vector<60x64xf32> to vector<1x64xf32>
    %920 = vector.broadcast %919 : vector<1x64xf32> to vector<8x64xf32>
    %921 = arith.mulf %918, %920 : vector<8x64xf32>
    %922 = arith.mulf %921, %780 : vector<8x64xf32>
    %923 = vector.extract_strided_slice %575 {offsets = [9, 0], sizes = [1, 64], strides = [1, 1]} : vector<12x64xf32> to vector<1x64xf32>
    %924 = vector.broadcast %923 : vector<1x64xf32> to vector<8x64xf32>
    %925 = arith.subf %924, %573 : vector<8x64xf32>
    %926 = vector.extract_strided_slice %576 {offsets = [36, 0], sizes = [1, 64], strides = [1, 1]} : vector<60x64xf32> to vector<1x64xf32>
    %927 = vector.broadcast %926 : vector<1x64xf32> to vector<8x64xf32>
    %928 = arith.mulf %925, %927 : vector<8x64xf32>
    %929 = arith.mulf %928, %795 : vector<8x64xf32>
    %930 = arith.addf %922, %929 : vector<8x64xf32>
    %931 = vector.extract_strided_slice %575 {offsets = [7, 0], sizes = [1, 64], strides = [1, 1]} : vector<12x64xf32> to vector<1x64xf32>
    %932 = vector.broadcast %931 : vector<1x64xf32> to vector<8x64xf32>
    %933 = arith.subf %573, %932 : vector<8x64xf32>
    %934 = vector.extract_strided_slice %576 {offsets = [27, 0], sizes = [1, 64], strides = [1, 1]} : vector<60x64xf32> to vector<1x64xf32>
    %935 = vector.broadcast %934 : vector<1x64xf32> to vector<8x64xf32>
    %936 = arith.mulf %933, %935 : vector<8x64xf32>
    %937 = arith.mulf %936, %795 : vector<8x64xf32>
    %938 = vector.extract_strided_slice %575 {offsets = [10, 0], sizes = [1, 64], strides = [1, 1]} : vector<12x64xf32> to vector<1x64xf32>
    %939 = vector.broadcast %938 : vector<1x64xf32> to vector<8x64xf32>
    %940 = arith.subf %939, %573 : vector<8x64xf32>
    %941 = vector.extract_strided_slice %576 {offsets = [37, 0], sizes = [1, 64], strides = [1, 1]} : vector<60x64xf32> to vector<1x64xf32>
    %942 = vector.broadcast %941 : vector<1x64xf32> to vector<8x64xf32>
    %943 = arith.mulf %940, %942 : vector<8x64xf32>
    %944 = arith.mulf %943, %810 : vector<8x64xf32>
    %945 = arith.addf %937, %944 : vector<8x64xf32>
    %946 = vector.extract_strided_slice %575 {offsets = [8, 0], sizes = [1, 64], strides = [1, 1]} : vector<12x64xf32> to vector<1x64xf32>
    %947 = vector.broadcast %946 : vector<1x64xf32> to vector<8x64xf32>
    %948 = arith.subf %573, %947 : vector<8x64xf32>
    %949 = vector.extract_strided_slice %576 {offsets = [28, 0], sizes = [1, 64], strides = [1, 1]} : vector<60x64xf32> to vector<1x64xf32>
    %950 = vector.broadcast %949 : vector<1x64xf32> to vector<8x64xf32>
    %951 = arith.mulf %948, %950 : vector<8x64xf32>
    %952 = arith.mulf %951, %810 : vector<8x64xf32>
    %953 = vector.extract_strided_slice %575 {offsets = [11, 0], sizes = [1, 64], strides = [1, 1]} : vector<12x64xf32> to vector<1x64xf32>
    %954 = vector.broadcast %953 : vector<1x64xf32> to vector<8x64xf32>
    %955 = arith.subf %954, %573 : vector<8x64xf32>
    %956 = vector.extract_strided_slice %576 {offsets = [38, 0], sizes = [1, 64], strides = [1, 1]} : vector<60x64xf32> to vector<1x64xf32>
    %957 = vector.broadcast %956 : vector<1x64xf32> to vector<8x64xf32>
    %958 = arith.mulf %955, %957 : vector<8x64xf32>
    %959 = arith.mulf %958, %825 : vector<8x64xf32>
    %960 = arith.addf %952, %959 : vector<8x64xf32>
    %961 = vector.extract_strided_slice %575 {offsets = [0, 0], sizes = [1, 64], strides = [1, 1]} : vector<12x64xf32> to vector<1x64xf32>
    %962 = vector.broadcast %961 : vector<1x64xf32> to vector<8x64xf32>
    %963 = arith.subf %573, %962 : vector<8x64xf32>
    %964 = vector.extract_strided_slice %576 {offsets = [40, 0], sizes = [1, 64], strides = [1, 1]} : vector<60x64xf32> to vector<1x64xf32>
    %965 = vector.broadcast %964 : vector<1x64xf32> to vector<8x64xf32>
    %966 = arith.mulf %963, %965 : vector<8x64xf32>
    %967 = arith.mulf %966, %840 : vector<8x64xf32>
    %968 = vector.extract_strided_slice %575 {offsets = [4, 0], sizes = [1, 64], strides = [1, 1]} : vector<12x64xf32> to vector<1x64xf32>
    %969 = vector.broadcast %968 : vector<1x64xf32> to vector<8x64xf32>
    %970 = arith.subf %969, %573 : vector<8x64xf32>
    %971 = vector.extract_strided_slice %576 {offsets = [50, 0], sizes = [1, 64], strides = [1, 1]} : vector<60x64xf32> to vector<1x64xf32>
    %972 = vector.broadcast %971 : vector<1x64xf32> to vector<8x64xf32>
    %973 = arith.mulf %970, %972 : vector<8x64xf32>
    %974 = arith.mulf %973, %855 : vector<8x64xf32>
    %975 = arith.addf %967, %974 : vector<8x64xf32>
    %976 = vector.extract_strided_slice %575 {offsets = [1, 0], sizes = [1, 64], strides = [1, 1]} : vector<12x64xf32> to vector<1x64xf32>
    %977 = vector.broadcast %976 : vector<1x64xf32> to vector<8x64xf32>
    %978 = arith.subf %573, %977 : vector<8x64xf32>
    %979 = vector.extract_strided_slice %576 {offsets = [41, 0], sizes = [1, 64], strides = [1, 1]} : vector<60x64xf32> to vector<1x64xf32>
    %980 = vector.broadcast %979 : vector<1x64xf32> to vector<8x64xf32>
    %981 = arith.mulf %978, %980 : vector<8x64xf32>
    %982 = arith.mulf %981, %855 : vector<8x64xf32>
    %983 = vector.extract_strided_slice %575 {offsets = [5, 0], sizes = [1, 64], strides = [1, 1]} : vector<12x64xf32> to vector<1x64xf32>
    %984 = vector.broadcast %983 : vector<1x64xf32> to vector<8x64xf32>
    %985 = arith.subf %984, %573 : vector<8x64xf32>
    %986 = vector.extract_strided_slice %576 {offsets = [51, 0], sizes = [1, 64], strides = [1, 1]} : vector<60x64xf32> to vector<1x64xf32>
    %987 = vector.broadcast %986 : vector<1x64xf32> to vector<8x64xf32>
    %988 = arith.mulf %985, %987 : vector<8x64xf32>
    %989 = arith.mulf %988, %870 : vector<8x64xf32>
    %990 = arith.addf %982, %989 : vector<8x64xf32>
    %991 = vector.extract_strided_slice %575 {offsets = [2, 0], sizes = [1, 64], strides = [1, 1]} : vector<12x64xf32> to vector<1x64xf32>
    %992 = vector.broadcast %991 : vector<1x64xf32> to vector<8x64xf32>
    %993 = arith.subf %573, %992 : vector<8x64xf32>
    %994 = vector.extract_strided_slice %576 {offsets = [42, 0], sizes = [1, 64], strides = [1, 1]} : vector<60x64xf32> to vector<1x64xf32>
    %995 = vector.broadcast %994 : vector<1x64xf32> to vector<8x64xf32>
    %996 = arith.mulf %993, %995 : vector<8x64xf32>
    %997 = arith.mulf %996, %870 : vector<8x64xf32>
    %998 = vector.extract_strided_slice %575 {offsets = [6, 0], sizes = [1, 64], strides = [1, 1]} : vector<12x64xf32> to vector<1x64xf32>
    %999 = vector.broadcast %998 : vector<1x64xf32> to vector<8x64xf32>
    %1000 = arith.subf %999, %573 : vector<8x64xf32>
    %1001 = vector.extract_strided_slice %576 {offsets = [52, 0], sizes = [1, 64], strides = [1, 1]} : vector<60x64xf32> to vector<1x64xf32>
    %1002 = vector.broadcast %1001 : vector<1x64xf32> to vector<8x64xf32>
    %1003 = arith.mulf %1000, %1002 : vector<8x64xf32>
    %1004 = arith.mulf %1003, %885 : vector<8x64xf32>
    %1005 = arith.addf %997, %1004 : vector<8x64xf32>
    %1006 = vector.extract_strided_slice %575 {offsets = [3, 0], sizes = [1, 64], strides = [1, 1]} : vector<12x64xf32> to vector<1x64xf32>
    %1007 = vector.broadcast %1006 : vector<1x64xf32> to vector<8x64xf32>
    %1008 = arith.subf %573, %1007 : vector<8x64xf32>
    %1009 = vector.extract_strided_slice %576 {offsets = [43, 0], sizes = [1, 64], strides = [1, 1]} : vector<60x64xf32> to vector<1x64xf32>
    %1010 = vector.broadcast %1009 : vector<1x64xf32> to vector<8x64xf32>
    %1011 = arith.mulf %1008, %1010 : vector<8x64xf32>
    %1012 = arith.mulf %1011, %885 : vector<8x64xf32>
    %1013 = vector.extract_strided_slice %575 {offsets = [7, 0], sizes = [1, 64], strides = [1, 1]} : vector<12x64xf32> to vector<1x64xf32>
    %1014 = vector.broadcast %1013 : vector<1x64xf32> to vector<8x64xf32>
    %1015 = arith.subf %1014, %573 : vector<8x64xf32>
    %1016 = vector.extract_strided_slice %576 {offsets = [53, 0], sizes = [1, 64], strides = [1, 1]} : vector<60x64xf32> to vector<1x64xf32>
    %1017 = vector.broadcast %1016 : vector<1x64xf32> to vector<8x64xf32>
    %1018 = arith.mulf %1015, %1017 : vector<8x64xf32>
    %1019 = arith.mulf %1018, %900 : vector<8x64xf32>
    %1020 = arith.addf %1012, %1019 : vector<8x64xf32>
    %1021 = vector.extract_strided_slice %575 {offsets = [4, 0], sizes = [1, 64], strides = [1, 1]} : vector<12x64xf32> to vector<1x64xf32>
    %1022 = vector.broadcast %1021 : vector<1x64xf32> to vector<8x64xf32>
    %1023 = arith.subf %573, %1022 : vector<8x64xf32>
    %1024 = vector.extract_strided_slice %576 {offsets = [44, 0], sizes = [1, 64], strides = [1, 1]} : vector<60x64xf32> to vector<1x64xf32>
    %1025 = vector.broadcast %1024 : vector<1x64xf32> to vector<8x64xf32>
    %1026 = arith.mulf %1023, %1025 : vector<8x64xf32>
    %1027 = arith.mulf %1026, %900 : vector<8x64xf32>
    %1028 = vector.extract_strided_slice %575 {offsets = [8, 0], sizes = [1, 64], strides = [1, 1]} : vector<12x64xf32> to vector<1x64xf32>
    %1029 = vector.broadcast %1028 : vector<1x64xf32> to vector<8x64xf32>
    %1030 = arith.subf %1029, %573 : vector<8x64xf32>
    %1031 = vector.extract_strided_slice %576 {offsets = [54, 0], sizes = [1, 64], strides = [1, 1]} : vector<60x64xf32> to vector<1x64xf32>
    %1032 = vector.broadcast %1031 : vector<1x64xf32> to vector<8x64xf32>
    %1033 = arith.mulf %1030, %1032 : vector<8x64xf32>
    %1034 = arith.mulf %1033, %915 : vector<8x64xf32>
    %1035 = arith.addf %1027, %1034 : vector<8x64xf32>
    %1036 = vector.extract_strided_slice %575 {offsets = [5, 0], sizes = [1, 64], strides = [1, 1]} : vector<12x64xf32> to vector<1x64xf32>
    %1037 = vector.broadcast %1036 : vector<1x64xf32> to vector<8x64xf32>
    %1038 = arith.subf %573, %1037 : vector<8x64xf32>
    %1039 = vector.extract_strided_slice %576 {offsets = [45, 0], sizes = [1, 64], strides = [1, 1]} : vector<60x64xf32> to vector<1x64xf32>
    %1040 = vector.broadcast %1039 : vector<1x64xf32> to vector<8x64xf32>
    %1041 = arith.mulf %1038, %1040 : vector<8x64xf32>
    %1042 = arith.mulf %1041, %915 : vector<8x64xf32>
    %1043 = vector.extract_strided_slice %575 {offsets = [9, 0], sizes = [1, 64], strides = [1, 1]} : vector<12x64xf32> to vector<1x64xf32>
    %1044 = vector.broadcast %1043 : vector<1x64xf32> to vector<8x64xf32>
    %1045 = arith.subf %1044, %573 : vector<8x64xf32>
    %1046 = vector.extract_strided_slice %576 {offsets = [55, 0], sizes = [1, 64], strides = [1, 1]} : vector<60x64xf32> to vector<1x64xf32>
    %1047 = vector.broadcast %1046 : vector<1x64xf32> to vector<8x64xf32>
    %1048 = arith.mulf %1045, %1047 : vector<8x64xf32>
    %1049 = arith.mulf %1048, %930 : vector<8x64xf32>
    %1050 = arith.addf %1042, %1049 : vector<8x64xf32>
    %1051 = vector.extract_strided_slice %575 {offsets = [6, 0], sizes = [1, 64], strides = [1, 1]} : vector<12x64xf32> to vector<1x64xf32>
    %1052 = vector.broadcast %1051 : vector<1x64xf32> to vector<8x64xf32>
    %1053 = arith.subf %573, %1052 : vector<8x64xf32>
    %1054 = vector.extract_strided_slice %576 {offsets = [46, 0], sizes = [1, 64], strides = [1, 1]} : vector<60x64xf32> to vector<1x64xf32>
    %1055 = vector.broadcast %1054 : vector<1x64xf32> to vector<8x64xf32>
    %1056 = arith.mulf %1053, %1055 : vector<8x64xf32>
    %1057 = arith.mulf %1056, %930 : vector<8x64xf32>
    %1058 = vector.extract_strided_slice %575 {offsets = [10, 0], sizes = [1, 64], strides = [1, 1]} : vector<12x64xf32> to vector<1x64xf32>
    %1059 = vector.broadcast %1058 : vector<1x64xf32> to vector<8x64xf32>
    %1060 = arith.subf %1059, %573 : vector<8x64xf32>
    %1061 = vector.extract_strided_slice %576 {offsets = [56, 0], sizes = [1, 64], strides = [1, 1]} : vector<60x64xf32> to vector<1x64xf32>
    %1062 = vector.broadcast %1061 : vector<1x64xf32> to vector<8x64xf32>
    %1063 = arith.mulf %1060, %1062 : vector<8x64xf32>
    %1064 = arith.mulf %1063, %945 : vector<8x64xf32>
    %1065 = arith.addf %1057, %1064 : vector<8x64xf32>
    %1066 = vector.extract_strided_slice %575 {offsets = [7, 0], sizes = [1, 64], strides = [1, 1]} : vector<12x64xf32> to vector<1x64xf32>
    %1067 = vector.broadcast %1066 : vector<1x64xf32> to vector<8x64xf32>
    %1068 = arith.subf %573, %1067 : vector<8x64xf32>
    %1069 = vector.extract_strided_slice %576 {offsets = [47, 0], sizes = [1, 64], strides = [1, 1]} : vector<60x64xf32> to vector<1x64xf32>
    %1070 = vector.broadcast %1069 : vector<1x64xf32> to vector<8x64xf32>
    %1071 = arith.mulf %1068, %1070 : vector<8x64xf32>
    %1072 = arith.mulf %1071, %945 : vector<8x64xf32>
    %1073 = vector.extract_strided_slice %575 {offsets = [11, 0], sizes = [1, 64], strides = [1, 1]} : vector<12x64xf32> to vector<1x64xf32>
    %1074 = vector.broadcast %1073 : vector<1x64xf32> to vector<8x64xf32>
    %1075 = arith.subf %1074, %573 : vector<8x64xf32>
    %1076 = vector.extract_strided_slice %576 {offsets = [57, 0], sizes = [1, 64], strides = [1, 1]} : vector<60x64xf32> to vector<1x64xf32>
    %1077 = vector.broadcast %1076 : vector<1x64xf32> to vector<8x64xf32>
    %1078 = arith.mulf %1075, %1077 : vector<8x64xf32>
    %1079 = arith.mulf %1078, %960 : vector<8x64xf32>
    %1080 = arith.addf %1072, %1079 : vector<8x64xf32>
    %cst_33 = arith.constant 5.000000e-01 : f32
    %1081 = vector.broadcast %cst_33 : f32 to vector<8x64xf32>
    %1082 = arith.mulf %1081, %573 : vector<8x64xf32>
    %cst_34 = arith.constant 0.707106769 : f32
    %1083 = vector.broadcast %cst_34 : f32 to vector<8x64xf32>
    %1084 = arith.mulf %573, %1083 : vector<8x64xf32>
    %1085 = math.absf %1084 : vector<8x64xf32>
    %cst_35 = arith.constant 0.327591091 : f32
    %1086 = vector.broadcast %cst_35 : f32 to vector<8x64xf32>
    %1087 = arith.mulf %1086, %1085 : vector<8x64xf32>
    %cst_36 = arith.constant 1.000000e+00 : f32
    %1088 = vector.broadcast %cst_36 : f32 to vector<8x64xf32>
    %1089 = arith.addf %1088, %1087 : vector<8x64xf32>
    %cst_37 = arith.constant 1.000000e+00 : f32
    %1090 = vector.broadcast %cst_37 : f32 to vector<8x64xf32>
    %1091 = arith.divf %1090, %1089 : vector<8x64xf32>
    %cst_38 = arith.constant 1.06140542 : f32
    %1092 = vector.broadcast %cst_38 : f32 to vector<8x64xf32>
    %1093 = arith.mulf %1092, %1091 : vector<8x64xf32>
    %cst_39 = arith.constant -1.45315206 : f32
    %1094 = vector.broadcast %cst_39 : f32 to vector<8x64xf32>
    %1095 = arith.addf %1093, %1094 : vector<8x64xf32>
    %1096 = arith.mulf %1095, %1091 : vector<8x64xf32>
    %cst_40 = arith.constant 1.42141378 : f32
    %1097 = vector.broadcast %cst_40 : f32 to vector<8x64xf32>
    %1098 = arith.addf %1096, %1097 : vector<8x64xf32>
    %1099 = arith.mulf %1098, %1091 : vector<8x64xf32>
    %cst_41 = arith.constant -0.284496725 : f32
    %1100 = vector.broadcast %cst_41 : f32 to vector<8x64xf32>
    %1101 = arith.addf %1099, %1100 : vector<8x64xf32>
    %1102 = arith.mulf %1101, %1091 : vector<8x64xf32>
    %cst_42 = arith.constant 0.254829586 : f32
    %1103 = vector.broadcast %cst_42 : f32 to vector<8x64xf32>
    %1104 = arith.addf %1102, %1103 : vector<8x64xf32>
    %1105 = arith.mulf %1104, %1091 : vector<8x64xf32>
    %1106 = arith.mulf %1085, %1085 : vector<8x64xf32>
    %cst_43 = arith.constant 0.000000e+00 : f32
    %1107 = vector.broadcast %cst_43 : f32 to vector<8x64xf32>
    %1108 = arith.subf %1107, %1106 : vector<8x64xf32>
    %1109 = math.exp %1108 : vector<8x64xf32>
    %1110 = arith.mulf %1105, %1109 : vector<8x64xf32>
    %cst_44 = arith.constant 1.000000e+00 : f32
    %1111 = vector.broadcast %cst_44 : f32 to vector<8x64xf32>
    %1112 = arith.subf %1111, %1110 : vector<8x64xf32>
    %cst_45 = arith.constant 0.000000e+00 : f32
    %1113 = vector.broadcast %cst_45 : f32 to vector<8x64xf32>
    %1114 = arith.cmpf oge, %1084, %1113 : vector<8x64xf32>
    %cst_46 = arith.constant 0.000000e+00 : f32
    %1115 = vector.broadcast %cst_46 : f32 to vector<8x64xf32>
    %1116 = arith.subf %1115, %1112 : vector<8x64xf32>
    %1117 = arith.select %1114, %1112, %1116 : vector<8x64xi1>, vector<8x64xf32>
    %cst_47 = arith.constant 1.000000e+00 : f32
    %1118 = vector.broadcast %cst_47 : f32 to vector<8x64xf32>
    %1119 = arith.addf %1118, %1117 : vector<8x64xf32>
    %1120 = arith.mulf %1082, %1119 : vector<8x64xf32>
    %1121 = tpu.concatenate %975, %990, %1005, %1020, %1035, %1050, %1065, %1080, %1120 in 1 : vector<8x64xf32>, vector<8x64xf32>, vector<8x64xf32>, vector<8x64xf32>, vector<8x64xf32>, vector<8x64xf32>, vector<8x64xf32>, vector<8x64xf32>, vector<8x64xf32> -> vector<8x576xf32>
    %c0_48 = arith.constant 0 : index
    %c0_49 = arith.constant 0 : index
    %1122 = vector.load %arg7[%c0_48, %c0_49] : memref<576x32xf32, #tpu.memory_space<vmem>>, vector<576x32xf32>
    %cst_50 = arith.constant dense<0.000000e+00> : vector<8x32xf32>
    %1123 = tpu.matmul %1121, %1122, %cst_50 {dimension_numbers = #tpu.dot_dimension_numbers<[1], [0], [0], [1], [0, 0, 1, 1], [], []>} : vector<8x576xf32>, vector<576x32xf32>, vector<8x32xf32> -> vector<8x32xf32>
    %cst_51 = arith.constant dense<0.000000e+00> : vector<8xf32>
    %1124 = vector.multi_reduction <add>, %1123, %cst_51 [1] : vector<8x32xf32> to vector<8xf32>
    %1125 = vector.shape_cast %1124 : vector<8xf32> to vector<8x1xf32>
    %cst_52 = arith.constant 3.200000e+01 : f32
    %1126 = vector.broadcast %cst_52 : f32 to vector<8x1xf32>
    %1127 = arith.divf %1125, %1126 : vector<8x1xf32>
    %1128 = vector.broadcast %1127 : vector<8x1xf32> to vector<8x32xf32>
    %1129 = arith.subf %1123, %1128 : vector<8x32xf32>
    %1130 = arith.mulf %1129, %1129 : vector<8x32xf32>
    %cst_53 = arith.constant dense<0.000000e+00> : vector<8xf32>
    %1131 = vector.multi_reduction <add>, %1130, %cst_53 [1] : vector<8x32xf32> to vector<8xf32>
    %1132 = vector.shape_cast %1131 : vector<8xf32> to vector<8x1xf32>
    %cst_54 = arith.constant 3.200000e+01 : f32
    %1133 = vector.broadcast %cst_54 : f32 to vector<8x1xf32>
    %1134 = arith.divf %1132, %1133 : vector<8x1xf32>
    %1135 = vector.broadcast %1127 : vector<8x1xf32> to vector<8x32xf32>
    %1136 = arith.subf %1123, %1135 : vector<8x32xf32>
    %cst_55 = arith.constant 9.99999974E-6 : f32
    %1137 = vector.broadcast %cst_55 : f32 to vector<8x1xf32>
    %1138 = arith.addf %1134, %1137 : vector<8x1xf32>
    %1139 = math.rsqrt %1138 : vector<8x1xf32>
    %1140 = vector.broadcast %1139 : vector<8x1xf32> to vector<8x32xf32>
    %1141 = arith.mulf %1136, %1140 : vector<8x32xf32>
    %cst_56 = arith.constant 0.000000e+00 : f32
    %1142 = vector.broadcast %cst_56 : f32 to vector<8x32xf32>
    %1143 = arith.cmpf oge, %1141, %1142 : vector<8x32xf32>
    %1144 = vector.broadcast %574 : f32 to vector<8x32xf32>
    %1145 = arith.mulf %1144, %1141 : vector<8x32xf32>
    %1146 = arith.select %1143, %1141, %1145 : vector<8x32xi1>, vector<8x32xf32>
    %c0_57 = arith.constant 0 : index
    %c0_58 = arith.constant 0 : index
    %1147 = vector.load %arg9[%c0_57, %c0_58] : memref<8x32xf32, #tpu.memory_space<vmem>>, vector<8x32xf32>
    tpu.vector_store %arg9[%c0_57, %c0_58], %1146 {strides = array<i32>} : memref<8x32xf32, #tpu.memory_space<vmem>>, vector<8x32xf32>,
    return
  }
  func.func @transform_0(%arg0: i32) -> (i32, i32) {
    %c0_i32 = arith.constant 0 : i32
    %c0_i32_0 = arith.constant 0 : i32
    return %arg0, %c0_i32 : i32, i32
  }
  func.func @transform_1(%arg0: i32) -> (i32, i32) {
    %c0_i32 = arith.constant 0 : i32
    %c0_i32_0 = arith.constant 0 : i32
    %c0_i32_1 = arith.constant 0 : i32
    return %c0_i32, %c0_i32_0 : i32, i32
  }
  func.func @transform_2(%arg0: i32) -> (i32, i32) {
    %c0_i32 = arith.constant 0 : i32
    %c0_i32_0 = arith.constant 0 : i32
    %c0_i32_1 = arith.constant 0 : i32
    return %c0_i32, %c0_i32_0 : i32, i32
  }
  func.func @transform_3(%arg0: i32) -> (i32, i32) {
    %c0_i32 = arith.constant 0 : i32
    %c0_i32_0 = arith.constant 0 : i32
    %c0_i32_1 = arith.constant 0 : i32
    return %c0_i32, %c0_i32_0 : i32, i32
  }
  func.func @transform_4(%arg0: i32) -> (i32, i32) {
    %c0_i32 = arith.constant 0 : i32
    %c0_i32_0 = arith.constant 0 : i32
    %c0_i32_1 = arith.constant 0 : i32
    return %c0_i32, %c0_i32_0 : i32, i32
  }
  func.func @transform_5(%arg0: i32) -> (i32, i32) {
    %c0_i32 = arith.constant 0 : i32
    %c0_i32_0 = arith.constant 0 : i32
    %c0_i32_1 = arith.constant 0 : i32
    return %c0_i32, %c0_i32_0 : i32, i32
  }
  func.func @transform_6(%arg0: i32) -> (i32, i32) {
    %c0_i32 = arith.constant 0 : i32
    %c0_i32_0 = arith.constant 0 : i32
    %c0_i32_1 = arith.constant 0 : i32
    return %c0_i32, %c0_i32_0 : i32, i32
  }
  func.func @transform_7(%arg0: i32) -> i32 {
    %c0_i32 = arith.constant 0 : i32
    %c0_i32_0 = arith.constant 0 : i32
    return %c0_i32 : i32
  }
  func.func @transform_8(%arg0: i32) -> (i32, i32) {
    %c0_i32 = arith.constant 0 : i32
    %c0_i32_0 = arith.constant 0 : i32
    return %arg0, %c0_i32 : i32, i32
  }
}

</mosaic_0001>

<llo_original>
// kernel: kan_forward.1
$region0: #{kan_forward.1}
  #allocation0 [shape = 'u32[]', space=smem, size = 0x4, offset = 0x4, fixed_abs, tag = 'smem constant byte address 0x4 - core index']
  #allocation1 [shape = 'u32[144,128]{1,0:T(1,128)}', space=vmem, size = 0x12000, scoped, tag = 'internal scratch']
  %s0 = inlined_call_operand.hbm [shape: f32[8,32], index: 0, kind: input, shape index: {}]
  %s1 = inlined_call_operand.hbm [shape: f32[12,32], index: 1, kind: input, shape index: {}]
  %s2 = inlined_call_operand.hbm [shape: f32[60,32], index: 2, kind: input, shape index: {}]
  %s3 = inlined_call_operand.hbm [shape: f32[288,64], index: 3, kind: input, shape index: {}]
  %s4 = inlined_call_operand.vmem [shape: f32[12,64], index: 4, kind: input, shape index: {}]
  %s5 = inlined_call_operand.hbm [shape: f32[60,64], index: 5, kind: input, shape index: {}]
  %s6 = inlined_call_operand.hbm [shape: f32[576,32], index: 6, kind: input, shape index: {}]
  %s7 = inlined_call_operand.vmem [shape: f32[2], index: 7, kind: input, shape index: {}]
  %s8 = inlined_call_operand.hbm [shape: f32[8,32], index: 8, kind: output, shape index: {}]
  %s9 = sld [smem:[#allocation0]]
  $region70: #{kan_forward.1} parent=0
    _
  %s11 = ssub.s32 1, %s9
  %s12 = scalar_select 0, %s11, %s9
  $region1: #{kan_forward.1} parent=0
    #allocation2 [shape = 'u8[4096]{0}', space=vmem, size = 0x1000, scoped, tag = 'input window, operand 0, single buffered']
    #allocation3 [shape = 's32[1]{0}', space=sflag, size = 0x4, scoped, tag = 'scoped memory for kan_forward.1']
    #allocation4 [shape = 's32[1]{0}', space=sflag, size = 0x4, scoped, tag = 'scoped memory for kan_forward.1']
    #allocation5 [shape = 's32[1]{0}', space=sflag, size = 0x4, scoped, tag = 'scoped memory for kan_forward.1']
    #allocation6 [shape = 'u8[8192]{0}', space=vmem, size = 0x2000, scoped, tag = 'input window, operand 1, single buffered']
    #allocation7 [shape = 's32[1]{0}', space=sflag, size = 0x4, scoped, tag = 'scoped memory for kan_forward.1']
    #allocation8 [shape = 'u8[32768]{0}', space=vmem, size = 0x8000, scoped, tag = 'input window, operand 2, single buffered']
    #allocation9 [shape = 'u8[147456]{0}', space=vmem, size = 0x24000, scoped, tag = 'input window, operand 3, single buffered']
    #allocation10 [shape = 's32[1]{0}', space=sflag, size = 0x4, scoped, tag = 'scoped memory for kan_forward.1']
    #allocation11 [shape = 'u8[32768]{0}', space=vmem, size = 0x8000, scoped, tag = 'input window, operand 5, single buffered']
    #allocation12 [shape = 'u8[294912]{0}', space=vmem, size = 0x48000, scoped, tag = 'input window, operand 6, single buffered']
    #allocation13 [shape = 's32[1]{0}', space=sflag, size = 0x4, scoped, tag = 'scoped memory for kan_forward.1']
    #allocation14 [shape = 'u8[512]{0}', space=smem, size = 0x200, scoped, tag = 'input window, operand 7, single buffered']
    #allocation15 [shape = 'u8[4096]{0}', space=vmem, size = 0x1000, scoped, tag = 'output window, operand 0, single buffered']
    %13 = vsyncpa [#allocation3], 0
    %14 = vsyncpa [#allocation7], 0
    %15 = vsyncpa [#allocation10], 0
    %16 = vsyncpa [#allocation13], 0
    %17 = vsyncpa [#allocation5], 0
    %18 = vsyncpa [#allocation4], 0
    // Predicated region
    $region2: #{kan_forward.1} parent=1 // pred_check
      _
    $region3: #{kan_forward.1} parent=1 // pred_check_branch
      %20 = sbr.rel (0) target = $region5
    $region4: #{kan_forward.1} parent=1 // pred_region
      %s22 = ssub.s32 128, 128
      %23 = vsyncadd [#allocation3], %s22
      %s25 = sshll.u32 [#allocation2], 4
      %s26 = int_to_ptr.vmem [resolvable:$true] %s25
      %28 = dma.hbm_to_vmem [thread:$0]  %s0, 128, %s26, [#allocation3]
    $region5: #{kan_forward.1} parent=1 // pred_fallthru
      _
    // Predicated region
    $region6: #{kan_forward.1} parent=1 // pred_check
      _
    $region7: #{kan_forward.1} parent=1 // pred_check_branch
      %30 = sbr.rel (0) target = $region9
    $region8: #{kan_forward.1} parent=1 // pred_region
      %s32 = ssub.s32 256, 256
      %33 = vsyncadd [#allocation7], %s32
      %s34 = sshll.u32 [#allocation6], 4
      %s35 = int_to_ptr.vmem [resolvable:$true] %s34
      %40 = dma.hbm_to_vmem [thread:$0]  %s1, 256, %s35, [#allocation7], 128, 128, 8
    $region9: #{kan_forward.1} parent=1 // pred_fallthru
      _
    // Predicated region
    $region10: #{kan_forward.1} parent=1 // pred_check
      _
    $region11: #{kan_forward.1} parent=1 // pred_check_branch
      %42 = sbr.rel (0) target = $region13
    $region12: #{kan_forward.1} parent=1 // pred_region
      %s44 = ssub.s32 1024, 1024
      %45 = vsyncadd [#allocation7], %s44
      %s46 = sshll.u32 [#allocation8], 4
      %s47 = int_to_ptr.vmem [resolvable:$true] %s46
      %52 = dma.hbm_to_vmem [thread:$0]  %s2, 1024, %s47, [#allocation7], 128, 128, 8
    $region13: #{kan_forward.1} parent=1 // pred_fallthru
      _
    // Predicated region
    $region14: #{kan_forward.1} parent=1 // pred_check
      _
    $region15: #{kan_forward.1} parent=1 // pred_check_branch
      %54 = sbr.rel (0) target = $region17
    $region16: #{kan_forward.1} parent=1 // pred_region
      %s56 = ssub.s32 4608, 4608
      %57 = vsyncadd [#allocation10], %s56
      %s58 = sshll.u32 [#allocation9], 4
      %s59 = int_to_ptr.vmem [resolvable:$true] %s58
      %64 = dma.hbm_to_vmem [thread:$0]  %s3, 4608, %s59, [#allocation10], 128, 128, 8
    $region17: #{kan_forward.1} parent=1 // pred_fallthru
      _
    // Predicated region
    $region18: #{kan_forward.1} parent=1 // pred_check
      _
    $region19: #{kan_forward.1} parent=1 // pred_check_branch
      %66 = sbr.rel (0) target = $region21
    $region20: #{kan_forward.1} parent=1 // pred_region
      _
    $region21: #{kan_forward.1} parent=1 // pred_fallthru
      _
    // Predicated region
    $region22: #{kan_forward.1} parent=1 // pred_check
      _
    $region23: #{kan_forward.1} parent=1 // pred_check_branch
      %68 = sbr.rel (0) target = $region25
    $region24: #{kan_forward.1} parent=1 // pred_region
      %s70 = ssub.s32 1024, 1024
      %71 = vsyncadd [#allocation10], %s70
      %s72 = sshll.u32 [#allocation11], 4
      %s73 = int_to_ptr.vmem [resolvable:$true] %s72
      %78 = dma.hbm_to_vmem [thread:$0]  %s5, 1024, %s73, [#allocation10], 128, 128, 8
    $region25: #{kan_forward.1} parent=1 // pred_fallthru
      _
    // Predicated region
    $region26: #{kan_forward.1} parent=1 // pred_check
      _
    $region27: #{kan_forward.1} parent=1 // pred_check_branch
      %80 = sbr.rel (0) target = $region29
    $region28: #{kan_forward.1} parent=1 // pred_region
      %s82 = ssub.s32 9216, 9216
      %83 = vsyncadd [#allocation13], %s82
      %s84 = sshll.u32 [#allocation12], 4
      %s85 = int_to_ptr.vmem [resolvable:$true] %s84
      %90 = dma.hbm_to_vmem [thread:$0]  %s6, 9216, %s85, [#allocation13], 128, 128, 8
    $region29: #{kan_forward.1} parent=1 // pred_fallthru
      _
    // Predicated region
    $region30: #{kan_forward.1} parent=1 // pred_check
      _
    $region31: #{kan_forward.1} parent=1 // pred_check_branch
      %92 = sbr.rel (0) target = $region33
    $region32: #{kan_forward.1} parent=1 // pred_region
      %s94 = ssub.s32 16, 16
      %95 = vsyncadd [#allocation5], %s94
      %s97 = sshll.u32 %s7, 4
      %s98 = int_to_ptr.vmem [resolvable:$true] %s97
      %100 = dma.vmem_to_smem %s98, 16, [#allocation14], [#allocation5]
    $region33: #{kan_forward.1} parent=1 // pred_fallthru
      _
    // Predicated region
    $region34: #{kan_forward.1} parent=1 // pred_check
      _
    $region35: #{kan_forward.1} parent=1 // pred_check_branch
      %102 = sbr.rel (0) target = $region37
    $region36: #{kan_forward.1} parent=1 // pred_region
      %103 = dma.done [#allocation3], 128
    $region37: #{kan_forward.1} parent=1 // pred_fallthru
      _
    // Predicated region
    $region38: #{kan_forward.1} parent=1 // pred_check
      _
    $region39: #{kan_forward.1} parent=1 // pred_check_branch
      %105 = sbr.rel (0) target = $region41
    $region40: #{kan_forward.1} parent=1 // pred_region
      %106 = dma.done [#allocation7], 256
    $region41: #{kan_forward.1} parent=1 // pred_fallthru
      _
    // Predicated region
    $region42: #{kan_forward.1} parent=1 // pred_check
      _
    $region43: #{kan_forward.1} parent=1 // pred_check_branch
      %108 = sbr.rel (0) target = $region45
    $region44: #{kan_forward.1} parent=1 // pred_region
      %109 = dma.done [#allocation7], 1024
    $region45: #{kan_forward.1} parent=1 // pred_fallthru
      _
    // Predicated region
    $region46: #{kan_forward.1} parent=1 // pred_check
      _
    $region47: #{kan_forward.1} parent=1 // pred_check_branch
      %111 = sbr.rel (0) target = $region49
    $region48: #{kan_forward.1} parent=1 // pred_region
      %112 = dma.done [#allocation10], 4608
    $region49: #{kan_forward.1} parent=1 // pred_fallthru
      _
    // Predicated region
    $region50: #{kan_forward.1} parent=1 // pred_check
      _
    $region51: #{kan_forward.1} parent=1 // pred_check_branch
      %114 = sbr.rel (0) target = $region53
    $region52: #{kan_forward.1} parent=1 // pred_region
      %115 = dma.done [#allocation10], 1024
    $region53: #{kan_forward.1} parent=1 // pred_fallthru
      _
    // Predicated region
    $region54: #{kan_forward.1} parent=1 // pred_check
      _
    $region55: #{kan_forward.1} parent=1 // pred_check_branch
      %117 = sbr.rel (0) target = $region57
    $region56: #{kan_forward.1} parent=1 // pred_region
      %118 = dma.done [#allocation13], 9216
    $region57: #{kan_forward.1} parent=1 // pred_fallthru
      _
    // Predicated region
    $region58: #{kan_forward.1} parent=1 // pred_check
      _
    $region59: #{kan_forward.1} parent=1 // pred_check_branch
      %120 = sbr.rel (0) target = $region61
    $region60: #{kan_forward.1} parent=1 // pred_region
      %121 = dma.done [#allocation5], 16
    $region61: #{kan_forward.1} parent=1 // pred_fallthru
      _
    %122 = sfence
    %v123 = vld [vmem:[#allocation2] sm:$0xff]
    %s124 = sld [smem:[#allocation14]]
    %v125 = vld [vmem:[#allocation6] sm:$0xff]
    %v126 = vld [vmem:[#allocation6 + $0x8] sm:$0xf]
    %v127 = vld [vmem:[#allocation8] sm:$0xff]
    %v128 = vld [vmem:[#allocation8 + $0x8] sm:$0xff]
    %v129 = vld [vmem:[#allocation8 + $0x10] sm:$0xff]
    %v130 = vld [vmem:[#allocation8 + $0x18] sm:$0xff]
    %v131 = vld [vmem:[#allocation8 + $0x20] sm:$0xff]
    %v132 = vld [vmem:[#allocation8 + $0x28] sm:$0xff]
    %v133 = vld [vmem:[#allocation8 + $0x30] sm:$0xff]
    %v134 = vld [vmem:[#allocation8 + $0x38] sm:$0xf]
    %v135 = vlaneseq
    %v136 = vshrl.u32 %v135, 7
    %v137 = vsub.s32 0, %v136
    %v138 = vrot.slane %v125, %v137
    %vm139 = vcmp.ge.f32.partialorder %v123, %v138
    %v140 = vlaneseq
    %v141 = vshrl.u32 %v140, 7
    %v142 = vsub.s32 1, %v141
    %v143 = vrot.slane %v125, %v142
    %vm144 = vcmp.lt.f32.partialorder %v123, %v143
    %vm145 = vmand %vm139, %vm144
    %v146 = vsel %vm145, 1, 0
    %v147 = vcvt.s32.f32 %v146
    %vm148 = vcmp.ge.f32.partialorder %v123, %v143
    %v149 = vlaneseq
    %v150 = vshrl.u32 %v149, 7
    %v151 = vsub.s32 2, %v150
    %v152 = vrot.slane %v125, %v151
    %vm153 = vcmp.lt.f32.partialorder %v123, %v152
    %vm154 = vmand %vm148, %vm153
    %v155 = vsel %vm154, 1, 0
    %v156 = vcvt.s32.f32 %v155
    %vm157 = vcmp.ge.f32.partialorder %v123, %v152
    %v158 = vlaneseq
    %v159 = vshrl.u32 %v158, 7
    %v160 = vsub.s32 3, %v159
    %v161 = vrot.slane %v125, %v160
    %vm162 = vcmp.lt.f32.partialorder %v123, %v161
    %vm163 = vmand %vm157, %vm162
    %v164 = vsel %vm163, 1, 0
    %v165 = vcvt.s32.f32 %v164
    %vm166 = vcmp.ge.f32.partialorder %v123, %v161
    %v167 = vlaneseq
    %v168 = vshrl.u32 %v167, 7
    %v169 = vsub.s32 4, %v168
    %v170 = vrot.slane %v125, %v169
    %vm171 = vcmp.lt.f32.partialorder %v123, %v170
    %vm172 = vmand %vm166, %vm171
    %v173 = vsel %vm172, 1, 0
    %v174 = vcvt.s32.f32 %v173
    %vm175 = vcmp.ge.f32.partialorder %v123, %v170
    %v176 = vlaneseq
    %v177 = vshrl.u32 %v176, 7
    %v178 = vsub.s32 5, %v177
    %v179 = vrot.slane %v125, %v178
    %vm180 = vcmp.lt.f32.partialorder %v123, %v179
    %vm181 = vmand %vm175, %vm180
    %v182 = vsel %vm181, 1, 0
    %v183 = vcvt.s32.f32 %v182
    %vm184 = vcmp.ge.f32.partialorder %v123, %v179
    %v185 = vlaneseq
    %v186 = vshrl.u32 %v185, 7
    %v187 = vsub.s32 6, %v186
    %v188 = vrot.slane %v125, %v187
    %vm189 = vcmp.lt.f32.partialorder %v123, %v188
    %vm190 = vmand %vm184, %vm189
    %v191 = vsel %vm190, 1, 0
    %v192 = vcvt.s32.f32 %v191
    %vm193 = vcmp.ge.f32.partialorder %v123, %v188
    %v194 = vlaneseq
    %v195 = vshrl.u32 %v194, 7
    %v196 = vsub.s32 7, %v195
    %v197 = vrot.slane %v125, %v196
    %vm198 = vcmp.lt.f32.partialorder %v123, %v197
    %vm199 = vmand %vm193, %vm198
    %v200 = vsel %vm199, 1, 0
    %v201 = vcvt.s32.f32 %v200
    %vm202 = vcmp.ge.f32.partialorder %v123, %v197
    %v203 = vlaneseq
    %v204 = vshrl.u32 %v203, 7
    %v205 = vsub.s32 0, %v204
    %v206 = vrot.slane %v126, %v205
    %vm207 = vcmp.lt.f32.partialorder %v123, %v206
    %vm208 = vmand %vm202, %vm207
    %v209 = vsel %vm208, 1, 0
    %v210 = vcvt.s32.f32 %v209
    %vm211 = vcmp.ge.f32.partialorder %v123, %v206
    %v212 = vlaneseq
    %v213 = vshrl.u32 %v212, 7
    %v214 = vsub.s32 1, %v213
    %v215 = vrot.slane %v126, %v214
    %vm216 = vcmp.lt.f32.partialorder %v123, %v215
    %vm217 = vmand %vm211, %vm216
    %v218 = vsel %vm217, 1, 0
    %v219 = vcvt.s32.f32 %v218
    %vm220 = vcmp.ge.f32.partialorder %v123, %v215
    %v221 = vlaneseq
    %v222 = vshrl.u32 %v221, 7
    %v223 = vsub.s32 2, %v222
    %v224 = vrot.slane %v126, %v223
    %vm225 = vcmp.lt.f32.partialorder %v123, %v224
    %vm226 = vmand %vm220, %vm225
    %v227 = vsel %vm226, 1, 0
    %v228 = vcvt.s32.f32 %v227
    %vm229 = vcmp.ge.f32.partialorder %v123, %v224
    %v230 = vlaneseq
    %v231 = vshrl.u32 %v230, 7
    %v232 = vsub.s32 3, %v231
    %v233 = vrot.slane %v126, %v232
    %vm234 = vcmp.lt.f32.partialorder %v123, %v233
    %vm235 = vmand %vm229, %vm234
    %v236 = vsel %vm235, 1, 0
    %v237 = vcvt.s32.f32 %v236
    %v238 = vsub.f32 %v123, %v138
    %v239 = vlaneseq
    %v240 = vshrl.u32 %v239, 7
    %v241 = vsub.s32 0, %v240
    %v242 = vrot.slane %v127, %v241
    %v243 = vmul.f32 %v238, %v242
    %v244 = vmul.f32 %v243, %v147
    %v245 = vsub.f32 %v152, %v123
    %v246 = vlaneseq
    %v247 = vshrl.u32 %v246, 7
    %v248 = vsub.s32 2, %v247
    %v249 = vrot.slane %v128, %v248
    %v250 = vmul.f32 %v245, %v249
    %v251 = vmul.f32 %v250, %v156
    %v252 = vadd.f32 %v244, %v251
    %v253 = vsub.f32 %v123, %v143
    %v254 = vlaneseq
    %v255 = vshrl.u32 %v254, 7
    %v256 = vsub.s32 1, %v255
    %v257 = vrot.slane %v127, %v256
    %v258 = vmul.f32 %v253, %v257
    %v259 = vmul.f32 %v258, %v156
    %v260 = vsub.f32 %v161, %v123
    %v261 = vlaneseq
    %v262 = vshrl.u32 %v261, 7
    %v263 = vsub.s32 3, %v262
    %v264 = vrot.slane %v128, %v263
    %v265 = vmul.f32 %v260, %v264
    %v266 = vmul.f32 %v265, %v165
    %v267 = vadd.f32 %v259, %v266
    %v268 = vsub.f32 %v123, %v152
    %v269 = vlaneseq
    %v270 = vshrl.u32 %v269, 7
    %v271 = vsub.s32 2, %v270
    %v272 = vrot.slane %v127, %v271
    %v273 = vmul.f32 %v268, %v272
    %v274 = vmul.f32 %v273, %v165
    %v275 = vsub.f32 %v170, %v123
    %v276 = vlaneseq
    %v277 = vshrl.u32 %v276, 7
    %v278 = vsub.s32 4, %v277
    %v279 = vrot.slane %v128, %v278
    %v280 = vmul.f32 %v275, %v279
    %v281 = vmul.f32 %v280, %v174
    %v282 = vadd.f32 %v274, %v281
    %v283 = vsub.f32 %v123, %v161
    %v284 = vlaneseq
    %v285 = vshrl.u32 %v284, 7
    %v286 = vsub.s32 3, %v285
    %v287 = vrot.slane %v127, %v286
    %v288 = vmul.f32 %v283, %v287
    %v289 = vmul.f32 %v288, %v174
    %v290 = vsub.f32 %v179, %v123
    %v291 = vlaneseq
    %v292 = vshrl.u32 %v291, 7
    %v293 = vsub.s32 5, %v292
    %v294 = vrot.slane %v128, %v293
    %v295 = vmul.f32 %v290, %v294
    %v296 = vmul.f32 %v295, %v183
    %v297 = vadd.f32 %v289, %v296
    %v298 = vsub.f32 %v123, %v170
    %v299 = vlaneseq
    %v300 = vshrl.u32 %v299, 7
    %v301 = vsub.s32 4, %v300
    %v302 = vrot.slane %v127, %v301
    %v303 = vmul.f32 %v298, %v302
    %v304 = vmul.f32 %v303, %v183
    %v305 = vsub.f32 %v188, %v123
    %v306 = vlaneseq
    %v307 = vshrl.u32 %v306, 7
    %v308 = vsub.s32 6, %v307
    %v309 = vrot.slane %v128, %v308
    %v310 = vmul.f32 %v305, %v309
    %v311 = vmul.f32 %v310, %v192
    %v312 = vadd.f32 %v304, %v311
    %v313 = vsub.f32 %v123, %v179
    %v314 = vlaneseq
    %v315 = vshrl.u32 %v314, 7
    %v316 = vsub.s32 5, %v315
    %v317 = vrot.slane %v127, %v316
    %v318 = vmul.f32 %v313, %v317
    %v319 = vmul.f32 %v318, %v192
    %v320 = vsub.f32 %v197, %v123
    %v321 = vlaneseq
    %v322 = vshrl.u32 %v321, 7
    %v323 = vsub.s32 7, %v322
    %v324 = vrot.slane %v128, %v323
    %v325 = vmul.f32 %v320, %v324
    %v326 = vmul.f32 %v325, %v201
    %v327 = vadd.f32 %v319, %v326
    %v328 = vsub.f32 %v123, %v188
    %v329 = vlaneseq
    %v330 = vshrl.u32 %v329, 7
    %v331 = vsub.s32 6, %v330
    %v332 = vrot.slane %v127, %v331
    %v333 = vmul.f32 %v328, %v332
    %v334 = vmul.f32 %v333, %v201
    %v335 = vsub.f32 %v206, %v123
    %v336 = vlaneseq
    %v337 = vshrl.u32 %v336, 7
    %v338 = vsub.s32 0, %v337
    %v339 = vrot.slane %v129, %v338
    %v340 = vmul.f32 %v335, %v339
    %v341 = vmul.f32 %v340, %v210
    %v342 = vadd.f32 %v334, %v341
    %v343 = vsub.f32 %v123, %v197
    %v344 = vlaneseq
    %v345 = vshrl.u32 %v344, 7
    %v346 = vsub.s32 7, %v345
    %v347 = vrot.slane %v127, %v346
    %v348 = vmul.f32 %v343, %v347
    %v349 = vmul.f32 %v348, %v210
    %v350 = vsub.f32 %v215, %v123
    %v351 = vlaneseq
    %v352 = vshrl.u32 %v351, 7
    %v353 = vsub.s32 1, %v352
    %v354 = vrot.slane %v129, %v353
    %v355 = vmul.f32 %v350, %v354
    %v356 = vmul.f32 %v355, %v219
    %v357 = vadd.f32 %v349, %v356
    %v358 = vsub.f32 %v123, %v206
    %v359 = vlaneseq
    %v360 = vshrl.u32 %v359, 7
    %v361 = vsub.s32 0, %v360
    %v362 = vrot.slane %v128, %v361
    %v363 = vmul.f32 %v358, %v362
    %v364 = vmul.f32 %v363, %v219
    %v365 = vsub.f32 %v224, %v123
    %v366 = vlaneseq
    %v367 = vshrl.u32 %v366, 7
    %v368 = vsub.s32 2, %v367
    %v369 = vrot.slane %v129, %v368
    %v370 = vmul.f32 %v365, %v369
    %v371 = vmul.f32 %v370, %v228
    %v372 = vadd.f32 %v364, %v371
    %v373 = vsub.f32 %v123, %v215
    %v374 = vlaneseq
    %v375 = vshrl.u32 %v374, 7
    %v376 = vsub.s32 1, %v375
    %v377 = vrot.slane %v128, %v376
    %v378 = vmul.f32 %v373, %v377
    %v379 = vmul.f32 %v378, %v228
    %v380 = vsub.f32 %v233, %v123
    %v381 = vlaneseq
    %v382 = vshrl.u32 %v381, 7
    %v383 = vsub.s32 3, %v382
    %v384 = vrot.slane %v129, %v383
    %v385 = vmul.f32 %v380, %v384
    %v386 = vmul.f32 %v385, %v237
    %v387 = vadd.f32 %v379, %v386
    %v388 = vlaneseq
    %v389 = vshrl.u32 %v388, 7
    %v390 = vsub.s32 4, %v389
    %v391 = vrot.slane %v129, %v390
    %v392 = vmul.f32 %v238, %v391
    %v393 = vmul.f32 %v392, %v252
    %v394 = vlaneseq
    %v395 = vshrl.u32 %v394, 7
    %v396 = vsub.s32 6, %v395
    %v397 = vrot.slane %v130, %v396
    %v398 = vmul.f32 %v260, %v397
    %v399 = vmul.f32 %v398, %v267
    %v400 = vadd.f32 %v393, %v399
    %v401 = vlaneseq
    %v402 = vshrl.u32 %v401, 7
    %v403 = vsub.s32 5, %v402
    %v404 = vrot.slane %v129, %v403
    %v405 = vmul.f32 %v253, %v404
    %v406 = vmul.f32 %v405, %v267
    %v407 = vlaneseq
    %v408 = vshrl.u32 %v407, 7
    %v409 = vsub.s32 7, %v408
    %v410 = vrot.slane %v130, %v409
    %v411 = vmul.f32 %v275, %v410
    %v412 = vmul.f32 %v411, %v282
    %v413 = vadd.f32 %v406, %v412
    %v414 = vlaneseq
    %v415 = vshrl.u32 %v414, 7
    %v416 = vsub.s32 6, %v415
    %v417 = vrot.slane %v129, %v416
    %v418 = vmul.f32 %v268, %v417
    %v419 = vmul.f32 %v418, %v282
    %v420 = vlaneseq
    %v421 = vshrl.u32 %v420, 7
    %v422 = vsub.s32 0, %v421
    %v423 = vrot.slane %v131, %v422
    %v424 = vmul.f32 %v290, %v423
    %v425 = vmul.f32 %v424, %v297
    %v426 = vadd.f32 %v419, %v425
    %v427 = vlaneseq
    %v428 = vshrl.u32 %v427, 7
    %v429 = vsub.s32 7, %v428
    %v430 = vrot.slane %v129, %v429
    %v431 = vmul.f32 %v283, %v430
    %v432 = vmul.f32 %v431, %v297
    %v433 = vlaneseq
    %v434 = vshrl.u32 %v433, 7
    %v435 = vsub.s32 1, %v434
    %v436 = vrot.slane %v131, %v435
    %v437 = vmul.f32 %v305, %v436
    %v438 = vmul.f32 %v437, %v312
    %v439 = vadd.f32 %v432, %v438
    %v440 = vlaneseq
    %v441 = vshrl.u32 %v440, 7
    %v442 = vsub.s32 0, %v441
    %v443 = vrot.slane %v130, %v442
    %v444 = vmul.f32 %v298, %v443
    %v445 = vmul.f32 %v444, %v312
    %v446 = vlaneseq
    %v447 = vshrl.u32 %v446, 7
    %v448 = vsub.s32 2, %v447
    %v449 = vrot.slane %v131, %v448
    %v450 = vmul.f32 %v320, %v449
    %v451 = vmul.f32 %v450, %v327
    %v452 = vadd.f32 %v445, %v451
    %v453 = vlaneseq
    %v454 = vshrl.u32 %v453, 7
    %v455 = vsub.s32 1, %v454
    %v456 = vrot.slane %v130, %v455
    %v457 = vmul.f32 %v313, %v456
    %v458 = vmul.f32 %v457, %v327
    %v459 = vlaneseq
    %v460 = vshrl.u32 %v459, 7
    %v461 = vsub.s32 3, %v460
    %v462 = vrot.slane %v131, %v461
    %v463 = vmul.f32 %v335, %v462
    %v464 = vmul.f32 %v463, %v342
    %v465 = vadd.f32 %v458, %v464
    %v466 = vlaneseq
    %v467 = vshrl.u32 %v466, 7
    %v468 = vsub.s32 2, %v467
    %v469 = vrot.slane %v130, %v468
    %v470 = vmul.f32 %v328, %v469
    %v471 = vmul.f32 %v470, %v342
    %v472 = vlaneseq
    %v473 = vshrl.u32 %v472, 7
    %v474 = vsub.s32 4, %v473
    %v475 = vrot.slane %v131, %v474
    %v476 = vmul.f32 %v350, %v475
    %v477 = vmul.f32 %v476, %v357
    %v478 = vadd.f32 %v471, %v477
    %v479 = vlaneseq
    %v480 = vshrl.u32 %v479, 7
    %v481 = vsub.s32 3, %v480
    %v482 = vrot.slane %v130, %v481
    %v483 = vmul.f32 %v343, %v482
    %v484 = vmul.f32 %v483, %v357
    %v485 = vlaneseq
    %v486 = vshrl.u32 %v485, 7
    %v487 = vsub.s32 5, %v486
    %v488 = vrot.slane %v131, %v487
    %v489 = vmul.f32 %v365, %v488
    %v490 = vmul.f32 %v489, %v372
    %v491 = vadd.f32 %v484, %v490
    %v492 = vlaneseq
    %v493 = vshrl.u32 %v492, 7
    %v494 = vsub.s32 4, %v493
    %v495 = vrot.slane %v130, %v494
    %v496 = vmul.f32 %v358, %v495
    %v497 = vmul.f32 %v496, %v372
    %v498 = vlaneseq
    %v499 = vshrl.u32 %v498, 7
    %v500 = vsub.s32 6, %v499
    %v501 = vrot.slane %v131, %v500
    %v502 = vmul.f32 %v380, %v501
    %v503 = vmul.f32 %v502, %v387
    %v504 = vadd.f32 %v497, %v503
    %v505 = vlaneseq
    %v506 = vshrl.u32 %v505, 7
    %v507 = vsub.s32 0, %v506
    %v508 = vrot.slane %v132, %v507
    %v509 = vmul.f32 %v238, %v508
    %v510 = vmul.f32 %v509, %v400
    %v511 = vlaneseq
    %v512 = vshrl.u32 %v511, 7
    %v513 = vsub.s32 2, %v512
    %v514 = vrot.slane %v133, %v513
    %v515 = vmul.f32 %v275, %v514
    %v516 = vmul.f32 %v515, %v413
    %v517 = vadd.f32 %v510, %v516
    %v518 = vlaneseq
    %v519 = vshrl.u32 %v518, 7
    %v520 = vsub.s32 1, %v519
    %v521 = vrot.slane %v132, %v520
    %v522 = vmul.f32 %v253, %v521
    %v523 = vmul.f32 %v522, %v413
    %v524 = vlaneseq
    %v525 = vshrl.u32 %v524, 7
    %v526 = vsub.s32 3, %v525
    %v527 = vrot.slane %v133, %v526
    %v528 = vmul.f32 %v290, %v527
    %v529 = vmul.f32 %v528, %v426
    %v530 = vadd.f32 %v523, %v529
    %v531 = vlaneseq
    %v532 = vshrl.u32 %v531, 7
    %v533 = vsub.s32 2, %v532
    %v534 = vrot.slane %v132, %v533
    %v535 = vmul.f32 %v268, %v534
    %v536 = vmul.f32 %v535, %v426
    %v537 = vlaneseq
    %v538 = vshrl.u32 %v537, 7
    %v539 = vsub.s32 4, %v538
    %v540 = vrot.slane %v133, %v539
    %v541 = vmul.f32 %v305, %v540
    %v542 = vmul.f32 %v541, %v439
    %v543 = vadd.f32 %v536, %v542
    %v544 = vlaneseq
    %v545 = vshrl.u32 %v544, 7
    %v546 = vsub.s32 3, %v545
    %v547 = vrot.slane %v132, %v546
    %v548 = vmul.f32 %v283, %v547
    %v549 = vmul.f32 %v548, %v439
    %v550 = vlaneseq
    %v551 = vshrl.u32 %v550, 7
    %v552 = vsub.s32 5, %v551
    %v553 = vrot.slane %v133, %v552
    %v554 = vmul.f32 %v320, %v553
    %v555 = vmul.f32 %v554, %v452
    %v556 = vadd.f32 %v549, %v555
    %v557 = vlaneseq
    %v558 = vshrl.u32 %v557, 7
    %v559 = vsub.s32 4, %v558
    %v560 = vrot.slane %v132, %v559
    %v561 = vmul.f32 %v298, %v560
    %v562 = vmul.f32 %v561, %v452
    %v563 = vlaneseq
    %v564 = vshrl.u32 %v563, 7
    %v565 = vsub.s32 6, %v564
    %v566 = vrot.slane %v133, %v565
    %v567 = vmul.f32 %v335, %v566
    %v568 = vmul.f32 %v567, %v465
    %v569 = vadd.f32 %v562, %v568
    %v570 = vlaneseq
    %v571 = vshrl.u32 %v570, 7
    %v572 = vsub.s32 5, %v571
    %v573 = vrot.slane %v132, %v572
    %v574 = vmul.f32 %v313, %v573
    %v575 = vmul.f32 %v574, %v465
    %v576 = vlaneseq
    %v577 = vshrl.u32 %v576, 7
    %v578 = vsub.s32 7, %v577
    %v579 = vrot.slane %v133, %v578
    %v580 = vmul.f32 %v350, %v579
    %v581 = vmul.f32 %v580, %v478
    %v582 = vadd.f32 %v575, %v581
    %v583 = vlaneseq
    %v584 = vshrl.u32 %v583, 7
    %v585 = vsub.s32 6, %v584
    %v586 = vrot.slane %v132, %v585
    %v587 = vmul.f32 %v328, %v586
    %v588 = vmul.f32 %v587, %v478
    %v589 = vlaneseq
    %v590 = vshrl.u32 %v589, 7
    %v591 = vsub.s32 0, %v590
    %v592 = vrot.slane %v134, %v591
    %v593 = vmul.f32 %v365, %v592
    %v594 = vmul.f32 %v593, %v491
    %v595 = vadd.f32 %v588, %v594
    %v596 = vlaneseq
    %v597 = vshrl.u32 %v596, 7
    %v598 = vsub.s32 7, %v597
    %v599 = vrot.slane %v132, %v598
    %v600 = vmul.f32 %v343, %v599
    %v601 = vmul.f32 %v600, %v491
    %v602 = vlaneseq
    %v603 = vshrl.u32 %v602, 7
    %v604 = vsub.s32 1, %v603
    %v605 = vrot.slane %v134, %v604
    %v606 = vmul.f32 %v380, %v605
    %v607 = vmul.f32 %v606, %v504
    %v608 = vadd.f32 %v601, %v607
    %v609 = vmul.f32 %v123, 0.5
    %v610 = vmul.f32 %v123, 0.70710677
    %v611 = vand.u32 2147483647, %v610
    %v612 = vmul.f32 %v611, 0.3275911
    %v613 = vadd.f32 %v612, 1.0
    %v614 = vrcp.pop %v613
    %v615 = vmul.f32 1.0, %v614
    %v616 = vmul.f32 %v615, 1.0614054
    %v617 = vadd.f32 %v616, -1.4531521
    %v618 = vmul.f32 %v617, %v615
    %v619 = vadd.f32 %v618, 1.4214138
    %v620 = vmul.f32 %v619, %v615
    %v621 = vadd.f32 %v620, -0.28449672
    %v622 = vmul.f32 %v621, %v615
    %v623 = vadd.f32 %v622, 0.2548296
    %v624 = vmul.f32 %v623, %v615
    %v625 = vmul.f32 %v611, %v611
    %v626 = vsub.f32 0.0, %v625
    %v627 = vmul.f32 %v626, 1.442695
    %v628 = vpow.pop %v627
    %v629 = vmul.f32 %v624, %v628
    %v630 = vsub.f32 1.0, %v629
    %vm631 = vcmp.ge.f32.partialorder %v610, 0.0
    %v632 = vsub.f32 0.0, %v630
    %v633 = vsel %vm631, %v630, %v632
    %v634 = vadd.f32 %v633, 1.0
    %v635 = vmul.f32 %v609, %v634
    %637 = vrot.lane.b32.xlu0 %v530, 32
    %v638 = vpop.permute.xlu0 %637
    %641 = vrot.lane.b32.xlu0 %v543, 64
    %v642 = vpop.permute.xlu0 %641
    %645 = vrot.lane.b32.xlu0 %v556, 96
    %v646 = vpop.permute.xlu0 %645
    %649 = vrot.lane.b32.xlu0 %v582, 32
    %v650 = vpop.permute.xlu0 %649
    %653 = vrot.lane.b32.xlu0 %v595, 64
    %v654 = vpop.permute.xlu0 %653
    %657 = vrot.lane.b32.xlu0 %v608, 96
    %v658 = vpop.permute.xlu0 %657
    %vm660 = vcmask 261120
    %v661 = vsel %vm660, %v517, %v638
    %vm662 = vcmask 523264
    %v663 = vsel %vm662, %v661, %v642
    %vm664 = vcmask 785408
    %v665 = vsel %vm664, %v663, %v646
    %v666 = vsel %vm660, %v569, %v650
    %v667 = vsel %vm662, %v666, %v654
    %v668 = vsel %vm664, %v667, %v658
    %v669 = vld [vmem:[#allocation9] sm:$0xff]
    %v670 = vld [vmem:[#allocation9 + $0x8] sm:$0xff]
    %v671 = vld [vmem:[#allocation9 + $0x10] sm:$0xff]
    %v672 = vld [vmem:[#allocation9 + $0x18] sm:$0xff]
    %v673 = vld [vmem:[#allocation9 + $0x20] sm:$0xff]
    %v674 = vld [vmem:[#allocation9 + $0x28] sm:$0xff]
    %v675 = vld [vmem:[#allocation9 + $0x30] sm:$0xff]
    %v676 = vld [vmem:[#allocation9 + $0x38] sm:$0xff]
    %v677 = vld [vmem:[#allocation9 + $0x40] sm:$0xff]
    %v678 = vld [vmem:[#allocation9 + $0x48] sm:$0xff]
    %v679 = vld [vmem:[#allocation9 + $0x50] sm:$0xff]
    %v680 = vld [vmem:[#allocation9 + $0x58] sm:$0xff]
    %v681 = vld [vmem:[#allocation9 + $0x60] sm:$0xff]
    %v682 = vld [vmem:[#allocation9 + $0x68] sm:$0xff]
    %v683 = vld [vmem:[#allocation9 + $0x70] sm:$0xff]
    %v684 = vld [vmem:[#allocation9 + $0x78] sm:$0xff]
    %v685 = vld [vmem:[#allocation9 + $0x80] sm:$0xff]
    %v686 = vld [vmem:[#allocation9 + $0x88] sm:$0xff]
    %v687 = vld [vmem:[#allocation9 + $0x90] sm:$0xff]
    %v688 = vld [vmem:[#allocation9 + $0x98] sm:$0xff]
    %v689 = vld [vmem:[#allocation9 + $0xa0] sm:$0xff]
    %v690 = vld [vmem:[#allocation9 + $0xa8] sm:$0xff]
    %v691 = vld [vmem:[#allocation9 + $0xb0] sm:$0xff]
    %v692 = vld [vmem:[#allocation9 + $0xb8] sm:$0xff]
    %v693 = vld [vmem:[#allocation9 + $0xc0] sm:$0xff]
    %v694 = vld [vmem:[#allocation9 + $0xc8] sm:$0xff]
    %v695 = vld [vmem:[#allocation9 + $0xd0] sm:$0xff]
    %v696 = vld [vmem:[#allocation9 + $0xd8] sm:$0xff]
    %v697 = vld [vmem:[#allocation9 + $0xe0] sm:$0xff]
    %v698 = vld [vmem:[#allocation9 + $0xe8] sm:$0xff]
    %v699 = vld [vmem:[#allocation9 + $0xf0] sm:$0xff]
    %v700 = vld [vmem:[#allocation9 + $0xf8] sm:$0xff]
    %v701 = vld [vmem:[#allocation9 + $0x100] sm:$0xff]
    %v702 = vld [vmem:[#allocation9 + $0x108] sm:$0xff]
    %v703 = vld [vmem:[#allocation9 + $0x110] sm:$0xff]
    %v704 = vld [vmem:[#allocation9 + $0x118] sm:$0xff]
    %v706 = vsel %vm660, %v635, 0
    %708 = vmatprep.subr.mxu0 0.0
    %709 = vmatpush1.msra.mxu0 %v669
    %710 = vmatprep.subr.mxu0 0.0
    %711 = vmatpush1.msra.mxu0 %v670
    %712 = vmatprep.subr.mxu0 0.0
    %713 = vmatpush1.msra.mxu0 %v671
    %714 = vmatprep.subr.mxu0 0.0
    %715 = vmatpush1.msra.mxu0 %v672
    %716 = vmatprep.subr.mxu0 0.0
    %717 = vmatpush1.msra.mxu0 %v673
    %718 = vmatprep.subr.mxu0 0.0
    %719 = vmatpush1.msra.mxu0 %v674
    %720 = vmatprep.subr.mxu0 0.0
    %721 = vmatpush1.msra.mxu0 %v675
    %722 = vmatprep.subr.mxu0 0.0
    %723 = vmatpush1.msra.mxu0 %v676
    %724 = vmatprep.subr.mxu0 0.0
    %725 = vmatpush1.msra.mxu0 %v677
    %726 = vmatprep.subr.mxu0 0.0
    %727 = vmatpush1.msra.mxu0 %v678
    %728 = vmatprep.subr.mxu0 0.0
    %729 = vmatpush1.msra.mxu0 %v679
    %730 = vmatprep.subr.mxu0 0.0
    %731 = vmatpush1.msra.mxu0 %v680
    %732 = vmatprep.subr.mxu0 0.0
    %733 = vmatpush1.msra.mxu0 %v681
    %734 = vmatprep.subr.mxu0 0.0
    %735 = vmatpush1.msra.mxu0 %v682
    %736 = vmatprep.subr.mxu0 0.0
    %737 = vmatpush1.msra.mxu0 %v683
    %738 = vmatprep.subr.mxu0 0.0
    %739 = vmatpush1.msra.mxu0 %v684
    %740 = vmatprep.subr.mxu0 0.0
    %741 = vmatpush1.msra.mxu0 %v685
    %742 = vmatprep.subr.mxu0 0.0
    %743 = vmatpush1.msra.mxu0 %v686
    %744 = vmatprep.subr.mxu0 0.0
    %745 = vmatpush1.msra.mxu0 %v687
    %746 = vmatprep.subr.mxu0 0.0
    %747 = vmatpush1.msra.mxu0 %v688
    %748 = vmatprep.subr.mxu0 0.0
    %749 = vmatpush1.msra.mxu0 %v689
    %750 = vmatprep.subr.mxu0 0.0
    %751 = vmatpush1.msra.mxu0 %v690
    %752 = vmatprep.subr.mxu0 0.0
    %753 = vmatpush1.msra.mxu0 %v691
    %754 = vmatprep.subr.mxu0 0.0
    %755 = vmatpush1.msra.mxu0 %v692
    %756 = vmatprep.subr.mxu0 0.0
    %757 = vmatpush1.msra.mxu0 %v693
    %758 = vmatprep.subr.mxu0 0.0
    %759 = vmatpush1.msra.mxu0 %v694
    %760 = vmatprep.subr.mxu0 0.0
    %761 = vmatpush1.msra.mxu0 %v695
    %762 = vmatprep.subr.mxu0 0.0
    %763 = vmatpush1.msra.mxu0 %v696
    %764 = vmatprep.subr.mxu0 0.0
    %765 = vmatpush1.msra.mxu0 %v697
    %766 = vmatprep.subr.mxu0 0.0
    %767 = vmatpush1.msra.mxu0 %v698
    %768 = vmatprep.subr.mxu0 0.0
    %769 = vmatpush1.msra.mxu0 %v699
    %770 = vmatprep.subr.mxu0 0.0
    %771 = vmatpush1.msra.mxu0 %v700
    %772 = vmatprep.mubr.f32.mxu0 %v668
    %773 = vmatmul.mubr.f32.gmra.mrb[0].mxu0 %v665
    %v774 = vpop.f32.mrb[0].mxu0
    %v775 = vadd.f32 0.0, %v774
    %v776 = vpop.f32.mrb[0].mxu0
    %777 = vdwg.mxu0
    %778 = vmatprep.subr.mxu0 0.0
    %779 = vmatpush1.msra.mxu0 %v701
    %780 = vmatprep.subr.mxu0 0.0
    %781 = vmatpush1.msra.mxu0 %v702
    %782 = vmatprep.subr.mxu0 0.0
    %783 = vmatpush1.msra.mxu0 %v703
    %784 = vmatprep.subr.mxu0 0.0
    %785 = vmatpush1.msra.mxu0 %v704
    %786 = vmatprep.subr.mxu0 0.0
    %787 = vmatpush1.msra.mxu0 0.0
    %788 = vmatprep.subr.mxu0 0.0
    %789 = vmatpush1.msra.mxu0 0.0
    %790 = vmatprep.subr.mxu0 0.0
    %791 = vmatpush1.msra.mxu0 0.0
    %792 = vmatprep.subr.mxu0 0.0
    %793 = vmatpush1.msra.mxu0 0.0
    %794 = vmatprep.subr.mxu0 0.0
    %795 = vmatpush1.msra.mxu0 0.0
    %796 = vmatprep.subr.mxu0 0.0
    %797 = vmatpush1.msra.mxu0 0.0
    %798 = vmatprep.subr.mxu0 0.0
    %799 = vmatpush1.msra.mxu0 0.0
    %800 = vmatprep.subr.mxu0 0.0
    %801 = vmatpush1.msra.mxu0 0.0
    %802 = vmatprep.subr.mxu0 0.0
    %803 = vmatpush1.msra.mxu0 0.0
    %804 = vmatprep.subr.mxu0 0.0
    %805 = vmatpush1.msra.mxu0 0.0
    %806 = vmatprep.subr.mxu0 0.0
    %807 = vmatpush1.msra.mxu0 0.0
    %808 = vmatprep.subr.mxu0 0.0
    %809 = vmatpush1.msra.mxu0 0.0
    %810 = vmatprep.subr.mxu0 0.0
    %811 = vmatpush1.msra.mxu0 0.0
    %812 = vmatprep.subr.mxu0 0.0
    %813 = vmatpush1.msra.mxu0 0.0
    %814 = vmatprep.subr.mxu0 0.0
    %815 = vmatpush1.msra.mxu0 0.0
    %816 = vmatprep.subr.mxu0 0.0
    %817 = vmatpush1.msra.mxu0 0.0
    %818 = vmatprep.subr.mxu0 0.0
    %819 = vmatpush1.msra.mxu0 0.0
    %820 = vmatprep.subr.mxu0 0.0
    %821 = vmatpush1.msra.mxu0 0.0
    %822 = vmatprep.subr.mxu0 0.0
    %823 = vmatpush1.msra.mxu0 0.0
    %824 = vmatprep.subr.mxu0 0.0
    %825 = vmatpush1.msra.mxu0 0.0
    %826 = vmatprep.subr.mxu0 0.0
    %827 = vmatpush1.msra.mxu0 0.0
    %828 = vmatprep.subr.mxu0 0.0
    %829 = vmatpush1.msra.mxu0 0.0
    %830 = vmatprep.subr.mxu0 0.0
    %831 = vmatpush1.msra.mxu0 0.0
    %832 = vmatprep.subr.mxu0 0.0
    %833 = vmatpush1.msra.mxu0 0.0
    %834 = vmatprep.subr.mxu0 0.0
    %835 = vmatpush1.msra.mxu0 0.0
    %836 = vmatprep.subr.mxu0 0.0
    %837 = vmatpush1.msra.mxu0 0.0
    %838 = vmatprep.subr.mxu0 0.0
    %839 = vmatpush1.msra.mxu0 0.0
    %840 = vmatprep.subr.mxu0 0.0
    %841 = vmatpush1.msra.mxu0 0.0
    %842 = vmatprep.mubr.f32.mxu0 0.0
    %843 = vmatmul.mubr.f32.gmra.mrb[0].mxu0 %v706
    %v844 = vpop.f32.mrb[0].mxu0
    %v845 = vadd.f32 %v775, %v844
    %v846 = vpop.f32.mrb[0].mxu0
    %847 = vdwg.mxu0
    %v848 = vsel %vm662, %v845, 0.0
    %849 = vadd.xlane.f32.xlu0 %v848
    %v850 = vpop.xlane.xlu0 %849
    %v851 = vrcp.pop 64.0
    %v852 = vmul.f32 %v850, %v851
    %v853 = vsub.f32 %v845, %v852
    %v854 = vmul.f32 %v853, %v853
    %v855 = vsel %vm662, %v854, 0.0
    %856 = vadd.xlane.f32.xlu0 %v855
    %v857 = vpop.xlane.xlu0 %856
    %v858 = vmul.f32 %v857, %v851
    %v859 = vadd.f32 %v858, 1e-05
    %v860 = vrsqrt.pop %v859
    %v861 = vmul.f32 %v853, %v860
    %vm862 = vcmp.ge.f32.partialorder %v861, 0.0
    %v863 = vstv %s124
    %v864 = vmul.f32 %v863, %v861
    %v865 = vsel %vm862, %v861, %v864
    %s866 = sld [smem:[#allocation14 + $0x1]]
    %v867 = vld [vmem:[%s4] sm:$0xff]
    %v868 = vld [vmem:[%s4 + $0x8] sm:$0xf]
    %v869 = vld [vmem:[#allocation11] sm:$0xff]
    %v870 = vld [vmem:[#allocation11 + $0x8] sm:$0xff]
    %v871 = vld [vmem:[#allocation11 + $0x10] sm:$0xff]
    %v872 = vld [vmem:[#allocation11 + $0x18] sm:$0xff]
    %v873 = vld [vmem:[#allocation11 + $0x20] sm:$0xff]
    %v874 = vld [vmem:[#allocation11 + $0x28] sm:$0xff]
    %v875 = vld [vmem:[#allocation11 + $0x30] sm:$0xff]
    %v876 = vld [vmem:[#allocation11 + $0x38] sm:$0xf]
    %v877 = vlaneseq
    %v878 = vshrl.u32 %v877, 7
    %v879 = vsub.s32 0, %v878
    %v880 = vrot.slane %v867, %v879
    %vm881 = vcmp.ge.f32.partialorder %v865, %v880
    %v882 = vlaneseq
    %v883 = vshrl.u32 %v882, 7
    %v884 = vsub.s32 1, %v883
    %v885 = vrot.slane %v867, %v884
    %vm886 = vcmp.lt.f32.partialorder %v865, %v885
    %vm887 = vmand %vm881, %vm886
    %v888 = vsel %vm887, 1, 0
    %v889 = vcvt.s32.f32 %v888
    %vm890 = vcmp.ge.f32.partialorder %v865, %v885
    %v891 = vlaneseq
    %v892 = vshrl.u32 %v891, 7
    %v893 = vsub.s32 2, %v892
    %v894 = vrot.slane %v867, %v893
    %vm895 = vcmp.lt.f32.partialorder %v865, %v894
    %vm896 = vmand %vm890, %vm895
    %v897 = vsel %vm896, 1, 0
    %v898 = vcvt.s32.f32 %v897
    %vm899 = vcmp.ge.f32.partialorder %v865, %v894
    %v900 = vlaneseq
    %v901 = vshrl.u32 %v900, 7
    %v902 = vsub.s32 3, %v901
    %v903 = vrot.slane %v867, %v902
    %vm904 = vcmp.lt.f32.partialorder %v865, %v903
    %vm905 = vmand %vm899, %vm904
    %v906 = vsel %vm905, 1, 0
    %v907 = vcvt.s32.f32 %v906
    %vm908 = vcmp.ge.f32.partialorder %v865, %v903
    %v909 = vlaneseq
    %v910 = vshrl.u32 %v909, 7
    %v911 = vsub.s32 4, %v910
    %v912 = vrot.slane %v867, %v911
    %vm913 = vcmp.lt.f32.partialorder %v865, %v912
    %vm914 = vmand %vm908, %vm913
    %v915 = vsel %vm914, 1, 0
    %v916 = vcvt.s32.f32 %v915
    %vm917 = vcmp.ge.f32.partialorder %v865, %v912
    %v918 = vlaneseq
    %v919 = vshrl.u32 %v918, 7
    %v920 = vsub.s32 5, %v919
    %v921 = vrot.slane %v867, %v920
    %vm922 = vcmp.lt.f32.partialorder %v865, %v921
    %vm923 = vmand %vm917, %vm922
    %v924 = vsel %vm923, 1, 0
    %v925 = vcvt.s32.f32 %v924
    %vm926 = vcmp.ge.f32.partialorder %v865, %v921
    %v927 = vlaneseq
    %v928 = vshrl.u32 %v927, 7
    %v929 = vsub.s32 6, %v928
    %v930 = vrot.slane %v867, %v929
    %vm931 = vcmp.lt.f32.partialorder %v865, %v930
    %vm932 = vmand %vm926, %vm931
    %v933 = vsel %vm932, 1, 0
    %v934 = vcvt.s32.f32 %v933
    %vm935 = vcmp.ge.f32.partialorder %v865, %v930
    %v936 = vlaneseq
    %v937 = vshrl.u32 %v936, 7
    %v938 = vsub.s32 7, %v937
    %v939 = vrot.slane %v867, %v938
    %vm940 = vcmp.lt.f32.partialorder %v865, %v939
    %vm941 = vmand %vm935, %vm940
    %v942 = vsel %vm941, 1, 0
    %v943 = vcvt.s32.f32 %v942
    %vm944 = vcmp.ge.f32.partialorder %v865, %v939
    %v945 = vlaneseq
    %v946 = vshrl.u32 %v945, 7
    %v947 = vsub.s32 0, %v946
    %v948 = vrot.slane %v868, %v947
    %vm949 = vcmp.lt.f32.partialorder %v865, %v948
    %vm950 = vmand %vm944, %vm949
    %v951 = vsel %vm950, 1, 0
    %v952 = vcvt.s32.f32 %v951
    %vm953 = vcmp.ge.f32.partialorder %v865, %v948
    %v954 = vlaneseq
    %v955 = vshrl.u32 %v954, 7
    %v956 = vsub.s32 1, %v955
    %v957 = vrot.slane %v868, %v956
    %vm958 = vcmp.lt.f32.partialorder %v865, %v957
    %vm959 = vmand %vm953, %vm958
    %v960 = vsel %vm959, 1, 0
    %v961 = vcvt.s32.f32 %v960
    %vm962 = vcmp.ge.f32.partialorder %v865, %v957
    %v963 = vlaneseq
    %v964 = vshrl.u32 %v963, 7
    %v965 = vsub.s32 2, %v964
    %v966 = vrot.slane %v868, %v965
    %vm967 = vcmp.lt.f32.partialorder %v865, %v966
    %vm968 = vmand %vm962, %vm967
    %v969 = vsel %vm968, 1, 0
    %v970 = vcvt.s32.f32 %v969
    %vm971 = vcmp.ge.f32.partialorder %v865, %v966
    %v972 = vlaneseq
    %v973 = vshrl.u32 %v972, 7
    %v974 = vsub.s32 3, %v973
    %v975 = vrot.slane %v868, %v974
    %vm976 = vcmp.lt.f32.partialorder %v865, %v975
    %vm977 = vmand %vm971, %vm976
    %v978 = vsel %vm977, 1, 0
    %v979 = vcvt.s32.f32 %v978
    %v980 = vsub.f32 %v865, %v880
    %v981 = vlaneseq
    %v982 = vshrl.u32 %v981, 7
    %v983 = vsub.s32 0, %v982
    %v984 = vrot.slane %v869, %v983
    %v985 = vmul.f32 %v980, %v984
    %v986 = vmul.f32 %v985, %v889
    %v987 = vsub.f32 %v894, %v865
    %v988 = vlaneseq
    %v989 = vshrl.u32 %v988, 7
    %v990 = vsub.s32 2, %v989
    %v991 = vrot.slane %v870, %v990
    %v992 = vmul.f32 %v987, %v991
    %v993 = vmul.f32 %v992, %v898
    %v994 = vadd.f32 %v986, %v993
    %v995 = vsub.f32 %v865, %v885
    %v996 = vlaneseq
    %v997 = vshrl.u32 %v996, 7
    %v998 = vsub.s32 1, %v997
    %v999 = vrot.slane %v869, %v998
    %v1000 = vmul.f32 %v995, %v999
    %v1001 = vmul.f32 %v1000, %v898
    %v1002 = vsub.f32 %v903, %v865
    %v1003 = vlaneseq
    %v1004 = vshrl.u32 %v1003, 7
    %v1005 = vsub.s32 3, %v1004
    %v1006 = vrot.slane %v870, %v1005
    %v1007 = vmul.f32 %v1002, %v1006
    %v1008 = vmul.f32 %v1007, %v907
    %v1009 = vadd.f32 %v1001, %v1008
    %v1010 = vsub.f32 %v865, %v894
    %v1011 = vlaneseq
    %v1012 = vshrl.u32 %v1011, 7
    %v1013 = vsub.s32 2, %v1012
    %v1014 = vrot.slane %v869, %v1013
    %v1015 = vmul.f32 %v1010, %v1014
    %v1016 = vmul.f32 %v1015, %v907
    %v1017 = vsub.f32 %v912, %v865
    %v1018 = vlaneseq
    %v1019 = vshrl.u32 %v1018, 7
    %v1020 = vsub.s32 4, %v1019
    %v1021 = vrot.slane %v870, %v1020
    %v1022 = vmul.f32 %v1017, %v1021
    %v1023 = vmul.f32 %v1022, %v916
    %v1024 = vadd.f32 %v1016, %v1023
    %v1025 = vsub.f32 %v865, %v903
    %v1026 = vlaneseq
    %v1027 = vshrl.u32 %v1026, 7
    %v1028 = vsub.s32 3, %v1027
    %v1029 = vrot.slane %v869, %v1028
    %v1030 = vmul.f32 %v1025, %v1029
    %v1031 = vmul.f32 %v1030, %v916
    %v1032 = vsub.f32 %v921, %v865
    %v1033 = vlaneseq
    %v1034 = vshrl.u32 %v1033, 7
    %v1035 = vsub.s32 5, %v1034
    %v1036 = vrot.slane %v870, %v1035
    %v1037 = vmul.f32 %v1032, %v1036
    %v1038 = vmul.f32 %v1037, %v925
    %v1039 = vadd.f32 %v1031, %v1038
    %v1040 = vsub.f32 %v865, %v912
    %v1041 = vlaneseq
    %v1042 = vshrl.u32 %v1041, 7
    %v1043 = vsub.s32 4, %v1042
    %v1044 = vrot.slane %v869, %v1043
    %v1045 = vmul.f32 %v1040, %v1044
    %v1046 = vmul.f32 %v1045, %v925
    %v1047 = vsub.f32 %v930, %v865
    %v1048 = vlaneseq
    %v1049 = vshrl.u32 %v1048, 7
    %v1050 = vsub.s32 6, %v1049
    %v1051 = vrot.slane %v870, %v1050
    %v1052 = vmul.f32 %v1047, %v1051
    %v1053 = vmul.f32 %v1052, %v934
    %v1054 = vadd.f32 %v1046, %v1053
    %v1055 = vsub.f32 %v865, %v921
    %v1056 = vlaneseq
    %v1057 = vshrl.u32 %v1056, 7
    %v1058 = vsub.s32 5, %v1057
    %v1059 = vrot.slane %v869, %v1058
    %v1060 = vmul.f32 %v1055, %v1059
    %v1061 = vmul.f32 %v1060, %v934
    %v1062 = vsub.f32 %v939, %v865
    %v1063 = vlaneseq
    %v1064 = vshrl.u32 %v1063, 7
    %v1065 = vsub.s32 7, %v1064
    %v1066 = vrot.slane %v870, %v1065
    %v1067 = vmul.f32 %v1062, %v1066
    %v1068 = vmul.f32 %v1067, %v943
    %v1069 = vadd.f32 %v1061, %v1068
    %v1070 = vsub.f32 %v865, %v930
    %v1071 = vlaneseq
    %v1072 = vshrl.u32 %v1071, 7
    %v1073 = vsub.s32 6, %v1072
    %v1074 = vrot.slane %v869, %v1073
    %v1075 = vmul.f32 %v1070, %v1074
    %v1076 = vmul.f32 %v1075, %v943
    %v1077 = vsub.f32 %v948, %v865
    %v1078 = vlaneseq
    %v1079 = vshrl.u32 %v1078, 7
    %v1080 = vsub.s32 0, %v1079
    %v1081 = vrot.slane %v871, %v1080
    %v1082 = vmul.f32 %v1077, %v1081
    %v1083 = vmul.f32 %v1082, %v952
    %v1084 = vadd.f32 %v1076, %v1083
    %v1085 = vsub.f32 %v865, %v939
    %v1086 = vlaneseq
    %v1087 = vshrl.u32 %v1086, 7
    %v1088 = vsub.s32 7, %v1087
    %v1089 = vrot.slane %v869, %v1088
    %v1090 = vmul.f32 %v1085, %v1089
    %v1091 = vmul.f32 %v1090, %v952
    %v1092 = vsub.f32 %v957, %v865
    %v1093 = vlaneseq
    %v1094 = vshrl.u32 %v1093, 7
    %v1095 = vsub.s32 1, %v1094
    %v1096 = vrot.slane %v871, %v1095
    %v1097 = vmul.f32 %v1092, %v1096
    %v1098 = vmul.f32 %v1097, %v961
    %v1099 = vadd.f32 %v1091, %v1098
    %v1100 = vsub.f32 %v865, %v948
    %v1101 = vlaneseq
    %v1102 = vshrl.u32 %v1101, 7
    %v1103 = vsub.s32 0, %v1102
    %v1104 = vrot.slane %v870, %v1103
    %v1105 = vmul.f32 %v1100, %v1104
    %v1106 = vmul.f32 %v1105, %v961
    %v1107 = vsub.f32 %v966, %v865
    %v1108 = vlaneseq
    %v1109 = vshrl.u32 %v1108, 7
    %v1110 = vsub.s32 2, %v1109
    %v1111 = vrot.slane %v871, %v1110
    %v1112 = vmul.f32 %v1107, %v1111
    %v1113 = vmul.f32 %v1112, %v970
    %v1114 = vadd.f32 %v1106, %v1113
    %v1115 = vsub.f32 %v865, %v957
    %v1116 = vlaneseq
    %v1117 = vshrl.u32 %v1116, 7
    %v1118 = vsub.s32 1, %v1117
    %v1119 = vrot.slane %v870, %v1118
    %v1120 = vmul.f32 %v1115, %v1119
    %v1121 = vmul.f32 %v1120, %v970
    %v1122 = vsub.f32 %v975, %v865
    %v1123 = vlaneseq
    %v1124 = vshrl.u32 %v1123, 7
    %v1125 = vsub.s32 3, %v1124
    %v1126 = vrot.slane %v871, %v1125
    %v1127 = vmul.f32 %v1122, %v1126
    %v1128 = vmul.f32 %v1127, %v979
    %v1129 = vadd.f32 %v1121, %v1128
    %v1130 = vlaneseq
    %v1131 = vshrl.u32 %v1130, 7
    %v1132 = vsub.s32 4, %v1131
    %v1133 = vrot.slane %v871, %v1132
    %v1134 = vmul.f32 %v980, %v1133
    %v1135 = vmul.f32 %v1134, %v994
    %v1136 = vlaneseq
    %v1137 = vshrl.u32 %v1136, 7
    %v1138 = vsub.s32 6, %v1137
    %v1139 = vrot.slane %v872, %v1138
    %v1140 = vmul.f32 %v1002, %v1139
    %v1141 = vmul.f32 %v1140, %v1009
    %v1142 = vadd.f32 %v1135, %v1141
    %v1143 = vlaneseq
    %v1144 = vshrl.u32 %v1143, 7
    %v1145 = vsub.s32 5, %v1144
    %v1146 = vrot.slane %v871, %v1145
    %v1147 = vmul.f32 %v995, %v1146
    %v1148 = vmul.f32 %v1147, %v1009
    %v1149 = vlaneseq
    %v1150 = vshrl.u32 %v1149, 7
    %v1151 = vsub.s32 7, %v1150
    %v1152 = vrot.slane %v872, %v1151
    %v1153 = vmul.f32 %v1017, %v1152
    %v1154 = vmul.f32 %v1153, %v1024
    %v1155 = vadd.f32 %v1148, %v1154
    %v1156 = vlaneseq
    %v1157 = vshrl.u32 %v1156, 7
    %v1158 = vsub.s32 6, %v1157
    %v1159 = vrot.slane %v871, %v1158
    %v1160 = vmul.f32 %v1010, %v1159
    %v1161 = vmul.f32 %v1160, %v1024
    %v1162 = vlaneseq
    %v1163 = vshrl.u32 %v1162, 7
    %v1164 = vsub.s32 0, %v1163
    %v1165 = vrot.slane %v873, %v1164
    %v1166 = vmul.f32 %v1032, %v1165
    %v1167 = vmul.f32 %v1166, %v1039
    %v1168 = vadd.f32 %v1161, %v1167
    %v1169 = vlaneseq
    %v1170 = vshrl.u32 %v1169, 7
    %v1171 = vsub.s32 7, %v1170
    %v1172 = vrot.slane %v871, %v1171
    %v1173 = vmul.f32 %v1025, %v1172
    %v1174 = vmul.f32 %v1173, %v1039
    %v1175 = vlaneseq
    %v1176 = vshrl.u32 %v1175, 7
    %v1177 = vsub.s32 1, %v1176
    %v1178 = vrot.slane %v873, %v1177
    %v1179 = vmul.f32 %v1047, %v1178
    %v1180 = vmul.f32 %v1179, %v1054
    %v1181 = vadd.f32 %v1174, %v1180
    %v1182 = vlaneseq
    %v1183 = vshrl.u32 %v1182, 7
    %v1184 = vsub.s32 0, %v1183
    %v1185 = vrot.slane %v872, %v1184
    %v1186 = vmul.f32 %v1040, %v1185
    %v1187 = vmul.f32 %v1186, %v1054
    %v1188 = vlaneseq
    %v1189 = vshrl.u32 %v1188, 7
    %v1190 = vsub.s32 2, %v1189
    %v1191 = vrot.slane %v873, %v1190
    %v1192 = vmul.f32 %v1062, %v1191
    %v1193 = vmul.f32 %v1192, %v1069
    %v1194 = vadd.f32 %v1187, %v1193
    %v1195 = vlaneseq
    %v1196 = vshrl.u32 %v1195, 7
    %v1197 = vsub.s32 1, %v1196
    %v1198 = vrot.slane %v872, %v1197
    %v1199 = vmul.f32 %v1055, %v1198
    %v1200 = vmul.f32 %v1199, %v1069
    %v1201 = vlaneseq
    %v1202 = vshrl.u32 %v1201, 7
    %v1203 = vsub.s32 3, %v1202
    %v1204 = vrot.slane %v873, %v1203
    %v1205 = vmul.f32 %v1077, %v1204
    %v1206 = vmul.f32 %v1205, %v1084
    %v1207 = vadd.f32 %v1200, %v1206
    %v1208 = vlaneseq
    %v1209 = vshrl.u32 %v1208, 7
    %v1210 = vsub.s32 2, %v1209
    %v1211 = vrot.slane %v872, %v1210
    %v1212 = vmul.f32 %v1070, %v1211
    %v1213 = vmul.f32 %v1212, %v1084
    %v1214 = vlaneseq
    %v1215 = vshrl.u32 %v1214, 7
    %v1216 = vsub.s32 4, %v1215
    %v1217 = vrot.slane %v873, %v1216
    %v1218 = vmul.f32 %v1092, %v1217
    %v1219 = vmul.f32 %v1218, %v1099
    %v1220 = vadd.f32 %v1213, %v1219
    %v1221 = vlaneseq
    %v1222 = vshrl.u32 %v1221, 7
    %v1223 = vsub.s32 3, %v1222
    %v1224 = vrot.slane %v872, %v1223
    %v1225 = vmul.f32 %v1085, %v1224
    %v1226 = vmul.f32 %v1225, %v1099
    %v1227 = vlaneseq
    %v1228 = vshrl.u32 %v1227, 7
    %v1229 = vsub.s32 5, %v1228
    %v1230 = vrot.slane %v873, %v1229
    %v1231 = vmul.f32 %v1107, %v1230
    %v1232 = vmul.f32 %v1231, %v1114
    %v1233 = vadd.f32 %v1226, %v1232
    %v1234 = vlaneseq
    %v1235 = vshrl.u32 %v1234, 7
    %v1236 = vsub.s32 4, %v1235
    %v1237 = vrot.slane %v872, %v1236
    %v1238 = vmul.f32 %v1100, %v1237
    %v1239 = vmul.f32 %v1238, %v1114
    %v1240 = vlaneseq
    %v1241 = vshrl.u32 %v1240, 7
    %v1242 = vsub.s32 6, %v1241
    %v1243 = vrot.slane %v873, %v1242
    %v1244 = vmul.f32 %v1122, %v1243
    %v1245 = vmul.f32 %v1244, %v1129
    %v1246 = vadd.f32 %v1239, %v1245
    %v1247 = vlaneseq
    %v1248 = vshrl.u32 %v1247, 7
    %v1249 = vsub.s32 0, %v1248
    %v1250 = vrot.slane %v874, %v1249
    %v1251 = vmul.f32 %v980, %v1250
    %v1252 = vmul.f32 %v1251, %v1142
    %v1253 = vlaneseq
    %v1254 = vshrl.u32 %v1253, 7
    %v1255 = vsub.s32 2, %v1254
    %v1256 = vrot.slane %v875, %v1255
    %v1257 = vmul.f32 %v1017, %v1256
    %v1258 = vmul.f32 %v1257, %v1155
    %v1259 = vadd.f32 %v1252, %v1258
    %v1260 = vlaneseq
    %v1261 = vshrl.u32 %v1260, 7
    %v1262 = vsub.s32 1, %v1261
    %v1263 = vrot.slane %v874, %v1262
    %v1264 = vmul.f32 %v995, %v1263
    %v1265 = vmul.f32 %v1264, %v1155
    %v1266 = vlaneseq
    %v1267 = vshrl.u32 %v1266, 7
    %v1268 = vsub.s32 3, %v1267
    %v1269 = vrot.slane %v875, %v1268
    %v1270 = vmul.f32 %v1032, %v1269
    %v1271 = vmul.f32 %v1270, %v1168
    %v1272 = vadd.f32 %v1265, %v1271
    %v1273 = vlaneseq
    %v1274 = vshrl.u32 %v1273, 7
    %v1275 = vsub.s32 2, %v1274
    %v1276 = vrot.slane %v874, %v1275
    %v1277 = vmul.f32 %v1010, %v1276
    %v1278 = vmul.f32 %v1277, %v1168
    %v1279 = vlaneseq
    %v1280 = vshrl.u32 %v1279, 7
    %v1281 = vsub.s32 4, %v1280
    %v1282 = vrot.slane %v875, %v1281
    %v1283 = vmul.f32 %v1047, %v1282
    %v1284 = vmul.f32 %v1283, %v1181
    %v1285 = vadd.f32 %v1278, %v1284
    %v1286 = vlaneseq
    %v1287 = vshrl.u32 %v1286, 7
    %v1288 = vsub.s32 3, %v1287
    %v1289 = vrot.slane %v874, %v1288
    %v1290 = vmul.f32 %v1025, %v1289
    %v1291 = vmul.f32 %v1290, %v1181
    %v1292 = vlaneseq
    %v1293 = vshrl.u32 %v1292, 7
    %v1294 = vsub.s32 5, %v1293
    %v1295 = vrot.slane %v875, %v1294
    %v1296 = vmul.f32 %v1062, %v1295
    %v1297 = vmul.f32 %v1296, %v1194
    %v1298 = vadd.f32 %v1291, %v1297
    %v1299 = vlaneseq
    %v1300 = vshrl.u32 %v1299, 7
    %v1301 = vsub.s32 4, %v1300
    %v1302 = vrot.slane %v874, %v1301
    %v1303 = vmul.f32 %v1040, %v1302
    %v1304 = vmul.f32 %v1303, %v1194
    %v1305 = vlaneseq
    %v1306 = vshrl.u32 %v1305, 7
    %v1307 = vsub.s32 6, %v1306
    %v1308 = vrot.slane %v875, %v1307
    %v1309 = vmul.f32 %v1077, %v1308
    %v1310 = vmul.f32 %v1309, %v1207
    %v1311 = vadd.f32 %v1304, %v1310
    %v1312 = vlaneseq
    %v1313 = vshrl.u32 %v1312, 7
    %v1314 = vsub.s32 5, %v1313
    %v1315 = vrot.slane %v874, %v1314
    %v1316 = vmul.f32 %v1055, %v1315
    %v1317 = vmul.f32 %v1316, %v1207
    %v1318 = vlaneseq
    %v1319 = vshrl.u32 %v1318, 7
    %v1320 = vsub.s32 7, %v1319
    %v1321 = vrot.slane %v875, %v1320
    %v1322 = vmul.f32 %v1092, %v1321
    %v1323 = vmul.f32 %v1322, %v1220
    %v1324 = vadd.f32 %v1317, %v1323
    %v1325 = vlaneseq
    %v1326 = vshrl.u32 %v1325, 7
    %v1327 = vsub.s32 6, %v1326
    %v1328 = vrot.slane %v874, %v1327
    %v1329 = vmul.f32 %v1070, %v1328
    %v1330 = vmul.f32 %v1329, %v1220
    %v1331 = vlaneseq
    %v1332 = vshrl.u32 %v1331, 7
    %v1333 = vsub.s32 0, %v1332
    %v1334 = vrot.slane %v876, %v1333
    %v1335 = vmul.f32 %v1107, %v1334
    %v1336 = vmul.f32 %v1335, %v1233
    %v1337 = vadd.f32 %v1330, %v1336
    %v1338 = vlaneseq
    %v1339 = vshrl.u32 %v1338, 7
    %v1340 = vsub.s32 7, %v1339
    %v1341 = vrot.slane %v874, %v1340
    %v1342 = vmul.f32 %v1085, %v1341
    %v1343 = vmul.f32 %v1342, %v1233
    %v1344 = vlaneseq
    %v1345 = vshrl.u32 %v1344, 7
    %v1346 = vsub.s32 1, %v1345
    %v1347 = vrot.slane %v876, %v1346
    %v1348 = vmul.f32 %v1122, %v1347
    %v1349 = vmul.f32 %v1348, %v1246
    %v1350 = vadd.f32 %v1343, %v1349
    %v1351 = vmul.f32 %v865, 0.5
    %v1352 = vmul.f32 %v865, 0.70710677
    %v1353 = vand.u32 2147483647, %v1352
    %v1354 = vmul.f32 %v1353, 0.3275911
    %v1355 = vadd.f32 %v1354, 1.0
    %v1356 = vrcp.pop %v1355
    %v1357 = vmul.f32 1.0, %v1356
    %v1358 = vmul.f32 %v1357, 1.0614054
    %v1359 = vadd.f32 %v1358, -1.4531521
    %v1360 = vmul.f32 %v1359, %v1357
    %v1361 = vadd.f32 %v1360, 1.4214138
    %v1362 = vmul.f32 %v1361, %v1357
    %v1363 = vadd.f32 %v1362, -0.28449672
    %v1364 = vmul.f32 %v1363, %v1357
    %v1365 = vadd.f32 %v1364, 0.2548296
    %v1366 = vmul.f32 %v1365, %v1357
    %v1367 = vmul.f32 %v1353, %v1353
    %v1368 = vsub.f32 0.0, %v1367
    %v1369 = vmul.f32 %v1368, 1.442695
    %v1370 = vpow.pop %v1369
    %v1371 = vmul.f32 %v1366, %v1370
    %v1372 = vsub.f32 1.0, %v1371
    %vm1373 = vcmp.ge.f32.partialorder %v1352, 0.0
    %v1374 = vsub.f32 0.0, %v1372
    %v1375 = vsel %vm1373, %v1372, %v1374
    %v1376 = vadd.f32 %v1375, 1.0
    %v1377 = vmul.f32 %v1351, %v1376
    %1379 = vrot.lane.b32.xlu0 %v1272, 64
    %v1380 = vpop.permute.xlu0 %1379
    %1383 = vrot.lane.b32.xlu0 %v1298, 64
    %v1384 = vpop.permute.xlu0 %1383
    %1387 = vrot.lane.b32.xlu0 %v1324, 64
    %v1388 = vpop.permute.xlu0 %1387
    %1391 = vrot.lane.b32.xlu0 %v1350, 64
    %v1392 = vpop.permute.xlu0 %1391
    %v1394 = vsel %vm662, %v1259, %v1380
    %v1395 = vsel %vm662, %v1285, %v1384
    %v1396 = vsel %vm662, %v1311, %v1388
    %v1397 = vsel %vm662, %v1337, %v1392
    %v1398 = vld [vmem:[#allocation12] sm:$0xff]
    %v1399 = vld [vmem:[#allocation12 + $0x8] sm:$0xff]
    %v1400 = vld [vmem:[#allocation12 + $0x10] sm:$0xff]
    %v1401 = vld [vmem:[#allocation12 + $0x18] sm:$0xff]
    %v1402 = vld [vmem:[#allocation12 + $0x20] sm:$0xff]
    %v1403 = vld [vmem:[#allocation12 + $0x28] sm:$0xff]
    %v1404 = vld [vmem:[#allocation12 + $0x30] sm:$0xff]
    %v1405 = vld [vmem:[#allocation12 + $0x38] sm:$0xff]
    %v1406 = vld [vmem:[#allocation12 + $0x40] sm:$0xff]
    %v1407 = vld [vmem:[#allocation12 + $0x48] sm:$0xff]
    %v1408 = vld [vmem:[#allocation12 + $0x50] sm:$0xff]
    %v1409 = vld [vmem:[#allocation12 + $0x58] sm:$0xff]
    %v1410 = vld [vmem:[#allocation12 + $0x60] sm:$0xff]
    %v1411 = vld [vmem:[#allocation12 + $0x68] sm:$0xff]
    %v1412 = vld [vmem:[#allocation12 + $0x70] sm:$0xff]
    %v1413 = vld [vmem:[#allocation12 + $0x78] sm:$0xff]
    %v1414 = vld [vmem:[#allocation12 + $0x80] sm:$0xff]
    %v1415 = vld [vmem:[#allocation12 + $0x88] sm:$0xff]
    %v1416 = vld [vmem:[#allocation12 + $0x90] sm:$0xff]
    %v1417 = vld [vmem:[#allocation12 + $0x98] sm:$0xff]
    %v1418 = vld [vmem:[#allocation12 + $0xa0] sm:$0xff]
    %v1419 = vld [vmem:[#allocation12 + $0xa8] sm:$0xff]
    %v1420 = vld [vmem:[#allocation12 + $0xb0] sm:$0xff]
    %v1421 = vld [vmem:[#allocation12 + $0xb8] sm:$0xff]
    %v1422 = vld [vmem:[#allocation12 + $0xc0] sm:$0xff]
    %v1423 = vld [vmem:[#allocation12 + $0xc8] sm:$0xff]
    %v1424 = vld [vmem:[#allocation12 + $0xd0] sm:$0xff]
    %v1425 = vld [vmem:[#allocation12 + $0xd8] sm:$0xff]
    %v1426 = vld [vmem:[#allocation12 + $0xe0] sm:$0xff]
    %v1427 = vld [vmem:[#allocation12 + $0xe8] sm:$0xff]
    %v1428 = vld [vmem:[#allocation12 + $0xf0] sm:$0xff]
    %v1429 = vld [vmem:[#allocation12 + $0xf8] sm:$0xff]
    %v1430 = vld [vmem:[#allocation12 + $0x100] sm:$0xff]
    %v1431 = vld [vmem:[#allocation12 + $0x108] sm:$0xff]
    %v1432 = vld [vmem:[#allocation12 + $0x110] sm:$0xff]
    %v1433 = vld [vmem:[#allocation12 + $0x118] sm:$0xff]
    %v1434 = vld [vmem:[#allocation12 + $0x120] sm:$0xff]
    %v1435 = vld [vmem:[#allocation12 + $0x128] sm:$0xff]
    %v1436 = vld [vmem:[#allocation12 + $0x130] sm:$0xff]
    %v1437 = vld [vmem:[#allocation12 + $0x138] sm:$0xff]
    %v1438 = vld [vmem:[#allocation12 + $0x140] sm:$0xff]
    %v1439 = vld [vmem:[#allocation12 + $0x148] sm:$0xff]
    %v1440 = vld [vmem:[#allocation12 + $0x150] sm:$0xff]
    %v1441 = vld [vmem:[#allocation12 + $0x158] sm:$0xff]
    %v1442 = vld [vmem:[#allocation12 + $0x160] sm:$0xff]
    %v1443 = vld [vmem:[#allocation12 + $0x168] sm:$0xff]
    %v1444 = vld [vmem:[#allocation12 + $0x170] sm:$0xff]
    %v1445 = vld [vmem:[#allocation12 + $0x178] sm:$0xff]
    %v1446 = vld [vmem:[#allocation12 + $0x180] sm:$0xff]
    %v1447 = vld [vmem:[#allocation12 + $0x188] sm:$0xff]
    %v1448 = vld [vmem:[#allocation12 + $0x190] sm:$0xff]
    %v1449 = vld [vmem:[#allocation12 + $0x198] sm:$0xff]
    %v1450 = vld [vmem:[#allocation12 + $0x1a0] sm:$0xff]
    %v1451 = vld [vmem:[#allocation12 + $0x1a8] sm:$0xff]
    %v1452 = vld [vmem:[#allocation12 + $0x1b0] sm:$0xff]
    %v1453 = vld [vmem:[#allocation12 + $0x1b8] sm:$0xff]
    %v1454 = vld [vmem:[#allocation12 + $0x1c0] sm:$0xff]
    %v1455 = vld [vmem:[#allocation12 + $0x1c8] sm:$0xff]
    %v1456 = vld [vmem:[#allocation12 + $0x1d0] sm:$0xff]
    %v1457 = vld [vmem:[#allocation12 + $0x1d8] sm:$0xff]
    %v1458 = vld [vmem:[#allocation12 + $0x1e0] sm:$0xff]
    %v1459 = vld [vmem:[#allocation12 + $0x1e8] sm:$0xff]
    %v1460 = vld [vmem:[#allocation12 + $0x1f0] sm:$0xff]
    %v1461 = vld [vmem:[#allocation12 + $0x1f8] sm:$0xff]
    %v1462 = vld [vmem:[#allocation12 + $0x200] sm:$0xff]
    %v1463 = vld [vmem:[#allocation12 + $0x208] sm:$0xff]
    %v1464 = vld [vmem:[#allocation12 + $0x210] sm:$0xff]
    %v1465 = vld [vmem:[#allocation12 + $0x218] sm:$0xff]
    %v1466 = vld [vmem:[#allocation12 + $0x220] sm:$0xff]
    %v1467 = vld [vmem:[#allocation12 + $0x228] sm:$0xff]
    %v1468 = vld [vmem:[#allocation12 + $0x230] sm:$0xff]
    %v1469 = vld [vmem:[#allocation12 + $0x238] sm:$0xff]
    %v1471 = vsel %vm662, %v1377, 0
    %1473 = vmatprep.subr.mxu0 0.0
    %1474 = vmatpush1.msra.mxu0 %v1398
    %1475 = vmatprep.subr.mxu0 0.0
    %1476 = vmatpush1.msra.mxu0 %v1399
    %1477 = vmatprep.subr.mxu0 0.0
    %1478 = vmatpush1.msra.mxu0 %v1400
    %1479 = vmatprep.subr.mxu0 0.0
    %1480 = vmatpush1.msra.mxu0 %v1401
    %1481 = vmatprep.subr.mxu0 0.0
    %1482 = vmatpush1.msra.mxu0 %v1402
    %1483 = vmatprep.subr.mxu0 0.0
    %1484 = vmatpush1.msra.mxu0 %v1403
    %1485 = vmatprep.subr.mxu0 0.0
    %1486 = vmatpush1.msra.mxu0 %v1404
    %1487 = vmatprep.subr.mxu0 0.0
    %1488 = vmatpush1.msra.mxu0 %v1405
    %1489 = vmatprep.subr.mxu0 0.0
    %1490 = vmatpush1.msra.mxu0 %v1406
    %1491 = vmatprep.subr.mxu0 0.0
    %1492 = vmatpush1.msra.mxu0 %v1407
    %1493 = vmatprep.subr.mxu0 0.0
    %1494 = vmatpush1.msra.mxu0 %v1408
    %1495 = vmatprep.subr.mxu0 0.0
    %1496 = vmatpush1.msra.mxu0 %v1409
    %1497 = vmatprep.subr.mxu0 0.0
    %1498 = vmatpush1.msra.mxu0 %v1410
    %1499 = vmatprep.subr.mxu0 0.0
    %1500 = vmatpush1.msra.mxu0 %v1411
    %1501 = vmatprep.subr.mxu0 0.0
    %1502 = vmatpush1.msra.mxu0 %v1412
    %1503 = vmatprep.subr.mxu0 0.0
    %1504 = vmatpush1.msra.mxu0 %v1413
    %1505 = vmatprep.subr.mxu0 0.0
    %1506 = vmatpush1.msra.mxu0 %v1414
    %1507 = vmatprep.subr.mxu0 0.0
    %1508 = vmatpush1.msra.mxu0 %v1415
    %1509 = vmatprep.subr.mxu0 0.0
    %1510 = vmatpush1.msra.mxu0 %v1416
    %1511 = vmatprep.subr.mxu0 0.0
    %1512 = vmatpush1.msra.mxu0 %v1417
    %1513 = vmatprep.subr.mxu0 0.0
    %1514 = vmatpush1.msra.mxu0 %v1418
    %1515 = vmatprep.subr.mxu0 0.0
    %1516 = vmatpush1.msra.mxu0 %v1419
    %1517 = vmatprep.subr.mxu0 0.0
    %1518 = vmatpush1.msra.mxu0 %v1420
    %1519 = vmatprep.subr.mxu0 0.0
    %1520 = vmatpush1.msra.mxu0 %v1421
    %1521 = vmatprep.subr.mxu0 0.0
    %1522 = vmatpush1.msra.mxu0 %v1422
    %1523 = vmatprep.subr.mxu0 0.0
    %1524 = vmatpush1.msra.mxu0 %v1423
    %1525 = vmatprep.subr.mxu0 0.0
    %1526 = vmatpush1.msra.mxu0 %v1424
    %1527 = vmatprep.subr.mxu0 0.0
    %1528 = vmatpush1.msra.mxu0 %v1425
    %1529 = vmatprep.subr.mxu0 0.0
    %1530 = vmatpush1.msra.mxu0 %v1426
    %1531 = vmatprep.subr.mxu0 0.0
    %1532 = vmatpush1.msra.mxu0 %v1427
    %1533 = vmatprep.subr.mxu0 0.0
    %1534 = vmatpush1.msra.mxu0 %v1428
    %1535 = vmatprep.subr.mxu0 0.0
    %1536 = vmatpush1.msra.mxu0 %v1429
    %1537 = vmatprep.mubr.f32.mxu0 %v1395
    %1538 = vmatmul.mubr.f32.gmra.mrb[0].mxu0 %v1394
    %v1539 = vpop.f32.mrb[0].mxu0
    %v1540 = vadd.f32 0.0, %v1539
    %v1541 = vpop.f32.mrb[0].mxu0
    %1542 = vdwg.mxu0
    %1543 = vmatprep.subr.mxu0 0.0
    %1544 = vmatpush1.msra.mxu0 %v1430
    %1545 = vmatprep.subr.mxu0 0.0
    %1546 = vmatpush1.msra.mxu0 %v1431
    %1547 = vmatprep.subr.mxu0 0.0
    %1548 = vmatpush1.msra.mxu0 %v1432
    %1549 = vmatprep.subr.mxu0 0.0
    %1550 = vmatpush1.msra.mxu0 %v1433
    %1551 = vmatprep.subr.mxu0 0.0
    %1552 = vmatpush1.msra.mxu0 %v1434
    %1553 = vmatprep.subr.mxu0 0.0
    %1554 = vmatpush1.msra.mxu0 %v1435
    %1555 = vmatprep.subr.mxu0 0.0
    %1556 = vmatpush1.msra.mxu0 %v1436
    %1557 = vmatprep.subr.mxu0 0.0
    %1558 = vmatpush1.msra.mxu0 %v1437
    %1559 = vmatprep.subr.mxu0 0.0
    %1560 = vmatpush1.msra.mxu0 %v1438
    %1561 = vmatprep.subr.mxu0 0.0
    %1562 = vmatpush1.msra.mxu0 %v1439
    %1563 = vmatprep.subr.mxu0 0.0
    %1564 = vmatpush1.msra.mxu0 %v1440
    %1565 = vmatprep.subr.mxu0 0.0
    %1566 = vmatpush1.msra.mxu0 %v1441
    %1567 = vmatprep.subr.mxu0 0.0
    %1568 = vmatpush1.msra.mxu0 %v1442
    %1569 = vmatprep.subr.mxu0 0.0
    %1570 = vmatpush1.msra.mxu0 %v1443
    %1571 = vmatprep.subr.mxu0 0.0
    %1572 = vmatpush1.msra.mxu0 %v1444
    %1573 = vmatprep.subr.mxu0 0.0
    %1574 = vmatpush1.msra.mxu0 %v1445
    %1575 = vmatprep.subr.mxu0 0.0
    %1576 = vmatpush1.msra.mxu0 %v1446
    %1577 = vmatprep.subr.mxu0 0.0
    %1578 = vmatpush1.msra.mxu0 %v1447
    %1579 = vmatprep.subr.mxu0 0.0
    %1580 = vmatpush1.msra.mxu0 %v1448
    %1581 = vmatprep.subr.mxu0 0.0
    %1582 = vmatpush1.msra.mxu0 %v1449
    %1583 = vmatprep.subr.mxu0 0.0
    %1584 = vmatpush1.msra.mxu0 %v1450
    %1585 = vmatprep.subr.mxu0 0.0
    %1586 = vmatpush1.msra.mxu0 %v1451
    %1587 = vmatprep.subr.mxu0 0.0
    %1588 = vmatpush1.msra.mxu0 %v1452
    %1589 = vmatprep.subr.mxu0 0.0
    %1590 = vmatpush1.msra.mxu0 %v1453
    %1591 = vmatprep.subr.mxu0 0.0
    %1592 = vmatpush1.msra.mxu0 %v1454
    %1593 = vmatprep.subr.mxu0 0.0
    %1594 = vmatpush1.msra.mxu0 %v1455
    %1595 = vmatprep.subr.mxu0 0.0
    %1596 = vmatpush1.msra.mxu0 %v1456
    %1597 = vmatprep.subr.mxu0 0.0
    %1598 = vmatpush1.msra.mxu0 %v1457
    %1599 = vmatprep.subr.mxu0 0.0
    %1600 = vmatpush1.msra.mxu0 %v1458
    %1601 = vmatprep.subr.mxu0 0.0
    %1602 = vmatpush1.msra.mxu0 %v1459
    %1603 = vmatprep.subr.mxu0 0.0
    %1604 = vmatpush1.msra.mxu0 %v1460
    %1605 = vmatprep.subr.mxu0 0.0
    %1606 = vmatpush1.msra.mxu0 %v1461
    %1607 = vmatprep.mubr.f32.mxu0 %v1397
    %1608 = vmatmul.mubr.f32.gmra.mrb[0].mxu0 %v1396
    %v1609 = vpop.f32.mrb[0].mxu0
    %v1610 = vadd.f32 %v1540, %v1609
    %v1611 = vpop.f32.mrb[0].mxu0
    %1612 = vdwg.mxu0
    %1613 = vmatprep.subr.mxu0 0.0
    %1614 = vmatpush1.msra.mxu0 %v1462
    %1615 = vmatprep.subr.mxu0 0.0
    %1616 = vmatpush1.msra.mxu0 %v1463
    %1617 = vmatprep.subr.mxu0 0.0
    %1618 = vmatpush1.msra.mxu0 %v1464
    %1619 = vmatprep.subr.mxu0 0.0
    %1620 = vmatpush1.msra.mxu0 %v1465
    %1621 = vmatprep.subr.mxu0 0.0
    %1622 = vmatpush1.msra.mxu0 %v1466
    %1623 = vmatprep.subr.mxu0 0.0
    %1624 = vmatpush1.msra.mxu0 %v1467
    %1625 = vmatprep.subr.mxu0 0.0
    %1626 = vmatpush1.msra.mxu0 %v1468
    %1627 = vmatprep.subr.mxu0 0.0
    %1628 = vmatpush1.msra.mxu0 %v1469
    %1629 = vmatprep.subr.mxu0 0.0
    %1630 = vmatpush1.msra.mxu0 0.0
    %1631 = vmatprep.subr.mxu0 0.0
    %1632 = vmatpush1.msra.mxu0 0.0
    %1633 = vmatprep.subr.mxu0 0.0
    %1634 = vmatpush1.msra.mxu0 0.0
    %1635 = vmatprep.subr.mxu0 0.0
    %1636 = vmatpush1.msra.mxu0 0.0
    %1637 = vmatprep.subr.mxu0 0.0
    %1638 = vmatpush1.msra.mxu0 0.0
    %1639 = vmatprep.subr.mxu0 0.0
    %1640 = vmatpush1.msra.mxu0 0.0
    %1641 = vmatprep.subr.mxu0 0.0
    %1642 = vmatpush1.msra.mxu0 0.0
    %1643 = vmatprep.subr.mxu0 0.0
    %1644 = vmatpush1.msra.mxu0 0.0
    %1645 = vmatprep.subr.mxu0 0.0
    %1646 = vmatpush1.msra.mxu0 0.0
    %1647 = vmatprep.subr.mxu0 0.0
    %1648 = vmatpush1.msra.mxu0 0.0
    %1649 = vmatprep.subr.mxu0 0.0
    %1650 = vmatpush1.msra.mxu0 0.0
    %1651 = vmatprep.subr.mxu0 0.0
    %1652 = vmatpush1.msra.mxu0 0.0
    %1653 = vmatprep.subr.mxu0 0.0
    %1654 = vmatpush1.msra.mxu0 0.0
    %1655 = vmatprep.subr.mxu0 0.0
    %1656 = vmatpush1.msra.mxu0 0.0
    %1657 = vmatprep.subr.mxu0 0.0
    %1658 = vmatpush1.msra.mxu0 0.0
    %1659 = vmatprep.subr.mxu0 0.0
    %1660 = vmatpush1.msra.mxu0 0.0
    %1661 = vmatprep.subr.mxu0 0.0
    %1662 = vmatpush1.msra.mxu0 0.0
    %1663 = vmatprep.subr.mxu0 0.0
    %1664 = vmatpush1.msra.mxu0 0.0
    %1665 = vmatprep.subr.mxu0 0.0
    %1666 = vmatpush1.msra.mxu0 0.0
    %1667 = vmatprep.subr.mxu0 0.0
    %1668 = vmatpush1.msra.mxu0 0.0
    %1669 = vmatprep.subr.mxu0 0.0
    %1670 = vmatpush1.msra.mxu0 0.0
    %1671 = vmatprep.subr.mxu0 0.0
    %1672 = vmatpush1.msra.mxu0 0.0
    %1673 = vmatprep.subr.mxu0 0.0
    %1674 = vmatpush1.msra.mxu0 0.0
    %1675 = vmatprep.subr.mxu0 0.0
    %1676 = vmatpush1.msra.mxu0 0.0
    %1677 = vmatprep.mubr.f32.mxu0 0.0
    %1678 = vmatmul.mubr.f32.gmra.mrb[0].mxu0 %v1471
    %v1679 = vpop.f32.mrb[0].mxu0
    %v1680 = vadd.f32 %v1610, %v1679
    %v1681 = vpop.f32.mrb[0].mxu0
    %1682 = vdwg.mxu0
    %v1683 = vsel %vm660, %v1680, 0.0
    %1684 = vadd.xlane.f32.xlu0 %v1683
    %v1685 = vpop.xlane.xlu0 %1684
    %v1686 = vrcp.pop 32.0
    %v1687 = vmul.f32 %v1685, %v1686
    %v1688 = vsub.f32 %v1680, %v1687
    %v1689 = vmul.f32 %v1688, %v1688
    %v1690 = vsel %vm660, %v1689, 0.0
    %1691 = vadd.xlane.f32.xlu0 %v1690
    %v1692 = vpop.xlane.xlu0 %1691
    %v1693 = vmul.f32 %v1692, %v1686
    %v1694 = vadd.f32 %v1693, 1e-05
    %v1695 = vrsqrt.pop %v1694
    %v1696 = vmul.f32 %v1688, %v1695
    %vm1697 = vcmp.ge.f32.partialorder %v1696, 0.0
    %v1698 = vstv %s866
    %v1699 = vmul.f32 %v1698, %v1696
    %v1700 = vsel %vm1697, %v1696, %v1699
    %1701 = vst.msk [vmem:[#allocation15] sm:$0xff] %vm660, %v1700
    // Predicated region
    $region62: #{kan_forward.1} parent=1 // pred_check
      _
    $region63: #{kan_forward.1} parent=1 // pred_check_branch
      %1703 = sbr.rel (0) target = $region65
    $region64: #{kan_forward.1} parent=1 // pred_region
      %s1705 = ssub.s32 128, 128
      %1706 = vsyncadd [#allocation4], %s1705
      %s1708 = sshll.u32 [#allocation15], 4
      %s1709 = int_to_ptr.vmem [resolvable:$true] %s1708
      %1711 = dma.vmem_to_hbm [thread:$0]  %s1709, 128, %s8, [#allocation4]
    $region65: #{kan_forward.1} parent=1 // pred_fallthru
      _
    // Predicated region
    $region66: #{kan_forward.1} parent=1 // pred_check
      _
    $region67: #{kan_forward.1} parent=1 // pred_check_branch
      %1713 = sbr.rel (0) target = $region69
    $region68: #{kan_forward.1} parent=1 // pred_region
      %1714 = dma.done [#allocation4], 128
    $region69: #{kan_forward.1} parent=1 // pred_fallthru
      _
    %1715 = vsyncpa [#allocation3], 1
    %1716 = vsyncpa [#allocation7], 1
    %1717 = vsyncpa [#allocation10], 1
    %1718 = vsyncpa [#allocation13], 1
    %1719 = vsyncpa [#allocation4], 1
    %1720 = vsyncpa [#allocation5], 1

</llo_original>
